<compile_context>
chip_gen: v7x
topology: tpu7x:2x2x1
jax: 0.10.0
libtpu: 0.0.40
codegen_flags: <defaults>
</compile_context>

<pallas_src>
import functools
import math

import jax
import jax.numpy as jnp
from jax.experimental import pallas as pl
from jax.experimental.pallas import tpu as pltpu

LN_EPS = 1e-5


def _round_up(x, m):
    return ((x + m - 1) // m) * m


def _pad_to(a, shape):
    pads = [(0, t - s) for s, t in zip(a.shape, shape)]
    return jnp.pad(a, pads)


def _gelu_tanh(x):
    # TODO(synk): torch nn.GELU defaults to the exact erf formulation; the tanh
    # approximation (also used in the reference below) deviates by ~1e-3.
    c = 0.7978845608028654  # sqrt(2/pi)
    return 0.5 * x * (1.0 + jnp.tanh(c * (x + 0.044715 * x * x * x)))


# --------------------------------------------------------------------------
# Kernel 1: fused LayerNorm (masked stats over real C) + bf16 matmul + bias.
# --------------------------------------------------------------------------
def _make_ln_matmul_kernel(c_real, emit_xn):
    inv_c = 1.0 / float(c_real)

    def kernel(x_ref, lnp_ref, w_ref, b_ref, *out_refs):
        x = x_ref[...].astype(jnp.float32)
        lane = jax.lax.broadcasted_iota(jnp.int32, x.shape, 1)
        mask = lane < c_real
        mean = jnp.sum(x, axis=-1, keepdims=True) * inv_c     # padded lanes of x are 0
        cent = jnp.where(mask, x - mean, 0.0)
        var = jnp.sum(cent * cent, axis=-1, keepdims=True) * inv_c
        xn = cent * jax.lax.rsqrt(var + LN_EPS)
        xn = xn * lnp_ref[0:1, :] + lnp_ref[1:2, :]            # LN affine (pad lanes -> 0)
        xn_bf = xn.astype(jnp.bfloat16)
        y = jnp.dot(xn_bf, w_ref[...], preferred_element_type=jnp.float32)
        y = y + b_ref[...]
        if emit_xn:
            xn_ref, y_ref = out_refs
            xn_ref[...] = xn_bf
        else:
            (y_ref,) = out_refs
        y_ref[...] = y.astype(y_ref.dtype)

    return kernel


def _ln_matmul(x_p, lnp, w_p, b_p, *, c_in, emit_xn, tm, out_dtype):
    mp, cin_p = x_p.shape
    cout_p = w_p.shape[1]
    in_specs = [
        pl.BlockSpec((tm, cin_p), lambda i: (i, 0)),
        pl.BlockSpec((2, cin_p), lambda i: (0, 0)),
        pl.BlockSpec((cin_p, cout_p), lambda i: (0, 0)),
        pl.BlockSpec((1, cout_p), lambda i: (0, 0)),
    ]
    if emit_xn:
        out_shape = (jax.ShapeDtypeStruct((mp, cin_p), jnp.bfloat16),
                     jax.ShapeDtypeStruct((mp, cout_p), out_dtype))
        out_specs = (pl.BlockSpec((tm, cin_p), lambda i: (i, 0)),
                     pl.BlockSpec((tm, cout_p), lambda i: (i, 0)))
    else:
        out_shape = jax.ShapeDtypeStruct((mp, cout_p), out_dtype)
        out_specs = pl.BlockSpec((tm, cout_p), lambda i: (i, 0))

    return pl.pallas_call(
        _make_ln_matmul_kernel(c_in, emit_xn),
        out_shape=out_shape,
        grid=(mp // tm,),
        in_specs=in_specs,
        out_specs=out_specs,
        compiler_params=pltpu.CompilerParams(dimension_semantics=("parallel",)),
    )(x_p, lnp, w_p, b_p)


# --------------------------------------------------------------------------
# Kernel 2: bf16 matmul + bias, optionally fused with residual + layer-scale.
# --------------------------------------------------------------------------
def _make_matmul_kernel(with_residual):
    def kernel(x_ref, w_ref, bs_ref, *rest):
        x = x_ref[...].astype(jnp.bfloat16)
        y = jnp.dot(x, w_ref[...], preferred_element_type=jnp.float32)
        y = y + bs_ref[0:1, :]
        if with_residual:
            res_ref, o_ref = rest
            y = res_ref[...].astype(jnp.float32) + bs_ref[1:2, :] * y
        else:
            (o_ref,) = rest
        o_ref[...] = y.astype(o_ref.dtype)

    return kernel


def _matmul_bias(x_p, w_p, bs_p, *, tm, residual_p=None, out_dtype=jnp.float32):
    mp, k_p = x_p.shape
    cout_p = w_p.shape[1]
    with_res = residual_p is not None
    in_specs = [
        pl.BlockSpec((tm, k_p), lambda i: (i, 0)),
        pl.BlockSpec((k_p, cout_p), lambda i: (0, 0)),
        pl.BlockSpec((2, cout_p), lambda i: (0, 0)),
    ]
    args = [x_p, w_p, bs_p]
    if with_res:
        in_specs.append(pl.BlockSpec((tm, cout_p), lambda i: (i, 0)))
        args.append(residual_p)

    return pl.pallas_call(
        _make_matmul_kernel(with_res),
        out_shape=jax.ShapeDtypeStruct((mp, cout_p), out_dtype),
        grid=(mp // tm,),
        in_specs=in_specs,
        out_specs=pl.BlockSpec((tm, cout_p), lambda i: (i, 0)),
        compiler_params=pltpu.CompilerParams(dimension_semantics=("parallel",)),
    )(*args)


# --------------------------------------------------------------------------
# Kernel 3: per-batch attention (heads sliced in-kernel) fused with the output
#           projection, layer-scale gamma_1 and the residual add.
# --------------------------------------------------------------------------
def _make_attn_proj_kernel(num_heads, hd, scale, q_off, k_off, v_off):
    def kernel(q_ref, kv_ref, x_ref, w_ref, bs_ref, o_ref):
        n = q_ref.shape[1]
        cp = o_ref.shape[-1]
        acc = jnp.zeros((n, cp), jnp.float32)
        for h in range(num_heads):
            qh = (q_ref[0, :, q_off + h * hd:q_off + (h + 1) * hd]
                  .astype(jnp.float32) * scale).astype(jnp.bfloat16)
            kh = kv_ref[0, :, k_off + h * hd:k_off + (h + 1) * hd]
            vh = kv_ref[0, :, v_off + h * hd:v_off + (h + 1) * hd]
            s = jax.lax.dot_general(qh, kh, (((1,), (1,)), ((), ())),
                                    preferred_element_type=jnp.float32)
            s = s - jnp.max(s, axis=-1, keepdims=True)
            p = jnp.exp(s)
            p = p * pl.reciprocal(jnp.sum(p, axis=-1, keepdims=True), approx=True)
            ctx = jnp.dot(p.astype(jnp.bfloat16), vh,
                          preferred_element_type=jnp.float32)
            acc = acc + jnp.dot(ctx.astype(jnp.bfloat16),
                                w_ref[h * hd:(h + 1) * hd, :],
                                preferred_element_type=jnp.float32)
        y = acc + bs_ref[0:1, :]
        o_ref[0] = (x_ref[0].astype(jnp.float32) + bs_ref[1:2, :] * y
                    ).astype(o_ref.dtype)

    return kernel


def _attn_proj_residual(q_src, kv_src, x_src, w_p, bs_p, *, num_heads, hd, scale,
                        q_off, k_off, v_off):
    B, N, cq = q_src.shape
    nk, ckv = kv_src.shape[1], kv_src.shape[2]
    cp = x_src.shape[2]
    return pl.pallas_call(
        _make_attn_proj_kernel(num_heads, hd, scale, q_off, k_off, v_off),
        out_shape=jax.ShapeDtypeStruct((B, N, cp), jnp.float32),
        grid=(B,),
        in_specs=[
            pl.BlockSpec((1, N, cq), lambda b: (b, 0, 0)),
            pl.BlockSpec((1, nk, ckv), lambda b: (b, 0, 0)),
            pl.BlockSpec((1, N, cp), lambda b: (b, 0, 0)),
            pl.BlockSpec((cp, cp), lambda b: (0, 0)),
            pl.BlockSpec((2, cp), lambda b: (0, 0)),
        ],
        out_specs=pl.BlockSpec((1, N, cp), lambda b: (b, 0, 0)),
        compiler_params=pltpu.CompilerParams(dimension_semantics=("parallel",)),
    )(q_src, kv_src, x_src, w_p, bs_p)


# --------------------------------------------------------------------------
# Kernel 4: depthwise 3x3 conv (+bias) + GELU.  Halo built in a VMEM scratch
#           (no host-side padded copy of the activation in HBM).
# --------------------------------------------------------------------------
def _make_dwconv_gelu_kernel(h, w):
    def kernel(x_ref, w_ref, b_ref, o_ref, pad_scr):
        ch = o_ref.shape[-1]
        pad_scr[...] = jnp.zeros_like(pad_scr)
        pad_scr[1:h + 1, 1:w + 1, :] = x_ref[0]
        acc = jnp.zeros((h, w, ch), jnp.float32)
        for di in range(3):
            for dj in range(3):
                acc = acc + (pad_scr[di:di + h, dj:dj + w, :].astype(jnp.float32)
                             * w_ref[di:di + 1, dj:dj + 1, :])
        acc = acc + b_ref[...]
        o_ref[0] = _gelu_tanh(acc).astype(o_ref.dtype)

    return kernel


def _dwconv_gelu(x_bhwc, w33, b11, *, out_dtype=jnp.bfloat16):
    B, H, W, ch = x_bhwc.shape
    return pl.pallas_call(
        _make_dwconv_gelu_kernel(H, W),
        out_shape=jax.ShapeDtypeStruct((B, H, W, ch), out_dtype),
        grid=(B,),
        in_specs=[
            pl.BlockSpec((1, H, W, ch), lambda b: (b, 0, 0, 0)),
            pl.BlockSpec((3, 3, ch), lambda b: (0, 0, 0)),
            pl.BlockSpec((1, 1, ch), lambda b: (0, 0, 0)),
        ],
        out_specs=pl.BlockSpec((1, H, W, ch), lambda b: (b, 0, 0, 0)),
        scratch_shapes=[pltpu.VMEM((H + 2, W + 2, ch), x_bhwc.dtype)],
        compiler_params=pltpu.CompilerParams(dimension_semantics=("parallel",)),
    )(x_bhwc, w33, b11)


# --------------------------------------------------------------------------
# One-time parameter preparation (padding / transposes / bf16 casts), hoisted
# out of the per-forward jit.
# --------------------------------------------------------------------------
def prepare_params(p, *, num_heads, sr_ratio):
    del num_heads
    f32, bf16 = jnp.float32, jnp.bfloat16
    C = p["norm1_g"].shape[0]
    hidden = p["fc1_w"].shape[0]
    cp = _round_up(C, 128)
    hid_p = _round_up(hidden, 128)

    def pad_w(w_oi, cin_p, cout_p):          # torch (out, in) -> (cin_p, cout_p) bf16
        return _pad_to(w_oi.T.astype(bf16), (cin_p, cout_p))

    def pad_bias(b, cout_p):
        return _pad_to(b.reshape(1, -1).astype(f32), (1, cout_p))

    def pad_bias_scale(b, s, cout_p):
        return _pad_to(jnp.stack([b.astype(f32), s.astype(f32)]), (2, cout_p))

    def pad_lnp(g, b, cin_p):
        return _pad_to(jnp.stack([g.astype(f32), b.astype(f32)]), (2, cin_p))

    q_b = p["q_b"] if p["q_b"] is not None else jnp.zeros((C,), f32)
    kv_b = p["kv_b"] if p["kv_b"] is not None else jnp.zeros((2 * C,), f32)
    g1 = p["gamma_1"] if p["gamma_1"] is not None else jnp.ones((C,), f32)
    g2 = p["gamma_2"] if p["gamma_2"] is not None else jnp.ones((C,), f32)

    prep = {
        "norm1_lnp": pad_lnp(p["norm1_g"], p["norm1_b"], cp),
        "norm2_lnp": pad_lnp(p["norm2_g"], p["norm2_b"], cp),
        "proj_w": pad_w(p["proj_w"], cp, cp),
        "proj_bs": pad_bias_scale(p["proj_b"], g1, cp),
        "fc1_w": pad_w(p["fc1_w"], cp, hid_p),
        "fc1_b": pad_bias(p["fc1_b"], hid_p),
        "dw_w": _pad_to(jnp.transpose(p["dw_w"][:, 0, :, :], (1, 2, 0)).astype(f32),
                        (3, 3, hid_p)),
        "dw_b": _pad_to(p["dw_b"].reshape(1, 1, -1).astype(f32), (1, 1, hid_p)),
        "fc2_w": pad_w(p["fc2_w"], hid_p, cp),
        "fc2_bs": pad_bias_scale(p["fc2_b"], g2, cp),
    }

    if sr_ratio == 1:
        c3p = _round_up(3 * C, 128)
        w_qkv = jnp.concatenate([p["q_w"], p["kv_w"]], axis=0)        # (3C, C)
        b_qkv = jnp.concatenate([q_b, kv_b], axis=0)
        prep["qkv_w"] = pad_w(w_qkv, cp, c3p)
        prep["qkv_b"] = pad_bias(b_qkv, c3p)
    else:
        ksr = sr_ratio * sr_ratio * C
        ksr_p = _round_up(ksr, 128)
        c2p = _round_up(2 * C, 128)
        prep["q_w"] = pad_w(p["q_w"], cp, cp)
        prep["q_b"] = pad_bias(q_b, cp)
        w_sr = jnp.transpose(p["sr_w"], (2, 3, 1, 0)).reshape(ksr, C)  # (kh,kw,i,o)
        prep["sr_w"] = _pad_to(w_sr.astype(bf16), (ksr_p, cp))
        prep["sr_bs"] = pad_bias_scale(p["sr_b"], jnp.ones((C,), f32), cp)
        prep["sr_lnp"] = pad_lnp(p["sr_norm_g"], p["sr_norm_b"], cp)
        prep["kv_w"] = pad_w(p["kv_w"], cp, c2p)
        prep["kv_b"] = pad_bias(kv_b, c2p)
    return prep


# --------------------------------------------------------------------------
# Full block forward.
# --------------------------------------------------------------------------
def pvt_v2_block(x_nchw, prep, *, num_heads, sr_ratio):
    B, C, H, W = x_nchw.shape
    N = H * W
    M = B * N
    hd = C // num_heads
    scale = hd ** -0.5
    cp = _round_up(C, 128)
    tm = min(512, _round_up(M, 8))
    mp = _round_up(M, tm)

    x_tok = x_nchw.reshape(B, C, N).transpose(0, 2, 1).reshape(M, C)
    x_p = _pad_to(x_tok.astype(jnp.float32), (mp, cp))

    # ---- norm1 + q (and kv when sr_ratio == 1) projection ----
    if sr_ratio == 1:
        qkv_p = _ln_matmul(x_p, prep["norm1_lnp"], prep["qkv_w"], prep["qkv_b"],
                           c_in=C, emit_xn=False, tm=tm, out_dtype=jnp.bfloat16)
        q_src = qkv_p[:M].reshape(B, N, -1)
        kv_src = q_src
        q_off, k_off, v_off = 0, C, 2 * C
    else:
        xn1_p, q_p = _ln_matmul(x_p, prep["norm1_lnp"], prep["q_w"], prep["q_b"],
                                c_in=C, emit_xn=True, tm=tm, out_dtype=jnp.bfloat16)
        q_src = q_p[:M].reshape(B, N, -1)

        # ---- spatial reduction (kernel == stride conv -> patch matmul) + kv ----
        hs, ws = H // sr_ratio, W // sr_ratio
        nk = hs * ws
        m_kv = B * nk
        tm_kv = min(512, _round_up(m_kv, 8))
        m_kv_p = _round_up(m_kv, tm_kv)
        xn1 = xn1_p[:M, :C].reshape(B, H, W, C)
        pat = xn1.reshape(B, hs, sr_ratio, ws, sr_ratio, C)
        pat = pat.transpose(0, 1, 3, 2, 4, 5).reshape(m_kv, sr_ratio * sr_ratio * C)
        pat_p = _pad_to(pat, (m_kv_p, prep["sr_w"].shape[0]))
        xsr_p = _matmul_bias(pat_p, prep["sr_w"], prep["sr_bs"], tm=tm_kv,
                             out_dtype=jnp.float32)
        kv_p = _ln_matmul(xsr_p, prep["sr_lnp"], prep["kv_w"], prep["kv_b"],
                          c_in=C, emit_xn=False, tm=tm_kv, out_dtype=jnp.bfloat16)
        kv_src = kv_p[:m_kv].reshape(B, nk, -1)
        q_off, k_off, v_off = 0, 0, C

    # ---- attention + proj + gamma_1 + residual (fused) ----
    x_src = x_p[:M].reshape(B, N, cp)
    x1_3d = _attn_proj_residual(q_src, kv_src, x_src, prep["proj_w"], prep["proj_bs"],
                                num_heads=num_heads, hd=hd, scale=scale,
                                q_off=q_off, k_off=k_off, v_off=v_off)
    x1_p = _pad_to(x1_3d.reshape(M, cp), (mp, cp))

    # ---- norm2 + fc1 ----
    h_p = _ln_matmul(x1_p, prep["norm2_lnp"], prep["fc1_w"], prep["fc1_b"],
                     c_in=C, emit_xn=False, tm=tm, out_dtype=jnp.bfloat16)
    hid_p = prep["fc1_w"].shape[1]

    # ---- depthwise 3x3 conv + GELU ----
    g3 = _dwconv_gelu(h_p[:M].reshape(B, H, W, hid_p), prep["dw_w"], prep["dw_b"])
    g_p = _pad_to(g3.reshape(M, hid_p), (mp, hid_p))

    # ---- fc2 + gamma_2 + residual (fused) ----
    out_p = _matmul_bias(g_p, prep["fc2_w"], prep["fc2_bs"], tm=tm,
                         residual_p=x1_p, out_dtype=jnp.float32)

    return out_p[:M, :C].reshape(B, H, W, C).transpose(0, 3, 1, 2)


# --------------------------------------------------------------------------
# Plain-JAX reference (mirrors the PyTorch forward, same tanh-GELU).
# --------------------------------------------------------------------------
def _layernorm_ref(x, g, b):
    mean = jnp.mean(x, axis=-1, keepdims=True)
    var = jnp.mean((x - mean) ** 2, axis=-1, keepdims=True)
    return (x - mean) * jax.lax.rsqrt(var + LN_EPS) * g + b


def pvt_v2_block_reference(x_nchw, p, *, num_heads, sr_ratio):
    B, C, H, W = x_nchw.shape
    N = H * W
    hd = C // num_heads
    scale = hd ** -0.5
    x = x_nchw.reshape(B, C, N).transpose(0, 2, 1)
    shortcut = x
    xn = _layernorm_ref(x, p["norm1_g"], p["norm1_b"])
    q = (xn @ p["q_w"].T + p["q_b"]).reshape(B, N, num_heads, hd).transpose(0, 2, 1, 3)
    if sr_ratio > 1:
        x_ = xn.transpose(0, 2, 1).reshape(B, C, H, W)
        x_ = jax.lax.conv_general_dilated(
            x_, p["sr_w"], (sr_ratio, sr_ratio), "VALID",
            dimension_numbers=("NCHW", "OIHW", "NCHW"),
        ) + p["sr_b"].reshape(1, -1, 1, 1)
        x_ = x_.reshape(B, C, -1).transpose(0, 2, 1)
        kv_in = _layernorm_ref(x_, p["sr_norm_g"], p["sr_norm_b"])
    else:
        kv_in = xn
    kv = kv_in @ p["kv_w"].T + p["kv_b"]
    nk = kv.shape[1]
    kv = kv.reshape(B, nk, 2, num_heads, hd).transpose(2, 0, 3, 1, 4)
    kk, vv = kv[0], kv[1]
    attn = (q @ jnp.swapaxes(kk, -2, -1)) * scale
    attn = jax.nn.softmax(attn, axis=-1)
    ctx = (attn @ vv).transpose(0, 2, 1, 3).reshape(B, N, C)
    a_out = ctx @ p["proj_w"].T + p["proj_b"]
    if p["gamma_1"] is not None:
        a_out = p["gamma_1"] * a_out
    x = shortcut + a_out
    shortcut = x
    xn2 = _layernorm_ref(x, p["norm2_g"], p["norm2_b"])
    h = xn2 @ p["fc1_w"].T + p["fc1_b"]
    hidden = h.shape[-1]
    hw = h.transpose(0, 2, 1).reshape(B, hidden, H, W)
    dw = jax.lax.conv_general_dilated(
        hw, p["dw_w"], (1, 1), ((1, 1), (1, 1)),
        dimension_numbers=("NCHW", "OIHW", "NCHW"),
        feature_group_count=hidden,
    ) + p["dw_b"].reshape(1, -1, 1, 1)
    g = _gelu_tanh(dw.reshape(B, hidden, N).transpose(0, 2, 1))
    m_out = g @ p["fc2_w"].T + p["fc2_b"]
    if p["gamma_2"] is not None:
        m_out = p["gamma_2"] * m_out
    x = shortcut + m_out
    return x.reshape(B, H, W, C).transpose(0, 3, 1, 2)


if __name__ == "__main__":
    # Small shapes consistent with the module: dim=32, 2 heads, 8x8 tokens,
    # sr_ratio=2, mlp_ratio=4, layer scale enabled.
    B, C, H, W = 2, 32, 8, 8
    num_heads = 2
    sr_ratio = 2
    mlp_ratio = 4
    hidden = C * mlp_ratio
    layer_scale_init_value = 0.1

    key = jax.random.PRNGKey(0)
    ks = jax.random.split(key, 16)

    def lin_w(k, out_f, in_f):
        return 0.02 * jax.random.normal(k, (out_f, in_f), jnp.float32)

    def small(k, shape):
        # torch init zeroes biases / sets LN affine to (1, 0); small random
        # values are used so the bias / affine wiring is actually exercised.
        return 0.05 * jax.random.normal(k, shape, jnp.float32)

    params = {
        "norm1_g": 1.0 + small(ks[8], (C,)),
        "norm1_b": small(ks[9], (C,)),
        "q_w": lin_w(ks[1], C, C),
        "q_b": small(ks[10], (C,)),
        "kv_w": lin_w(ks[2], 2 * C, C),
        "kv_b": small(ks[11], (2 * C,)),
        "sr_w": jax.random.normal(ks[3], (C, C, sr_ratio, sr_ratio), jnp.float32)
                * math.sqrt(2.0 / (sr_ratio * sr_ratio * C)),
        "sr_b": small(ks[12], (C,)),
        "sr_norm_g": 1.0 + small(ks[13], (C,)),
        "sr_norm_b": small(ks[14], (C,)),
        "proj_w": lin_w(ks[4], C, C),
        "proj_b": small(ks[15], (C,)),
        "gamma_1": layer_scale_init_value * jnp.ones((C,), jnp.float32),
        "norm2_g": jnp.ones((C,), jnp.float32),
        "norm2_b": jnp.zeros((C,), jnp.float32),
        "fc1_w": lin_w(ks[5], hidden, C),
        "fc1_b": 0.05 * jnp.ones((hidden,), jnp.float32),
        "dw_w": jax.random.normal(ks[6], (hidden, 1, 3, 3), jnp.float32)
                * math.sqrt(2.0 / 9.0),
        "dw_b": 0.05 * jnp.ones((hidden,), jnp.float32),
        "fc2_w": lin_w(ks[7], C, hidden),
        "fc2_b": jnp.zeros((C,), jnp.float32),
        "gamma_2": layer_scale_init_value * jnp.ones((C,), jnp.float32),
    }

    x = jax.random.normal(ks[0], (B, C, H, W), jnp.float32)

    prep = prepare_params(params, num_heads=num_heads, sr_ratio=sr_ratio)
    fwd = jax.jit(functools.partial(pvt_v2_block, num_heads=num_heads,
                                    sr_ratio=sr_ratio))
    out = jax.block_until_ready(fwd(x, prep))

    ref = pvt_v2_block_reference(x, params, num_heads=num_heads, sr_ratio=sr_ratio)
    assert out.shape == (B, C, H, W), out.shape
    max_err = float(jnp.max(jnp.abs(out - ref)))
    # bf16 MXU feeds (f32 accumulation) -> tolerance loosened vs. a pure-f32 run.
    assert jnp.allclose(out, ref, atol=1e-2, rtol=1e-2), f"mismatch vs reference: {max_err}"

    print("KERNEL_OK")
</pallas_src>

<mosaic_0001>
module attributes {stable_mosaic.version = 11 : i64} {
  func.func @kernel(%arg0: i32, %arg1: memref<128x128xf32, #tpu.memory_space<vmem>>, %arg2: memref<2x128xf32, #tpu.memory_space<vmem>>, %arg3: memref<128x128xbf16, #tpu.memory_space<vmem>>, %arg4: memref<1x128xf32, #tpu.memory_space<vmem>>, %arg5: memref<128x128xbf16, #tpu.memory_space<vmem>>, %arg6: memref<128x128xbf16, #tpu.memory_space<vmem>>) attributes {dimension_semantics = [#tpu.dimension_semantics<parallel>], iteration_bounds = array<i64: 1>, scalar_prefetch = 0 : i64, scratch_operands = 0 : i64, tpu.core_type = #tpu.core_type<tc>, window_params = [{transform_indices = @transform_0, window_bounds = array<i64: 128, 128>}, {pipeline_mode = #tpu.pipeline_mode<synchronous>, transform_indices = @transform_1, window_bounds = array<i64: 2, 128>}, {pipeline_mode = #tpu.pipeline_mode<synchronous>, transform_indices = @transform_2, window_bounds = array<i64: 128, 128>}, {pipeline_mode = #tpu.pipeline_mode<synchronous>, transform_indices = @transform_3, window_bounds = array<i64: 1, 128>}, {transform_indices = @transform_4, window_bounds = array<i64: 128, 128>}, {transform_indices = @transform_5, window_bounds = array<i64: 128, 128>}]} {
    %c0 = arith.constant 0 : index
    %c0_0 = arith.constant 0 : index
    %0 = vector.load %arg1[%c0, %c0_0] : memref<128x128xf32, #tpu.memory_space<vmem>>, vector<128x128xf32>
    %1 = tpu.iota {dimensions = array<i32: 1>} : vector<128x128xi32>
    %c32_i32 = arith.constant 32 : i32
    %2 = vector.broadcast %c32_i32 : i32 to vector<128x128xi32>
    %3 = arith.cmpi slt, %1, %2 : vector<128x128xi32>
    %cst = arith.constant dense<0.000000e+00> : vector<128xf32>
    %4 = vector.multi_reduction <add>, %0, %cst [1] : vector<128x128xf32> to vector<128xf32>
    %5 = vector.shape_cast %4 : vector<128xf32> to vector<128x1xf32>
    %cst_1 = arith.constant 3.125000e-02 : f32
    %6 = vector.broadcast %cst_1 : f32 to vector<128x1xf32>
    %7 = arith.mulf %5, %6 : vector<128x1xf32>
    %8 = vector.broadcast %7 : vector<128x1xf32> to vector<128x128xf32>
    %9 = arith.subf %0, %8 : vector<128x128xf32>
    %cst_2 = arith.constant 0.000000e+00 : f32
    %10 = vector.broadcast %cst_2 : f32 to vector<128x128xf32>
    %11 = arith.select %3, %9, %10 : vector<128x128xi1>, vector<128x128xf32>
    %12 = arith.mulf %11, %11 : vector<128x128xf32>
    %cst_3 = arith.constant dense<0.000000e+00> : vector<128xf32>
    %13 = vector.multi_reduction <add>, %12, %cst_3 [1] : vector<128x128xf32> to vector<128xf32>
    %14 = vector.shape_cast %13 : vector<128xf32> to vector<128x1xf32>
    %cst_4 = arith.constant 3.125000e-02 : f32
    %15 = vector.broadcast %cst_4 : f32 to vector<128x1xf32>
    %16 = arith.mulf %14, %15 : vector<128x1xf32>
    %cst_5 = arith.constant 9.99999974E-6 : f32
    %17 = vector.broadcast %cst_5 : f32 to vector<128x1xf32>
    %18 = arith.addf %16, %17 : vector<128x1xf32>
    %19 = math.rsqrt %18 : vector<128x1xf32>
    %20 = vector.broadcast %19 : vector<128x1xf32> to vector<128x128xf32>
    %21 = arith.mulf %11, %20 : vector<128x128xf32>
    %c0_6 = arith.constant 0 : index
    %c0_7 = arith.constant 0 : index
    %22 = vector.load %arg2[%c0_6, %c0_7] : memref<2x128xf32, #tpu.memory_space<vmem>>, vector<1x128xf32>
    %23 = vector.broadcast %22 : vector<1x128xf32> to vector<128x128xf32>
    %24 = arith.mulf %21, %23 : vector<128x128xf32>
    %c1 = arith.constant 1 : index
    %c0_8 = arith.constant 0 : index
    %25 = vector.load %arg2[%c1, %c0_8] : memref<2x128xf32, #tpu.memory_space<vmem>>, vector<1x128xf32>
    %26 = vector.broadcast %25 : vector<1x128xf32> to vector<128x128xf32>
    %27 = arith.addf %24, %26 : vector<128x128xf32>
    %28 = arith.truncf %27 : vector<128x128xf32> to vector<128x128xbf16>
    %c0_9 = arith.constant 0 : index
    %c0_10 = arith.constant 0 : index
    %29 = vector.load %arg3[%c0_9, %c0_10] : memref<128x128xbf16, #tpu.memory_space<vmem>>, vector<128x128xbf16>
    %cst_11 = arith.constant dense<0.000000e+00> : vector<128x128xf32>
    %30 = tpu.matmul %28, %29, %cst_11 {dimension_numbers = #tpu.dot_dimension_numbers<[1], [0], [0], [1], [0, 0, 1, 1], [], []>} : vector<128x128xbf16>, vector<128x128xbf16>, vector<128x128xf32> -> vector<128x128xf32>
    %c0_12 = arith.constant 0 : index
    %c0_13 = arith.constant 0 : index
    %31 = vector.load %arg4[%c0_12, %c0_13] : memref<1x128xf32, #tpu.memory_space<vmem>>, vector<1x128xf32>
    %32 = vector.broadcast %31 : vector<1x128xf32> to vector<128x128xf32>
    %33 = arith.addf %30, %32 : vector<128x128xf32>
    %c0_14 = arith.constant 0 : index
    %c0_15 = arith.constant 0 : index
    %34 = vector.load %arg5[%c0_14, %c0_15] : memref<128x128xbf16, #tpu.memory_space<vmem>>, vector<128x128xbf16>
    tpu.vector_store %arg5[%c0_14, %c0_15], %28 {strides = array<i32>} : memref<128x128xbf16, #tpu.memory_space<vmem>>, vector<128x128xbf16>,
    %35 = arith.truncf %33 : vector<128x128xf32> to vector<128x128xbf16>
    %c0_16 = arith.constant 0 : index
    %c0_17 = arith.constant 0 : index
    %36 = vector.load %arg6[%c0_16, %c0_17] : memref<128x128xbf16, #tpu.memory_space<vmem>>, vector<128x128xbf16>
    tpu.vector_store %arg6[%c0_16, %c0_17], %35 {strides = array<i32>} : memref<128x128xbf16, #tpu.memory_space<vmem>>, vector<128x128xbf16>,
    return
  }
  func.func @transform_0(%arg0: i32) -> (i32, i32) {
    %c0_i32 = arith.constant 0 : i32
    %c0_i32_0 = arith.constant 0 : i32
    return %arg0, %c0_i32 : i32, i32
  }
  func.func @transform_1(%arg0: i32) -> (i32, i32) {
    %c0_i32 = arith.constant 0 : i32
    %c0_i32_0 = arith.constant 0 : i32
    %c0_i32_1 = arith.constant 0 : i32
    return %c0_i32, %c0_i32_0 : i32, i32
  }
  func.func @transform_2(%arg0: i32) -> (i32, i32) {
    %c0_i32 = arith.constant 0 : i32
    %c0_i32_0 = arith.constant 0 : i32
    %c0_i32_1 = arith.constant 0 : i32
    return %c0_i32, %c0_i32_0 : i32, i32
  }
  func.func @transform_3(%arg0: i32) -> (i32, i32) {
    %c0_i32 = arith.constant 0 : i32
    %c0_i32_0 = arith.constant 0 : i32
    %c0_i32_1 = arith.constant 0 : i32
    return %c0_i32, %c0_i32_0 : i32, i32
  }
  func.func @transform_4(%arg0: i32) -> (i32, i32) {
    %c0_i32 = arith.constant 0 : i32
    %c0_i32_0 = arith.constant 0 : i32
    return %arg0, %c0_i32 : i32, i32
  }
  func.func @transform_5(%arg0: i32) -> (i32, i32) {
    %c0_i32 = arith.constant 0 : i32
    %c0_i32_0 = arith.constant 0 : i32
    return %arg0, %c0_i32 : i32, i32
  }
}

module attributes {stable_mosaic.version = 11 : i64} {
  func.func @kernel(%arg0: i32, %arg1: memref<32x128xf32, #tpu.memory_space<vmem>>, %arg2: memref<2x128xf32, #tpu.memory_space<vmem>>, %arg3: memref<128x128xbf16, #tpu.memory_space<vmem>>, %arg4: memref<1x128xf32, #tpu.memory_space<vmem>>, %arg5: memref<32x128xbf16, #tpu.memory_space<vmem>>) attributes {dimension_semantics = [#tpu.dimension_semantics<parallel>], iteration_bounds = array<i64: 1>, scalar_prefetch = 0 : i64, scratch_operands = 0 : i64, tpu.core_type = #tpu.core_type<tc>, window_params = [{transform_indices = @transform_0, window_bounds = array<i64: 32, 128>}, {pipeline_mode = #tpu.pipeline_mode<synchronous>, transform_indices = @transform_1, window_bounds = array<i64: 2, 128>}, {pipeline_mode = #tpu.pipeline_mode<synchronous>, transform_indices = @transform_2, window_bounds = array<i64: 128, 128>}, {pipeline_mode = #tpu.pipeline_mode<synchronous>, transform_indices = @transform_3, window_bounds = array<i64: 1, 128>}, {transform_indices = @transform_4, window_bounds = array<i64: 32, 128>}]} {
    %c0 = arith.constant 0 : index
    %c0_0 = arith.constant 0 : index
    %0 = vector.load %arg1[%c0, %c0_0] : memref<32x128xf32, #tpu.memory_space<vmem>>, vector<32x128xf32>
    %1 = tpu.iota {dimensions = array<i32: 1>} : vector<32x128xi32>
    %c32_i32 = arith.constant 32 : i32
    %2 = vector.broadcast %c32_i32 : i32 to vector<32x128xi32>
    %3 = arith.cmpi slt, %1, %2 : vector<32x128xi32>
    %cst = arith.constant dense<0.000000e+00> : vector<32xf32>
    %4 = vector.multi_reduction <add>, %0, %cst [1] : vector<32x128xf32> to vector<32xf32>
    %5 = vector.shape_cast %4 : vector<32xf32> to vector<32x1xf32>
    %cst_1 = arith.constant 3.125000e-02 : f32
    %6 = vector.broadcast %cst_1 : f32 to vector<32x1xf32>
    %7 = arith.mulf %5, %6 : vector<32x1xf32>
    %8 = vector.broadcast %7 : vector<32x1xf32> to vector<32x128xf32>
    %9 = arith.subf %0, %8 : vector<32x128xf32>
    %cst_2 = arith.constant 0.000000e+00 : f32
    %10 = vector.broadcast %cst_2 : f32 to vector<32x128xf32>
    %11 = arith.select %3, %9, %10 : vector<32x128xi1>, vector<32x128xf32>
    %12 = arith.mulf %11, %11 : vector<32x128xf32>
    %cst_3 = arith.constant dense<0.000000e+00> : vector<32xf32>
    %13 = vector.multi_reduction <add>, %12, %cst_3 [1] : vector<32x128xf32> to vector<32xf32>
    %14 = vector.shape_cast %13 : vector<32xf32> to vector<32x1xf32>
    %cst_4 = arith.constant 3.125000e-02 : f32
    %15 = vector.broadcast %cst_4 : f32 to vector<32x1xf32>
    %16 = arith.mulf %14, %15 : vector<32x1xf32>
    %cst_5 = arith.constant 9.99999974E-6 : f32
    %17 = vector.broadcast %cst_5 : f32 to vector<32x1xf32>
    %18 = arith.addf %16, %17 : vector<32x1xf32>
    %19 = math.rsqrt %18 : vector<32x1xf32>
    %20 = vector.broadcast %19 : vector<32x1xf32> to vector<32x128xf32>
    %21 = arith.mulf %11, %20 : vector<32x128xf32>
    %c0_6 = arith.constant 0 : index
    %c0_7 = arith.constant 0 : index
    %22 = vector.load %arg2[%c0_6, %c0_7] : memref<2x128xf32, #tpu.memory_space<vmem>>, vector<1x128xf32>
    %23 = vector.broadcast %22 : vector<1x128xf32> to vector<32x128xf32>
    %24 = arith.mulf %21, %23 : vector<32x128xf32>
    %c1 = arith.constant 1 : index
    %c0_8 = arith.constant 0 : index
    %25 = vector.load %arg2[%c1, %c0_8] : memref<2x128xf32, #tpu.memory_space<vmem>>, vector<1x128xf32>
    %26 = vector.broadcast %25 : vector<1x128xf32> to vector<32x128xf32>
    %27 = arith.addf %24, %26 : vector<32x128xf32>
    %28 = arith.truncf %27 : vector<32x128xf32> to vector<32x128xbf16>
    %c0_9 = arith.constant 0 : index
    %c0_10 = arith.constant 0 : index
    %29 = vector.load %arg3[%c0_9, %c0_10] : memref<128x128xbf16, #tpu.memory_space<vmem>>, vector<128x128xbf16>
    %cst_11 = arith.constant dense<0.000000e+00> : vector<32x128xf32>
    %30 = tpu.matmul %28, %29, %cst_11 {dimension_numbers = #tpu.dot_dimension_numbers<[1], [0], [0], [1], [0, 0, 1, 1], [], []>} : vector<32x128xbf16>, vector<128x128xbf16>, vector<32x128xf32> -> vector<32x128xf32>
    %c0_12 = arith.constant 0 : index
    %c0_13 = arith.constant 0 : index
    %31 = vector.load %arg4[%c0_12, %c0_13] : memref<1x128xf32, #tpu.memory_space<vmem>>, vector<1x128xf32>
    %32 = vector.broadcast %31 : vector<1x128xf32> to vector<32x128xf32>
    %33 = arith.addf %30, %32 : vector<32x128xf32>
    %34 = arith.truncf %33 : vector<32x128xf32> to vector<32x128xbf16>
    %c0_14 = arith.constant 0 : index
    %c0_15 = arith.constant 0 : index
    %35 = vector.load %arg5[%c0_14, %c0_15] : memref<32x128xbf16, #tpu.memory_space<vmem>>, vector<32x128xbf16>
    tpu.vector_store %arg5[%c0_14, %c0_15], %34 {strides = array<i32>} : memref<32x128xbf16, #tpu.memory_space<vmem>>, vector<32x128xbf16>,
    return
  }
  func.func @transform_0(%arg0: i32) -> (i32, i32) {
    %c0_i32 = arith.constant 0 : i32
    %c0_i32_0 = arith.constant 0 : i32
    return %arg0, %c0_i32 : i32, i32
  }
  func.func @transform_1(%arg0: i32) -> (i32, i32) {
    %c0_i32 = arith.constant 0 : i32
    %c0_i32_0 = arith.constant 0 : i32
    %c0_i32_1 = arith.constant 0 : i32
    return %c0_i32, %c0_i32_0 : i32, i32
  }
  func.func @transform_2(%arg0: i32) -> (i32, i32) {
    %c0_i32 = arith.constant 0 : i32
    %c0_i32_0 = arith.constant 0 : i32
    %c0_i32_1 = arith.constant 0 : i32
    return %c0_i32, %c0_i32_0 : i32, i32
  }
  func.func @transform_3(%arg0: i32) -> (i32, i32) {
    %c0_i32 = arith.constant 0 : i32
    %c0_i32_0 = arith.constant 0 : i32
    %c0_i32_1 = arith.constant 0 : i32
    return %c0_i32, %c0_i32_0 : i32, i32
  }
  func.func @transform_4(%arg0: i32) -> (i32, i32) {
    %c0_i32 = arith.constant 0 : i32
    %c0_i32_0 = arith.constant 0 : i32
    return %arg0, %c0_i32 : i32, i32
  }
}

module attributes {stable_mosaic.version = 11 : i64} {
  func.func @kernel(%arg0: i32, %arg1: memref<32x128xbf16, #tpu.memory_space<vmem>>, %arg2: memref<128x128xbf16, #tpu.memory_space<vmem>>, %arg3: memref<2x128xf32, #tpu.memory_space<vmem>>, %arg4: memref<32x128xf32, #tpu.memory_space<vmem>>) attributes {dimension_semantics = [#tpu.dimension_semantics<parallel>], iteration_bounds = array<i64: 1>, scalar_prefetch = 0 : i64, scratch_operands = 0 : i64, tpu.core_type = #tpu.core_type<tc>, window_params = [{transform_indices = @transform_0, window_bounds = array<i64: 32, 128>}, {pipeline_mode = #tpu.pipeline_mode<synchronous>, transform_indices = @transform_1, window_bounds = array<i64: 128, 128>}, {pipeline_mode = #tpu.pipeline_mode<synchronous>, transform_indices = @transform_2, window_bounds = array<i64: 2, 128>}, {transform_indices = @transform_3, window_bounds = array<i64: 32, 128>}]} {
    %c0 = arith.constant 0 : index
    %c0_0 = arith.constant 0 : index
    %0 = vector.load %arg1[%c0, %c0_0] : memref<32x128xbf16, #tpu.memory_space<vmem>>, vector<32x128xbf16>
    %c0_1 = arith.constant 0 : index
    %c0_2 = arith.constant 0 : index
    %1 = vector.load %arg2[%c0_1, %c0_2] : memref<128x128xbf16, #tpu.memory_space<vmem>>, vector<128x128xbf16>
    %cst = arith.constant dense<0.000000e+00> : vector<32x128xf32>
    %2 = tpu.matmul %0, %1, %cst {dimension_numbers = #tpu.dot_dimension_numbers<[1], [0], [0], [1], [0, 0, 1, 1], [], []>} : vector<32x128xbf16>, vector<128x128xbf16>, vector<32x128xf32> -> vector<32x128xf32>
    %c0_3 = arith.constant 0 : index
    %c0_4 = arith.constant 0 : index
    %3 = vector.load %arg3[%c0_3, %c0_4] : memref<2x128xf32, #tpu.memory_space<vmem>>, vector<1x128xf32>
    %4 = vector.broadcast %3 : vector<1x128xf32> to vector<32x128xf32>
    %5 = arith.addf %2, %4 : vector<32x128xf32>
    %c0_5 = arith.constant 0 : index
    %c0_6 = arith.constant 0 : index
    %6 = vector.load %arg4[%c0_5, %c0_6] : memref<32x128xf32, #tpu.memory_space<vmem>>, vector<32x128xf32>
    tpu.vector_store %arg4[%c0_5, %c0_6], %5 {strides = array<i32>} : memref<32x128xf32, #tpu.memory_space<vmem>>, vector<32x128xf32>,
    return
  }
  func.func @transform_0(%arg0: i32) -> (i32, i32) {
    %c0_i32 = arith.constant 0 : i32
    %c0_i32_0 = arith.constant 0 : i32
    return %arg0, %c0_i32 : i32, i32
  }
  func.func @transform_1(%arg0: i32) -> (i32, i32) {
    %c0_i32 = arith.constant 0 : i32
    %c0_i32_0 = arith.constant 0 : i32
    %c0_i32_1 = arith.constant 0 : i32
    return %c0_i32, %c0_i32_0 : i32, i32
  }
  func.func @transform_2(%arg0: i32) -> (i32, i32) {
    %c0_i32 = arith.constant 0 : i32
    %c0_i32_0 = arith.constant 0 : i32
    %c0_i32_1 = arith.constant 0 : i32
    return %c0_i32, %c0_i32_0 : i32, i32
  }
  func.func @transform_3(%arg0: i32) -> (i32, i32) {
    %c0_i32 = arith.constant 0 : i32
    %c0_i32_0 = arith.constant 0 : i32
    return %arg0, %c0_i32 : i32, i32
  }
}

module attributes {stable_mosaic.version = 11 : i64} {
  func.func @kernel(%arg0: i32, %arg1: memref<1x64x128xbf16, #tpu.memory_space<vmem>>, %arg2: memref<1x16x128xbf16, #tpu.memory_space<vmem>>, %arg3: memref<1x64x128xf32, #tpu.memory_space<vmem>>, %arg4: memref<128x128xbf16, #tpu.memory_space<vmem>>, %arg5: memref<2x128xf32, #tpu.memory_space<vmem>>, %arg6: memref<1x64x128xf32, #tpu.memory_space<vmem>>) attributes {dimension_semantics = [#tpu.dimension_semantics<parallel>], iteration_bounds = array<i64: 2>, scalar_prefetch = 0 : i64, scratch_operands = 0 : i64, tpu.core_type = #tpu.core_type<tc>, window_params = [{transform_indices = @transform_0, window_bounds = array<i64: 1, 64, 128>}, {transform_indices = @transform_1, window_bounds = array<i64: 1, 16, 128>}, {transform_indices = @transform_2, window_bounds = array<i64: 1, 64, 128>}, {pipeline_mode = #tpu.pipeline_mode<synchronous>, transform_indices = @transform_3, window_bounds = array<i64: 128, 128>}, {pipeline_mode = #tpu.pipeline_mode<synchronous>, transform_indices = @transform_4, window_bounds = array<i64: 2, 128>}, {transform_indices = @transform_5, window_bounds = array<i64: 1, 64, 128>}]} {
    %cst = arith.constant 0.000000e+00 : f32
    %0 = vector.broadcast %cst : f32 to vector<64x128xf32>
    %c0 = arith.constant 0 : index
    %c0_0 = arith.constant 0 : index
    %c0_1 = arith.constant 0 : index
    %1 = vector.load %arg1[%c0, %c0_0, %c0_1] : memref<1x64x128xbf16, #tpu.memory_space<vmem>>, vector<1x64x16xbf16>
    %2 = vector.shape_cast %1 : vector<1x64x16xbf16> to vector<64x16xbf16>
    %3 = arith.extf %2 : vector<64x16xbf16> to vector<64x16xf32>
    %cst_2 = arith.constant 2.500000e-01 : f32
    %4 = vector.broadcast %cst_2 : f32 to vector<64x16xf32>
    %5 = arith.mulf %3, %4 : vector<64x16xf32>
    %6 = arith.truncf %5 : vector<64x16xf32> to vector<64x16xbf16>
    %c0_3 = arith.constant 0 : index
    %c0_4 = arith.constant 0 : index
    %c0_5 = arith.constant 0 : index
    %7 = vector.load %arg2[%c0_3, %c0_4, %c0_5] : memref<1x16x128xbf16, #tpu.memory_space<vmem>>, vector<1x16x16xbf16>
    %8 = vector.shape_cast %7 : vector<1x16x16xbf16> to vector<16x16xbf16>
    %c0_6 = arith.constant 0 : index
    %c0_7 = arith.constant 0 : index
    %c32 = arith.constant 32 : index
    %9 = vector.load %arg2[%c0_6, %c0_7, %c32] : memref<1x16x128xbf16, #tpu.memory_space<vmem>>, vector<1x16x16xbf16>
    %10 = vector.shape_cast %9 : vector<1x16x16xbf16> to vector<16x16xbf16>
    %cst_8 = arith.constant dense<0.000000e+00> : vector<64x16xf32>
    %11 = tpu.matmul %6, %8, %cst_8 {dimension_numbers = #tpu.dot_dimension_numbers<[1], [1], [0], [0], [0, 0, 1, 0], [], []>} : vector<64x16xbf16>, vector<16x16xbf16>, vector<64x16xf32> -> vector<64x16xf32>
    %cst_9 = arith.constant dense<0xFF800000> : vector<64xf32>
    %12 = vector.multi_reduction <maximumf>, %11, %cst_9 [1] : vector<64x16xf32> to vector<64xf32>
    %13 = vector.shape_cast %12 : vector<64xf32> to vector<64x1xf32>
    %14 = vector.broadcast %13 : vector<64x1xf32> to vector<64x16xf32>
    %15 = arith.subf %11, %14 : vector<64x16xf32>
    %16 = math.exp %15 : vector<64x16xf32>
    %cst_10 = arith.constant dense<0.000000e+00> : vector<64xf32>
    %17 = vector.multi_reduction <add>, %16, %cst_10 [1] : vector<64x16xf32> to vector<64xf32>
    %18 = vector.shape_cast %17 : vector<64xf32> to vector<64x1xf32>
    %19 = tpu.reciprocal %18 {approx = true} : vector<64x1xf32> -> vector<64x1xf32>
    %20 = vector.broadcast %19 : vector<64x1xf32> to vector<64x16xf32>
    %21 = arith.mulf %16, %20 : vector<64x16xf32>
    %22 = arith.truncf %21 : vector<64x16xf32> to vector<64x16xbf16>
    %cst_11 = arith.constant dense<0.000000e+00> : vector<64x16xf32>
    %23 = tpu.matmul %22, %10, %cst_11 {dimension_numbers = #tpu.dot_dimension_numbers<[1], [0], [0], [1], [0, 0, 1, 1], [], []>} : vector<64x16xbf16>, vector<16x16xbf16>, vector<64x16xf32> -> vector<64x16xf32>
    %24 = arith.truncf %23 : vector<64x16xf32> to vector<64x16xbf16>
    %c0_12 = arith.constant 0 : index
    %c0_13 = arith.constant 0 : index
    %25 = vector.load %arg4[%c0_12, %c0_13] : memref<128x128xbf16, #tpu.memory_space<vmem>>, vector<16x128xbf16>
    %cst_14 = arith.constant dense<0.000000e+00> : vector<64x128xf32>
    %26 = tpu.matmul %24, %25, %cst_14 {dimension_numbers = #tpu.dot_dimension_numbers<[1], [0], [0], [1], [0, 0, 1, 1], [], []>} : vector<64x16xbf16>, vector<16x128xbf16>, vector<64x128xf32> -> vector<64x128xf32>
    %27 = arith.addf %0, %26 : vector<64x128xf32>
    %c0_15 = arith.constant 0 : index
    %c0_16 = arith.constant 0 : index
    %c16 = arith.constant 16 : index
    %28 = vector.load %arg1[%c0_15, %c0_16, %c16] : memref<1x64x128xbf16, #tpu.memory_space<vmem>>, vector<1x64x16xbf16>
    %29 = vector.shape_cast %28 : vector<1x64x16xbf16> to vector<64x16xbf16>
    %30 = arith.extf %29 : vector<64x16xbf16> to vector<64x16xf32>
    %cst_17 = arith.constant 2.500000e-01 : f32
    %31 = vector.broadcast %cst_17 : f32 to vector<64x16xf32>
    %32 = arith.mulf %30, %31 : vector<64x16xf32>
    %33 = arith.truncf %32 : vector<64x16xf32> to vector<64x16xbf16>
    %c0_18 = arith.constant 0 : index
    %c0_19 = arith.constant 0 : index
    %c16_20 = arith.constant 16 : index
    %34 = vector.load %arg2[%c0_18, %c0_19, %c16_20] : memref<1x16x128xbf16, #tpu.memory_space<vmem>>, vector<1x16x16xbf16>
    %35 = vector.shape_cast %34 : vector<1x16x16xbf16> to vector<16x16xbf16>
    %c0_21 = arith.constant 0 : index
    %c0_22 = arith.constant 0 : index
    %c48 = arith.constant 48 : index
    %36 = vector.load %arg2[%c0_21, %c0_22, %c48] : memref<1x16x128xbf16, #tpu.memory_space<vmem>>, vector<1x16x16xbf16>
    %37 = vector.shape_cast %36 : vector<1x16x16xbf16> to vector<16x16xbf16>
    %cst_23 = arith.constant dense<0.000000e+00> : vector<64x16xf32>
    %38 = tpu.matmul %33, %35, %cst_23 {dimension_numbers = #tpu.dot_dimension_numbers<[1], [1], [0], [0], [0, 0, 1, 0], [], []>} : vector<64x16xbf16>, vector<16x16xbf16>, vector<64x16xf32> -> vector<64x16xf32>
    %cst_24 = arith.constant dense<0xFF800000> : vector<64xf32>
    %39 = vector.multi_reduction <maximumf>, %38, %cst_24 [1] : vector<64x16xf32> to vector<64xf32>
    %40 = vector.shape_cast %39 : vector<64xf32> to vector<64x1xf32>
    %41 = vector.broadcast %40 : vector<64x1xf32> to vector<64x16xf32>
    %42 = arith.subf %38, %41 : vector<64x16xf32>
    %43 = math.exp %42 : vector<64x16xf32>
    %cst_25 = arith.constant dense<0.000000e+00> : vector<64xf32>
    %44 = vector.multi_reduction <add>, %43, %cst_25 [1] : vector<64x16xf32> to vector<64xf32>
    %45 = vector.shape_cast %44 : vector<64xf32> to vector<64x1xf32>
    %46 = tpu.reciprocal %45 {approx = true} : vector<64x1xf32> -> vector<64x1xf32>
    %47 = vector.broadcast %46 : vector<64x1xf32> to vector<64x16xf32>
    %48 = arith.mulf %43, %47 : vector<64x16xf32>
    %49 = arith.truncf %48 : vector<64x16xf32> to vector<64x16xbf16>
    %cst_26 = arith.constant dense<0.000000e+00> : vector<64x16xf32>
    %50 = tpu.matmul %49, %37, %cst_26 {dimension_numbers = #tpu.dot_dimension_numbers<[1], [0], [0], [1], [0, 0, 1, 1], [], []>} : vector<64x16xbf16>, vector<16x16xbf16>, vector<64x16xf32> -> vector<64x16xf32>
    %51 = arith.truncf %50 : vector<64x16xf32> to vector<64x16xbf16>
    %c16_27 = arith.constant 16 : index
    %c0_28 = arith.constant 0 : index
    %52 = vector.load %arg4[%c16_27, %c0_28] : memref<128x128xbf16, #tpu.memory_space<vmem>>, vector<16x128xbf16>
    %cst_29 = arith.constant dense<0.000000e+00> : vector<64x128xf32>
    %53 = tpu.matmul %51, %52, %cst_29 {dimension_numbers = #tpu.dot_dimension_numbers<[1], [0], [0], [1], [0, 0, 1, 1], [], []>} : vector<64x16xbf16>, vector<16x128xbf16>, vector<64x128xf32> -> vector<64x128xf32>
    %54 = arith.addf %27, %53 : vector<64x128xf32>
    %c0_30 = arith.constant 0 : index
    %c0_31 = arith.constant 0 : index
    %55 = vector.load %arg5[%c0_30, %c0_31] : memref<2x128xf32, #tpu.memory_space<vmem>>, vector<1x128xf32>
    %56 = vector.broadcast %55 : vector<1x128xf32> to vector<64x128xf32>
    %57 = arith.addf %54, %56 : vector<64x128xf32>
    %c0_32 = arith.constant 0 : index
    %c0_33 = arith.constant 0 : index
    %c0_34 = arith.constant 0 : index
    %58 = vector.load %arg3[%c0_32, %c0_33, %c0_34] : memref<1x64x128xf32, #tpu.memory_space<vmem>>, vector<1x64x128xf32>
    %59 = vector.shape_cast %58 : vector<1x64x128xf32> to vector<64x128xf32>
    %c1 = arith.constant 1 : index
    %c0_35 = arith.constant 0 : index
    %60 = vector.load %arg5[%c1, %c0_35] : memref<2x128xf32, #tpu.memory_space<vmem>>, vector<1x128xf32>
    %61 = vector.broadcast %60 : vector<1x128xf32> to vector<64x128xf32>
    %62 = arith.mulf %61, %57 : vector<64x128xf32>
    %63 = arith.addf %59, %62 : vector<64x128xf32>
    %c0_36 = arith.constant 0 : index
    %c0_37 = arith.constant 0 : index
    %c0_38 = arith.constant 0 : index
    %64 = vector.load %arg6[%c0_36, %c0_37, %c0_38] : memref<1x64x128xf32, #tpu.memory_space<vmem>>, vector<1x64x128xf32>
    %65 = vector.shape_cast %64 : vector<1x64x128xf32> to vector<64x128xf32>
    %66 = vector.shape_cast %63 : vector<64x128xf32> to vector<1x64x128xf32>
    tpu.vector_store %arg6[%c0_36, %c0_37, %c0_38], %66 {strides = array<i32>} : memref<1x64x128xf32, #tpu.memory_space<vmem>>, vector<1x64x128xf32>,
    return
  }
  func.func @transform_0(%arg0: i32) -> (i32, i32, i32) {
    %c0_i32 = arith.constant 0 : i32
    %c0_i32_0 = arith.constant 0 : i32
    %c0_i32_1 = arith.constant 0 : i32
    return %arg0, %c0_i32, %c0_i32_0 : i32, i32, i32
  }
  func.func @transform_1(%arg0: i32) -> (i32, i32, i32) {
    %c0_i32 = arith.constant 0 : i32
    %c0_i32_0 = arith.constant 0 : i32
    %c0_i32_1 = arith.constant 0 : i32
    return %arg0, %c0_i32, %c0_i32_0 : i32, i32, i32
  }
  func.func @transform_2(%arg0: i32) -> (i32, i32, i32) {
    %c0_i32 = arith.constant 0 : i32
    %c0_i32_0 = arith.constant 0 : i32
    %c0_i32_1 = arith.constant 0 : i32
    return %arg0, %c0_i32, %c0_i32_0 : i32, i32, i32
  }
  func.func @transform_3(%arg0: i32) -> (i32, i32) {
    %c0_i32 = arith.constant 0 : i32
    %c0_i32_0 = arith.constant 0 : i32
    %c0_i32_1 = arith.constant 0 : i32
    return %c0_i32, %c0_i32_0 : i32, i32
  }
  func.func @transform_4(%arg0: i32) -> (i32, i32) {
    %c0_i32 = arith.constant 0 : i32
    %c0_i32_0 = arith.constant 0 : i32
    %c0_i32_1 = arith.constant 0 : i32
    return %c0_i32, %c0_i32_0 : i32, i32
  }
  func.func @transform_5(%arg0: i32) -> (i32, i32, i32) {
    %c0_i32 = arith.constant 0 : i32
    %c0_i32_0 = arith.constant 0 : i32
    %c0_i32_1 = arith.constant 0 : i32
    return %arg0, %c0_i32, %c0_i32_0 : i32, i32, i32
  }
}

module attributes {stable_mosaic.version = 11 : i64} {
  func.func @kernel(%arg0: i32, %arg1: memref<1x8x8x128xbf16, #tpu.memory_space<vmem>>, %arg2: memref<3x3x128xf32, #tpu.memory_space<vmem>>, %arg3: memref<1x1x128xf32, #tpu.memory_space<vmem>>, %arg4: memref<1x8x8x128xbf16, #tpu.memory_space<vmem>>, %arg5: memref<10x10x128xbf16, #tpu.memory_space<vmem>>) attributes {dimension_semantics = [#tpu.dimension_semantics<parallel>], iteration_bounds = array<i64: 2>, scalar_prefetch = 0 : i64, scratch_operands = 1 : i64, tpu.core_type = #tpu.core_type<tc>, window_params = [{transform_indices = @transform_0, window_bounds = array<i64: 1, 8, 8, 128>}, {pipeline_mode = #tpu.pipeline_mode<synchronous>, transform_indices = @transform_1, window_bounds = array<i64: 3, 3, 128>}, {pipeline_mode = #tpu.pipeline_mode<synchronous>, transform_indices = @transform_2, window_bounds = array<i64: 1, 1, 128>}, {transform_indices = @transform_3, window_bounds = array<i64: 1, 8, 8, 128>}]} {
    %cst = arith.constant 0.000000e+00 : bf16
    %0 = vector.broadcast %cst : bf16 to vector<10x10x128xbf16>
    %c0 = arith.constant 0 : index
    %c0_0 = arith.constant 0 : index
    %c0_1 = arith.constant 0 : index
    %1 = vector.load %arg5[%c0, %c0_0, %c0_1] : memref<10x10x128xbf16, #tpu.memory_space<vmem>>, vector<10x10x128xbf16>
    tpu.vector_store %arg5[%c0, %c0_0, %c0_1], %0 {strides = array<i32>} : memref<10x10x128xbf16, #tpu.memory_space<vmem>>, vector<10x10x128xbf16>,
    %c0_2 = arith.constant 0 : index
    %c0_3 = arith.constant 0 : index
    %c0_4 = arith.constant 0 : index
    %c0_5 = arith.constant 0 : index
    %2 = vector.load %arg1[%c0_2, %c0_3, %c0_4, %c0_5] : memref<1x8x8x128xbf16, #tpu.memory_space<vmem>>, vector<1x8x8x128xbf16>
    %3 = vector.shape_cast %2 : vector<1x8x8x128xbf16> to vector<8x8x128xbf16>
    %c1 = arith.constant 1 : index
    %c1_6 = arith.constant 1 : index
    %c0_7 = arith.constant 0 : index
    %4 = vector.load %arg5[%c1, %c1_6, %c0_7] : memref<10x10x128xbf16, #tpu.memory_space<vmem>>, vector<8x8x128xbf16>
    tpu.vector_store %arg5[%c1, %c1_6, %c0_7], %3 {strides = array<i32>} : memref<10x10x128xbf16, #tpu.memory_space<vmem>>, vector<8x8x128xbf16>,
    %cst_8 = arith.constant 0.000000e+00 : f32
    %5 = vector.broadcast %cst_8 : f32 to vector<8x8x128xf32>
    %c0_9 = arith.constant 0 : index
    %c0_10 = arith.constant 0 : index
    %c0_11 = arith.constant 0 : index
    %6 = vector.load %arg5[%c0_9, %c0_10, %c0_11] : memref<10x10x128xbf16, #tpu.memory_space<vmem>>, vector<8x8x128xbf16>
    %7 = arith.extf %6 : vector<8x8x128xbf16> to vector<8x8x128xf32>
    %c0_12 = arith.constant 0 : index
    %c0_13 = arith.constant 0 : index
    %c0_14 = arith.constant 0 : index
    %8 = vector.load %arg2[%c0_12, %c0_13, %c0_14] : memref<3x3x128xf32, #tpu.memory_space<vmem>>, vector<1x1x128xf32>
    %9 = vector.broadcast %8 : vector<1x1x128xf32> to vector<8x8x128xf32>
    %10 = arith.mulf %7, %9 : vector<8x8x128xf32>
    %11 = arith.addf %5, %10 : vector<8x8x128xf32>
    %c0_15 = arith.constant 0 : index
    %c1_16 = arith.constant 1 : index
    %c0_17 = arith.constant 0 : index
    %12 = vector.load %arg5[%c0_15, %c1_16, %c0_17] : memref<10x10x128xbf16, #tpu.memory_space<vmem>>, vector<8x8x128xbf16>
    %13 = arith.extf %12 : vector<8x8x128xbf16> to vector<8x8x128xf32>
    %c0_18 = arith.constant 0 : index
    %c1_19 = arith.constant 1 : index
    %c0_20 = arith.constant 0 : index
    %14 = vector.load %arg2[%c0_18, %c1_19, %c0_20] : memref<3x3x128xf32, #tpu.memory_space<vmem>>, vector<1x1x128xf32>
    %15 = vector.broadcast %14 : vector<1x1x128xf32> to vector<8x8x128xf32>
    %16 = arith.mulf %13, %15 : vector<8x8x128xf32>
    %17 = arith.addf %11, %16 : vector<8x8x128xf32>
    %c0_21 = arith.constant 0 : index
    %c2 = arith.constant 2 : index
    %c0_22 = arith.constant 0 : index
    %18 = vector.load %arg5[%c0_21, %c2, %c0_22] : memref<10x10x128xbf16, #tpu.memory_space<vmem>>, vector<8x8x128xbf16>
    %19 = arith.extf %18 : vector<8x8x128xbf16> to vector<8x8x128xf32>
    %c0_23 = arith.constant 0 : index
    %c2_24 = arith.constant 2 : index
    %c0_25 = arith.constant 0 : index
    %20 = vector.load %arg2[%c0_23, %c2_24, %c0_25] : memref<3x3x128xf32, #tpu.memory_space<vmem>>, vector<1x1x128xf32>
    %21 = vector.broadcast %20 : vector<1x1x128xf32> to vector<8x8x128xf32>
    %22 = arith.mulf %19, %21 : vector<8x8x128xf32>
    %23 = arith.addf %17, %22 : vector<8x8x128xf32>
    %c1_26 = arith.constant 1 : index
    %c0_27 = arith.constant 0 : index
    %c0_28 = arith.constant 0 : index
    %24 = vector.load %arg5[%c1_26, %c0_27, %c0_28] : memref<10x10x128xbf16, #tpu.memory_space<vmem>>, vector<8x8x128xbf16>
    %25 = arith.extf %24 : vector<8x8x128xbf16> to vector<8x8x128xf32>
    %c1_29 = arith.constant 1 : index
    %c0_30 = arith.constant 0 : index
    %c0_31 = arith.constant 0 : index
    %26 = vector.load %arg2[%c1_29, %c0_30, %c0_31] : memref<3x3x128xf32, #tpu.memory_space<vmem>>, vector<1x1x128xf32>
    %27 = vector.broadcast %26 : vector<1x1x128xf32> to vector<8x8x128xf32>
    %28 = arith.mulf %25, %27 : vector<8x8x128xf32>
    %29 = arith.addf %23, %28 : vector<8x8x128xf32>
    %c1_32 = arith.constant 1 : index
    %c1_33 = arith.constant 1 : index
    %c0_34 = arith.constant 0 : index
    %30 = vector.load %arg5[%c1_32, %c1_33, %c0_34] : memref<10x10x128xbf16, #tpu.memory_space<vmem>>, vector<8x8x128xbf16>
    %31 = arith.extf %30 : vector<8x8x128xbf16> to vector<8x8x128xf32>
    %c1_35 = arith.constant 1 : index
    %c1_36 = arith.constant 1 : index
    %c0_37 = arith.constant 0 : index
    %32 = vector.load %arg2[%c1_35, %c1_36, %c0_37] : memref<3x3x128xf32, #tpu.memory_space<vmem>>, vector<1x1x128xf32>
    %33 = vector.broadcast %32 : vector<1x1x128xf32> to vector<8x8x128xf32>
    %34 = arith.mulf %31, %33 : vector<8x8x128xf32>
    %35 = arith.addf %29, %34 : vector<8x8x128xf32>
    %c1_38 = arith.constant 1 : index
    %c2_39 = arith.constant 2 : index
    %c0_40 = arith.constant 0 : index
    %36 = vector.load %arg5[%c1_38, %c2_39, %c0_40] : memref<10x10x128xbf16, #tpu.memory_space<vmem>>, vector<8x8x128xbf16>
    %37 = arith.extf %36 : vector<8x8x128xbf16> to vector<8x8x128xf32>
    %c1_41 = arith.constant 1 : index
    %c2_42 = arith.constant 2 : index
    %c0_43 = arith.constant 0 : index
    %38 = vector.load %arg2[%c1_41, %c2_42, %c0_43] : memref<3x3x128xf32, #tpu.memory_space<vmem>>, vector<1x1x128xf32>
    %39 = vector.broadcast %38 : vector<1x1x128xf32> to vector<8x8x128xf32>
    %40 = arith.mulf %37, %39 : vector<8x8x128xf32>
    %41 = arith.addf %35, %40 : vector<8x8x128xf32>
    %c2_44 = arith.constant 2 : index
    %c0_45 = arith.constant 0 : index
    %c0_46 = arith.constant 0 : index
    %42 = vector.load %arg5[%c2_44, %c0_45, %c0_46] : memref<10x10x128xbf16, #tpu.memory_space<vmem>>, vector<8x8x128xbf16>
    %43 = arith.extf %42 : vector<8x8x128xbf16> to vector<8x8x128xf32>
    %c2_47 = arith.constant 2 : index
    %c0_48 = arith.constant 0 : index
    %c0_49 = arith.constant 0 : index
    %44 = vector.load %arg2[%c2_47, %c0_48, %c0_49] : memref<3x3x128xf32, #tpu.memory_space<vmem>>, vector<1x1x128xf32>
    %45 = vector.broadcast %44 : vector<1x1x128xf32> to vector<8x8x128xf32>
    %46 = arith.mulf %43, %45 : vector<8x8x128xf32>
    %47 = arith.addf %41, %46 : vector<8x8x128xf32>
    %c2_50 = arith.constant 2 : index
    %c1_51 = arith.constant 1 : index
    %c0_52 = arith.constant 0 : index
    %48 = vector.load %arg5[%c2_50, %c1_51, %c0_52] : memref<10x10x128xbf16, #tpu.memory_space<vmem>>, vector<8x8x128xbf16>
    %49 = arith.extf %48 : vector<8x8x128xbf16> to vector<8x8x128xf32>
    %c2_53 = arith.constant 2 : index
    %c1_54 = arith.constant 1 : index
    %c0_55 = arith.constant 0 : index
    %50 = vector.load %arg2[%c2_53, %c1_54, %c0_55] : memref<3x3x128xf32, #tpu.memory_space<vmem>>, vector<1x1x128xf32>
    %51 = vector.broadcast %50 : vector<1x1x128xf32> to vector<8x8x128xf32>
    %52 = arith.mulf %49, %51 : vector<8x8x128xf32>
    %53 = arith.addf %47, %52 : vector<8x8x128xf32>
    %c2_56 = arith.constant 2 : index
    %c2_57 = arith.constant 2 : index
    %c0_58 = arith.constant 0 : index
    %54 = vector.load %arg5[%c2_56, %c2_57, %c0_58] : memref<10x10x128xbf16, #tpu.memory_space<vmem>>, vector<8x8x128xbf16>
    %55 = arith.extf %54 : vector<8x8x128xbf16> to vector<8x8x128xf32>
    %c2_59 = arith.constant 2 : index
    %c2_60 = arith.constant 2 : index
    %c0_61 = arith.constant 0 : index
    %56 = vector.load %arg2[%c2_59, %c2_60, %c0_61] : memref<3x3x128xf32, #tpu.memory_space<vmem>>, vector<1x1x128xf32>
    %57 = vector.broadcast %56 : vector<1x1x128xf32> to vector<8x8x128xf32>
    %58 = arith.mulf %55, %57 : vector<8x8x128xf32>
    %59 = arith.addf %53, %58 : vector<8x8x128xf32>
    %c0_62 = arith.constant 0 : index
    %c0_63 = arith.constant 0 : index
    %c0_64 = arith.constant 0 : index
    %60 = vector.load %arg3[%c0_62, %c0_63, %c0_64] : memref<1x1x128xf32, #tpu.memory_space<vmem>>, vector<1x1x128xf32>
    %61 = vector.broadcast %60 : vector<1x1x128xf32> to vector<8x8x128xf32>
    %62 = arith.addf %59, %61 : vector<8x8x128xf32>
    %cst_65 = arith.constant 5.000000e-01 : f32
    %63 = vector.broadcast %cst_65 : f32 to vector<8x8x128xf32>
    %64 = arith.mulf %63, %62 : vector<8x8x128xf32>
    %cst_66 = arith.constant 4.471500e-02 : f32
    %65 = vector.broadcast %cst_66 : f32 to vector<8x8x128xf32>
    %66 = arith.mulf %65, %62 : vector<8x8x128xf32>
    %67 = arith.mulf %66, %62 : vector<8x8x128xf32>
    %68 = arith.mulf %67, %62 : vector<8x8x128xf32>
    %69 = arith.addf %62, %68 : vector<8x8x128xf32>
    %cst_67 = arith.constant 0.797884583 : f32
    %70 = vector.broadcast %cst_67 : f32 to vector<8x8x128xf32>
    %71 = arith.mulf %70, %69 : vector<8x8x128xf32>
    %72 = math.tanh %71 : vector<8x8x128xf32>
    %cst_68 = arith.constant 1.000000e+00 : f32
    %73 = vector.broadcast %cst_68 : f32 to vector<8x8x128xf32>
    %74 = arith.addf %73, %72 : vector<8x8x128xf32>
    %75 = arith.mulf %64, %74 : vector<8x8x128xf32>
    %76 = arith.truncf %75 : vector<8x8x128xf32> to vector<8x8x128xbf16>
    %c0_69 = arith.constant 0 : index
    %c0_70 = arith.constant 0 : index
    %c0_71 = arith.constant 0 : index
    %c0_72 = arith.constant 0 : index
    %77 = vector.load %arg4[%c0_69, %c0_70, %c0_71, %c0_72] : memref<1x8x8x128xbf16, #tpu.memory_space<vmem>>, vector<1x8x8x128xbf16>
    %78 = vector.shape_cast %77 : vector<1x8x8x128xbf16> to vector<8x8x128xbf16>
    %79 = vector.shape_cast %76 : vector<8x8x128xbf16> to vector<1x8x8x128xbf16>
    tpu.vector_store %arg4[%c0_69, %c0_70, %c0_71, %c0_72], %79 {strides = array<i32>} : memref<1x8x8x128xbf16, #tpu.memory_space<vmem>>, vector<1x8x8x128xbf16>,
    return
  }
  func.func @transform_0(%arg0: i32) -> (i32, i32, i32, i32) {
    %c0_i32 = arith.constant 0 : i32
    %c0_i32_0 = arith.constant 0 : i32
    %c0_i32_1 = arith.constant 0 : i32
    %c0_i32_2 = arith.constant 0 : i32
    return %arg0, %c0_i32, %c0_i32_0, %c0_i32_1 : i32, i32, i32, i32
  }
  func.func @transform_1(%arg0: i32) -> (i32, i32, i32) {
    %c0_i32 = arith.constant 0 : i32
    %c0_i32_0 = arith.constant 0 : i32
    %c0_i32_1 = arith.constant 0 : i32
    %c0_i32_2 = arith.constant 0 : i32
    return %c0_i32, %c0_i32_0, %c0_i32_1 : i32, i32, i32
  }
  func.func @transform_2(%arg0: i32) -> (i32, i32, i32) {
    %c0_i32 = arith.constant 0 : i32
    %c0_i32_0 = arith.constant 0 : i32
    %c0_i32_1 = arith.constant 0 : i32
    %c0_i32_2 = arith.constant 0 : i32
    return %c0_i32, %c0_i32_0, %c0_i32_1 : i32, i32, i32
  }
  func.func @transform_3(%arg0: i32) -> (i32, i32, i32, i32) {
    %c0_i32 = arith.constant 0 : i32
    %c0_i32_0 = arith.constant 0 : i32
    %c0_i32_1 = arith.constant 0 : i32
    %c0_i32_2 = arith.constant 0 : i32
    return %arg0, %c0_i32, %c0_i32_0, %c0_i32_1 : i32, i32, i32, i32
  }
}

module attributes {stable_mosaic.version = 11 : i64} {
  func.func @kernel(%arg0: i32, %arg1: memref<128x128xbf16, #tpu.memory_space<vmem>>, %arg2: memref<128x128xbf16, #tpu.memory_space<vmem>>, %arg3: memref<2x128xf32, #tpu.memory_space<vmem>>, %arg4: memref<128x128xf32, #tpu.memory_space<vmem>>, %arg5: memref<128x128xf32, #tpu.memory_space<vmem>>) attributes {dimension_semantics = [#tpu.dimension_semantics<parallel>], iteration_bounds = array<i64: 1>, scalar_prefetch = 0 : i64, scratch_operands = 0 : i64, tpu.core_type = #tpu.core_type<tc>, window_params = [{transform_indices = @transform_0, window_bounds = array<i64: 128, 128>}, {pipeline_mode = #tpu.pipeline_mode<synchronous>, transform_indices = @transform_1, window_bounds = array<i64: 128, 128>}, {pipeline_mode = #tpu.pipeline_mode<synchronous>, transform_indices = @transform_2, window_bounds = array<i64: 2, 128>}, {transform_indices = @transform_3, window_bounds = array<i64: 128, 128>}, {transform_indices = @transform_4, window_bounds = array<i64: 128, 128>}]} {
    %c0 = arith.constant 0 : index
    %c0_0 = arith.constant 0 : index
    %0 = vector.load %arg1[%c0, %c0_0] : memref<128x128xbf16, #tpu.memory_space<vmem>>, vector<128x128xbf16>
    %c0_1 = arith.constant 0 : index
    %c0_2 = arith.constant 0 : index
    %1 = vector.load %arg2[%c0_1, %c0_2] : memref<128x128xbf16, #tpu.memory_space<vmem>>, vector<128x128xbf16>
    %cst = arith.constant dense<0.000000e+00> : vector<128x128xf32>
    %2 = tpu.matmul %0, %1, %cst {dimension_numbers = #tpu.dot_dimension_numbers<[1], [0], [0], [1], [0, 0, 1, 1], [], []>} : vector<128x128xbf16>, vector<128x128xbf16>, vector<128x128xf32> -> vector<128x128xf32>
    %c0_3 = arith.constant 0 : index
    %c0_4 = arith.constant 0 : index
    %3 = vector.load %arg3[%c0_3, %c0_4] : memref<2x128xf32, #tpu.memory_space<vmem>>, vector<1x128xf32>
    %4 = vector.broadcast %3 : vector<1x128xf32> to vector<128x128xf32>
    %5 = arith.addf %2, %4 : vector<128x128xf32>
    %c0_5 = arith.constant 0 : index
    %c0_6 = arith.constant 0 : index
    %6 = vector.load %arg4[%c0_5, %c0_6] : memref<128x128xf32, #tpu.memory_space<vmem>>, vector<128x128xf32>
    %c1 = arith.constant 1 : index
    %c0_7 = arith.constant 0 : index
    %7 = vector.load %arg3[%c1, %c0_7] : memref<2x128xf32, #tpu.memory_space<vmem>>, vector<1x128xf32>
    %8 = vector.broadcast %7 : vector<1x128xf32> to vector<128x128xf32>
    %9 = arith.mulf %8, %5 : vector<128x128xf32>
    %10 = arith.addf %6, %9 : vector<128x128xf32>
    %c0_8 = arith.constant 0 : index
    %c0_9 = arith.constant 0 : index
    %11 = vector.load %arg5[%c0_8, %c0_9] : memref<128x128xf32, #tpu.memory_space<vmem>>, vector<128x128xf32>
    tpu.vector_store %arg5[%c0_8, %c0_9], %10 {strides = array<i32>} : memref<128x128xf32, #tpu.memory_space<vmem>>, vector<128x128xf32>,
    return
  }
  func.func @transform_0(%arg0: i32) -> (i32, i32) {
    %c0_i32 = arith.constant 0 : i32
    %c0_i32_0 = arith.constant 0 : i32
    return %arg0, %c0_i32 : i32, i32
  }
  func.func @transform_1(%arg0: i32) -> (i32, i32) {
    %c0_i32 = arith.constant 0 : i32
    %c0_i32_0 = arith.constant 0 : i32
    %c0_i32_1 = arith.constant 0 : i32
    return %c0_i32, %c0_i32_0 : i32, i32
  }
  func.func @transform_2(%arg0: i32) -> (i32, i32) {
    %c0_i32 = arith.constant 0 : i32
    %c0_i32_0 = arith.constant 0 : i32
    %c0_i32_1 = arith.constant 0 : i32
    return %c0_i32, %c0_i32_0 : i32, i32
  }
  func.func @transform_3(%arg0: i32) -> (i32, i32) {
    %c0_i32 = arith.constant 0 : i32
    %c0_i32_0 = arith.constant 0 : i32
    return %arg0, %c0_i32 : i32, i32
  }
  func.func @transform_4(%arg0: i32) -> (i32, i32) {
    %c0_i32 = arith.constant 0 : i32
    %c0_i32_0 = arith.constant 0 : i32
    return %arg0, %c0_i32 : i32, i32
  }
}

module attributes {stable_mosaic.version = 11 : i64} {
  func.func @kernel(%arg0: i32, %arg1: memref<128x128xf32, #tpu.memory_space<vmem>>, %arg2: memref<2x128xf32, #tpu.memory_space<vmem>>, %arg3: memref<128x128xbf16, #tpu.memory_space<vmem>>, %arg4: memref<1x128xf32, #tpu.memory_space<vmem>>, %arg5: memref<128x128xbf16, #tpu.memory_space<vmem>>) attributes {dimension_semantics = [#tpu.dimension_semantics<parallel>], iteration_bounds = array<i64: 1>, scalar_prefetch = 0 : i64, scratch_operands = 0 : i64, tpu.core_type = #tpu.core_type<tc>, window_params = [{transform_indices = @transform_0, window_bounds = array<i64: 128, 128>}, {pipeline_mode = #tpu.pipeline_mode<synchronous>, transform_indices = @transform_1, window_bounds = array<i64: 2, 128>}, {pipeline_mode = #tpu.pipeline_mode<synchronous>, transform_indices = @transform_2, window_bounds = array<i64: 128, 128>}, {pipeline_mode = #tpu.pipeline_mode<synchronous>, transform_indices = @transform_3, window_bounds = array<i64: 1, 128>}, {transform_indices = @transform_4, window_bounds = array<i64: 128, 128>}]} {
    %c0 = arith.constant 0 : index
    %c0_0 = arith.constant 0 : index
    %0 = vector.load %arg1[%c0, %c0_0] : memref<128x128xf32, #tpu.memory_space<vmem>>, vector<128x128xf32>
    %1 = tpu.iota {dimensions = array<i32: 1>} : vector<128x128xi32>
    %c32_i32 = arith.constant 32 : i32
    %2 = vector.broadcast %c32_i32 : i32 to vector<128x128xi32>
    %3 = arith.cmpi slt, %1, %2 : vector<128x128xi32>
    %cst = arith.constant dense<0.000000e+00> : vector<128xf32>
    %4 = vector.multi_reduction <add>, %0, %cst [1] : vector<128x128xf32> to vector<128xf32>
    %5 = vector.shape_cast %4 : vector<128xf32> to vector<128x1xf32>
    %cst_1 = arith.constant 3.125000e-02 : f32
    %6 = vector.broadcast %cst_1 : f32 to vector<128x1xf32>
    %7 = arith.mulf %5, %6 : vector<128x1xf32>
    %8 = vector.broadcast %7 : vector<128x1xf32> to vector<128x128xf32>
    %9 = arith.subf %0, %8 : vector<128x128xf32>
    %cst_2 = arith.constant 0.000000e+00 : f32
    %10 = vector.broadcast %cst_2 : f32 to vector<128x128xf32>
    %11 = arith.select %3, %9, %10 : vector<128x128xi1>, vector<128x128xf32>
    %12 = arith.mulf %11, %11 : vector<128x128xf32>
    %cst_3 = arith.constant dense<0.000000e+00> : vector<128xf32>
    %13 = vector.multi_reduction <add>, %12, %cst_3 [1] : vector<128x128xf32> to vector<128xf32>
    %14 = vector.shape_cast %13 : vector<128xf32> to vector<128x1xf32>
    %cst_4 = arith.constant 3.125000e-02 : f32
    %15 = vector.broadcast %cst_4 : f32 to vector<128x1xf32>
    %16 = arith.mulf %14, %15 : vector<128x1xf32>
    %cst_5 = arith.constant 9.99999974E-6 : f32
    %17 = vector.broadcast %cst_5 : f32 to vector<128x1xf32>
    %18 = arith.addf %16, %17 : vector<128x1xf32>
    %19 = math.rsqrt %18 : vector<128x1xf32>
    %20 = vector.broadcast %19 : vector<128x1xf32> to vector<128x128xf32>
    %21 = arith.mulf %11, %20 : vector<128x128xf32>
    %c0_6 = arith.constant 0 : index
    %c0_7 = arith.constant 0 : index
    %22 = vector.load %arg2[%c0_6, %c0_7] : memref<2x128xf32, #tpu.memory_space<vmem>>, vector<1x128xf32>
    %23 = vector.broadcast %22 : vector<1x128xf32> to vector<128x128xf32>
    %24 = arith.mulf %21, %23 : vector<128x128xf32>
    %c1 = arith.constant 1 : index
    %c0_8 = arith.constant 0 : index
    %25 = vector.load %arg2[%c1, %c0_8] : memref<2x128xf32, #tpu.memory_space<vmem>>, vector<1x128xf32>
    %26 = vector.broadcast %25 : vector<1x128xf32> to vector<128x128xf32>
    %27 = arith.addf %24, %26 : vector<128x128xf32>
    %28 = arith.truncf %27 : vector<128x128xf32> to vector<128x128xbf16>
    %c0_9 = arith.constant 0 : index
    %c0_10 = arith.constant 0 : index
    %29 = vector.load %arg3[%c0_9, %c0_10] : memref<128x128xbf16, #tpu.memory_space<vmem>>, vector<128x128xbf16>
    %cst_11 = arith.constant dense<0.000000e+00> : vector<128x128xf32>
    %30 = tpu.matmul %28, %29, %cst_11 {dimension_numbers = #tpu.dot_dimension_numbers<[1], [0], [0], [1], [0, 0, 1, 1], [], []>} : vector<128x128xbf16>, vector<128x128xbf16>, vector<128x128xf32> -> vector<128x128xf32>
    %c0_12 = arith.constant 0 : index
    %c0_13 = arith.constant 0 : index
    %31 = vector.load %arg4[%c0_12, %c0_13] : memref<1x128xf32, #tpu.memory_space<vmem>>, vector<1x128xf32>
    %32 = vector.broadcast %31 : vector<1x128xf32> to vector<128x128xf32>
    %33 = arith.addf %30, %32 : vector<128x128xf32>
    %34 = arith.truncf %33 : vector<128x128xf32> to vector<128x128xbf16>
    %c0_14 = arith.constant 0 : index
    %c0_15 = arith.constant 0 : index
    %35 = vector.load %arg5[%c0_14, %c0_15] : memref<128x128xbf16, #tpu.memory_space<vmem>>, vector<128x128xbf16>
    tpu.vector_store %arg5[%c0_14, %c0_15], %34 {strides = array<i32>} : memref<128x128xbf16, #tpu.memory_space<vmem>>, vector<128x128xbf16>,
    return
  }
  func.func @transform_0(%arg0: i32) -> (i32, i32) {
    %c0_i32 = arith.constant 0 : i32
    %c0_i32_0 = arith.constant 0 : i32
    return %arg0, %c0_i32 : i32, i32
  }
  func.func @transform_1(%arg0: i32) -> (i32, i32) {
    %c0_i32 = arith.constant 0 : i32
    %c0_i32_0 = arith.constant 0 : i32
    %c0_i32_1 = arith.constant 0 : i32
    return %c0_i32, %c0_i32_0 : i32, i32
  }
  func.func @transform_2(%arg0: i32) -> (i32, i32) {
    %c0_i32 = arith.constant 0 : i32
    %c0_i32_0 = arith.constant 0 : i32
    %c0_i32_1 = arith.constant 0 : i32
    return %c0_i32, %c0_i32_0 : i32, i32
  }
  func.func @transform_3(%arg0: i32) -> (i32, i32) {
    %c0_i32 = arith.constant 0 : i32
    %c0_i32_0 = arith.constant 0 : i32
    %c0_i32_1 = arith.constant 0 : i32
    return %c0_i32, %c0_i32_0 : i32, i32
  }
  func.func @transform_4(%arg0: i32) -> (i32, i32) {
    %c0_i32 = arith.constant 0 : i32
    %c0_i32_0 = arith.constant 0 : i32
    return %arg0, %c0_i32 : i32, i32
  }
}

</mosaic_0001>

<llo_original>
// kernel: pvt_v2_block.7
$region0: #{pvt_v2_block.7}
  #allocation0 [shape = 'u32[]', space=smem, size = 0x4, offset = 0x4, fixed_abs, tag = 'smem constant byte address 0x4 - core index']
  #allocation1 [shape = 'u32[144,128]{1,0:T(1,128)}', space=vmem, size = 0x12000, scoped, tag = 'internal scratch']
  %s0 = inlined_call_operand.vmem [shape: f32[128,128], index: 0, kind: input, shape index: {}]
  %s1 = inlined_call_operand.vmem [shape: f32[2,128], index: 1, kind: input, shape index: {}]
  %s2 = inlined_call_operand.vmem [shape: bf16[128,128], index: 2, kind: input, shape index: {}]
  %s3 = inlined_call_operand.vmem [shape: f32[1,128], index: 3, kind: input, shape index: {}]
  %s4 = inlined_call_operand.vmem [shape: bf16[128,128], index: 4, kind: output, shape index: {0}]
  %s5 = inlined_call_operand.vmem [shape: bf16[128,128], index: 5, kind: output, shape index: {1}]
  %6 = xla_tuple %s4, %s5
  %s7 = sld [smem:[#allocation0]]
  $region34: #{pvt_v2_block.7} parent=0
    _
  %s9 = ssub.s32 1, %s7
  %s10 = scalar_select 0, %s9, %s7
  // Predicated region
  $region2: #{pvt_v2_block.7} parent=0 // pred_check
    _
  $region3: #{pvt_v2_block.7} parent=0 // pred_check_branch
    %12 = sbr.rel (0) target = $region5
  $region4: #{pvt_v2_block.7} parent=0 // pred_region
    _
  $region5: #{pvt_v2_block.7} parent=0 // pred_fallthru
    _
  // Predicated region
  $region6: #{pvt_v2_block.7} parent=0 // pred_check
    _
  $region7: #{pvt_v2_block.7} parent=0 // pred_check_branch
    %14 = sbr.rel (0) target = $region9
  $region8: #{pvt_v2_block.7} parent=0 // pred_region
    _
  $region9: #{pvt_v2_block.7} parent=0 // pred_fallthru
    _
  // Predicated region
  $region10: #{pvt_v2_block.7} parent=0 // pred_check
    _
  $region11: #{pvt_v2_block.7} parent=0 // pred_check_branch
    %16 = sbr.rel (0) target = $region13
  $region12: #{pvt_v2_block.7} parent=0 // pred_region
    _
  $region13: #{pvt_v2_block.7} parent=0 // pred_fallthru
    _
  // Predicated region
  $region14: #{pvt_v2_block.7} parent=0 // pred_check
    _
  $region15: #{pvt_v2_block.7} parent=0 // pred_check_branch
    %18 = sbr.rel (0) target = $region17
  $region16: #{pvt_v2_block.7} parent=0 // pred_region
    _
  $region17: #{pvt_v2_block.7} parent=0 // pred_fallthru
    _
  %v20 = vld [vmem:[%s0] sm:$0xff]
  %v21 = vld [vmem:[%s0 + $0x8] sm:$0xff]
  %v22 = vld [vmem:[%s0 + $0x10] sm:$0xff]
  %v23 = vld [vmem:[%s0 + $0x18] sm:$0xff]
  %v24 = vld [vmem:[%s0 + $0x20] sm:$0xff]
  %v25 = vld [vmem:[%s0 + $0x28] sm:$0xff]
  %v26 = vld [vmem:[%s0 + $0x30] sm:$0xff]
  %v27 = vld [vmem:[%s0 + $0x38] sm:$0xff]
  %v28 = vld [vmem:[%s0 + $0x40] sm:$0xff]
  %v29 = vld [vmem:[%s0 + $0x48] sm:$0xff]
  %v30 = vld [vmem:[%s0 + $0x50] sm:$0xff]
  %v31 = vld [vmem:[%s0 + $0x58] sm:$0xff]
  %v32 = vld [vmem:[%s0 + $0x60] sm:$0xff]
  %v33 = vld [vmem:[%s0 + $0x68] sm:$0xff]
  %v34 = vld [vmem:[%s0 + $0x70] sm:$0xff]
  %v35 = vld [vmem:[%s0 + $0x78] sm:$0xff]
  %v36 = vlaneseq
  %v37 = vand.u32 %v36, 127
  %vm38 = vcmp.lt.s32.totalorder %v37, 32
  %39 = vadd.xlane.f32.xlu0 %v20
  %v40 = vpop.xlane.xlu0 %39
  %41 = vadd.xlane.f32.xlu0 %v21
  %v42 = vpop.xlane.xlu0 %41
  %43 = vadd.xlane.f32.xlu0 %v22
  %v44 = vpop.xlane.xlu0 %43
  %45 = vadd.xlane.f32.xlu0 %v23
  %v46 = vpop.xlane.xlu0 %45
  %47 = vadd.xlane.f32.xlu0 %v24
  %v48 = vpop.xlane.xlu0 %47
  %49 = vadd.xlane.f32.xlu0 %v25
  %v50 = vpop.xlane.xlu0 %49
  %51 = vadd.xlane.f32.xlu0 %v26
  %v52 = vpop.xlane.xlu0 %51
  %53 = vadd.xlane.f32.xlu0 %v27
  %v54 = vpop.xlane.xlu0 %53
  %55 = vadd.xlane.f32.xlu0 %v28
  %v56 = vpop.xlane.xlu0 %55
  %57 = vadd.xlane.f32.xlu0 %v29
  %v58 = vpop.xlane.xlu0 %57
  %59 = vadd.xlane.f32.xlu0 %v30
  %v60 = vpop.xlane.xlu0 %59
  %61 = vadd.xlane.f32.xlu0 %v31
  %v62 = vpop.xlane.xlu0 %61
  %63 = vadd.xlane.f32.xlu0 %v32
  %v64 = vpop.xlane.xlu0 %63
  %65 = vadd.xlane.f32.xlu0 %v33
  %v66 = vpop.xlane.xlu0 %65
  %67 = vadd.xlane.f32.xlu0 %v34
  %v68 = vpop.xlane.xlu0 %67
  %69 = vadd.xlane.f32.xlu0 %v35
  %v70 = vpop.xlane.xlu0 %69
  %v71 = vmul.f32 %v40, 0.03125
  %v72 = vmul.f32 %v42, 0.03125
  %v73 = vmul.f32 %v44, 0.03125
  %v74 = vmul.f32 %v46, 0.03125
  %v75 = vmul.f32 %v48, 0.03125
  %v76 = vmul.f32 %v50, 0.03125
  %v77 = vmul.f32 %v52, 0.03125
  %v78 = vmul.f32 %v54, 0.03125
  %v79 = vmul.f32 %v56, 0.03125
  %v80 = vmul.f32 %v58, 0.03125
  %v81 = vmul.f32 %v60, 0.03125
  %v82 = vmul.f32 %v62, 0.03125
  %v83 = vmul.f32 %v64, 0.03125
  %v84 = vmul.f32 %v66, 0.03125
  %v85 = vmul.f32 %v68, 0.03125
  %v86 = vmul.f32 %v70, 0.03125
  %v87 = vsub.f32 %v20, %v71
  %v88 = vsub.f32 %v21, %v72
  %v89 = vsub.f32 %v22, %v73
  %v90 = vsub.f32 %v23, %v74
  %v91 = vsub.f32 %v24, %v75
  %v92 = vsub.f32 %v25, %v76
  %v93 = vsub.f32 %v26, %v77
  %v94 = vsub.f32 %v27, %v78
  %v95 = vsub.f32 %v28, %v79
  %v96 = vsub.f32 %v29, %v80
  %v97 = vsub.f32 %v30, %v81
  %v98 = vsub.f32 %v31, %v82
  %v99 = vsub.f32 %v32, %v83
  %v100 = vsub.f32 %v33, %v84
  %v101 = vsub.f32 %v34, %v85
  %v102 = vsub.f32 %v35, %v86
  %v103 = vsel %vm38, %v87, 0.0
  %v104 = vsel %vm38, %v88, 0.0
  %v105 = vsel %vm38, %v89, 0.0
  %v106 = vsel %vm38, %v90, 0.0
  %v107 = vsel %vm38, %v91, 0.0
  %v108 = vsel %vm38, %v92, 0.0
  %v109 = vsel %vm38, %v93, 0.0
  %v110 = vsel %vm38, %v94, 0.0
  %v111 = vsel %vm38, %v95, 0.0
  %v112 = vsel %vm38, %v96, 0.0
  %v113 = vsel %vm38, %v97, 0.0
  %v114 = vsel %vm38, %v98, 0.0
  %v115 = vsel %vm38, %v99, 0.0
  %v116 = vsel %vm38, %v100, 0.0
  %v117 = vsel %vm38, %v101, 0.0
  %v118 = vsel %vm38, %v102, 0.0
  %v119 = vmul.f32 %v103, %v103
  %v120 = vmul.f32 %v104, %v104
  %v121 = vmul.f32 %v105, %v105
  %v122 = vmul.f32 %v106, %v106
  %v123 = vmul.f32 %v107, %v107
  %v124 = vmul.f32 %v108, %v108
  %v125 = vmul.f32 %v109, %v109
  %v126 = vmul.f32 %v110, %v110
  %v127 = vmul.f32 %v111, %v111
  %v128 = vmul.f32 %v112, %v112
  %v129 = vmul.f32 %v113, %v113
  %v130 = vmul.f32 %v114, %v114
  %v131 = vmul.f32 %v115, %v115
  %v132 = vmul.f32 %v116, %v116
  %v133 = vmul.f32 %v117, %v117
  %v134 = vmul.f32 %v118, %v118
  %135 = vadd.xlane.f32.xlu0 %v119
  %v136 = vpop.xlane.xlu0 %135
  %137 = vadd.xlane.f32.xlu0 %v120
  %v138 = vpop.xlane.xlu0 %137
  %139 = vadd.xlane.f32.xlu0 %v121
  %v140 = vpop.xlane.xlu0 %139
  %141 = vadd.xlane.f32.xlu0 %v122
  %v142 = vpop.xlane.xlu0 %141
  %143 = vadd.xlane.f32.xlu0 %v123
  %v144 = vpop.xlane.xlu0 %143
  %145 = vadd.xlane.f32.xlu0 %v124
  %v146 = vpop.xlane.xlu0 %145
  %147 = vadd.xlane.f32.xlu0 %v125
  %v148 = vpop.xlane.xlu0 %147
  %149 = vadd.xlane.f32.xlu0 %v126
  %v150 = vpop.xlane.xlu0 %149
  %151 = vadd.xlane.f32.xlu0 %v127
  %v152 = vpop.xlane.xlu0 %151
  %153 = vadd.xlane.f32.xlu0 %v128
  %v154 = vpop.xlane.xlu0 %153
  %155 = vadd.xlane.f32.xlu0 %v129
  %v156 = vpop.xlane.xlu0 %155
  %157 = vadd.xlane.f32.xlu0 %v130
  %v158 = vpop.xlane.xlu0 %157
  %159 = vadd.xlane.f32.xlu0 %v131
  %v160 = vpop.xlane.xlu0 %159
  %161 = vadd.xlane.f32.xlu0 %v132
  %v162 = vpop.xlane.xlu0 %161
  %163 = vadd.xlane.f32.xlu0 %v133
  %v164 = vpop.xlane.xlu0 %163
  %165 = vadd.xlane.f32.xlu0 %v134
  %v166 = vpop.xlane.xlu0 %165
  %v167 = vmul.f32 %v136, 0.03125
  %v168 = vmul.f32 %v138, 0.03125
  %v169 = vmul.f32 %v140, 0.03125
  %v170 = vmul.f32 %v142, 0.03125
  %v171 = vmul.f32 %v144, 0.03125
  %v172 = vmul.f32 %v146, 0.03125
  %v173 = vmul.f32 %v148, 0.03125
  %v174 = vmul.f32 %v150, 0.03125
  %v175 = vmul.f32 %v152, 0.03125
  %v176 = vmul.f32 %v154, 0.03125
  %v177 = vmul.f32 %v156, 0.03125
  %v178 = vmul.f32 %v158, 0.03125
  %v179 = vmul.f32 %v160, 0.03125
  %v180 = vmul.f32 %v162, 0.03125
  %v181 = vmul.f32 %v164, 0.03125
  %v182 = vmul.f32 %v166, 0.03125
  %v183 = vadd.f32 %v167, 1e-05
  %v184 = vadd.f32 %v168, 1e-05
  %v185 = vadd.f32 %v169, 1e-05
  %v186 = vadd.f32 %v170, 1e-05
  %v187 = vadd.f32 %v171, 1e-05
  %v188 = vadd.f32 %v172, 1e-05
  %v189 = vadd.f32 %v173, 1e-05
  %v190 = vadd.f32 %v174, 1e-05
  %v191 = vadd.f32 %v175, 1e-05
  %v192 = vadd.f32 %v176, 1e-05
  %v193 = vadd.f32 %v177, 1e-05
  %v194 = vadd.f32 %v178, 1e-05
  %v195 = vadd.f32 %v179, 1e-05
  %v196 = vadd.f32 %v180, 1e-05
  %v197 = vadd.f32 %v181, 1e-05
  %v198 = vadd.f32 %v182, 1e-05
  %v199 = vrsqrt.pop %v183
  %v200 = vrsqrt.pop %v184
  %v201 = vrsqrt.pop %v185
  %v202 = vrsqrt.pop %v186
  %v203 = vrsqrt.pop %v187
  %v204 = vrsqrt.pop %v188
  %v205 = vrsqrt.pop %v189
  %v206 = vrsqrt.pop %v190
  %v207 = vrsqrt.pop %v191
  %v208 = vrsqrt.pop %v192
  %v209 = vrsqrt.pop %v193
  %v210 = vrsqrt.pop %v194
  %v211 = vrsqrt.pop %v195
  %v212 = vrsqrt.pop %v196
  %v213 = vrsqrt.pop %v197
  %v214 = vrsqrt.pop %v198
  %v215 = vmul.f32 %v103, %v199
  %v216 = vmul.f32 %v104, %v200
  %v217 = vmul.f32 %v105, %v201
  %v218 = vmul.f32 %v106, %v202
  %v219 = vmul.f32 %v107, %v203
  %v220 = vmul.f32 %v108, %v204
  %v221 = vmul.f32 %v109, %v205
  %v222 = vmul.f32 %v110, %v206
  %v223 = vmul.f32 %v111, %v207
  %v224 = vmul.f32 %v112, %v208
  %v225 = vmul.f32 %v113, %v209
  %v226 = vmul.f32 %v114, %v210
  %v227 = vmul.f32 %v115, %v211
  %v228 = vmul.f32 %v116, %v212
  %v229 = vmul.f32 %v117, %v213
  %v230 = vmul.f32 %v118, %v214
  %v231 = vld [vmem:[%s1] sm:$0x1]
  %v232 = vlaneseq
  %v233 = vshrl.u32 %v232, 7
  %v234 = vsub.s32 0, %v233
  %v235 = vrot.slane %v231, %v234
  %v236 = vmul.f32 %v215, %v235
  %v237 = vmul.f32 %v216, %v235
  %v238 = vmul.f32 %v217, %v235
  %v239 = vmul.f32 %v218, %v235
  %v240 = vmul.f32 %v219, %v235
  %v241 = vmul.f32 %v220, %v235
  %v242 = vmul.f32 %v221, %v235
  %v243 = vmul.f32 %v222, %v235
  %v244 = vmul.f32 %v223, %v235
  %v245 = vmul.f32 %v224, %v235
  %v246 = vmul.f32 %v225, %v235
  %v247 = vmul.f32 %v226, %v235
  %v248 = vmul.f32 %v227, %v235
  %v249 = vmul.f32 %v228, %v235
  %v250 = vmul.f32 %v229, %v235
  %v251 = vmul.f32 %v230, %v235
  %v252 = vld [vmem:[%s1 + $0x1] sm:$0x1]
  %v253 = vlaneseq
  %v254 = vshrl.u32 %v253, 7
  %v255 = vsub.s32 0, %v254
  %v256 = vrot.slane %v252, %v255
  %v257 = vadd.f32 %v236, %v256
  %v258 = vadd.f32 %v237, %v256
  %v259 = vadd.f32 %v238, %v256
  %v260 = vadd.f32 %v239, %v256
  %v261 = vadd.f32 %v240, %v256
  %v262 = vadd.f32 %v241, %v256
  %v263 = vadd.f32 %v242, %v256
  %v264 = vadd.f32 %v243, %v256
  %v265 = vadd.f32 %v244, %v256
  %v266 = vadd.f32 %v245, %v256
  %v267 = vadd.f32 %v246, %v256
  %v268 = vadd.f32 %v247, %v256
  %v269 = vadd.f32 %v248, %v256
  %v270 = vadd.f32 %v249, %v256
  %v271 = vadd.f32 %v250, %v256
  %v272 = vadd.f32 %v251, %v256
  %v273 = vpack.c.bf16 %v258, %v257
  %v274 = vpack.c.bf16 %v260, %v259
  %v275 = vpack.c.bf16 %v262, %v261
  %v276 = vpack.c.bf16 %v264, %v263
  %v277 = vpack.c.bf16 %v266, %v265
  %v278 = vpack.c.bf16 %v268, %v267
  %v279 = vpack.c.bf16 %v270, %v269
  %v280 = vpack.c.bf16 %v272, %v271
  %v281 = vld [vmem:[%s2] sm:$0xf]
  %v282 = vld [vmem:[%s2 + $0x4] sm:$0xf]
  %v283 = vld [vmem:[%s2 + $0x8] sm:$0xf]
  %v284 = vld [vmem:[%s2 + $0xc] sm:$0xf]
  %v285 = vld [vmem:[%s2 + $0x10] sm:$0xf]
  %v286 = vld [vmem:[%s2 + $0x14] sm:$0xf]
  %v287 = vld [vmem:[%s2 + $0x18] sm:$0xf]
  %v288 = vld [vmem:[%s2 + $0x1c] sm:$0xf]
  %v289 = vld [vmem:[%s2 + $0x20] sm:$0xf]
  %v290 = vld [vmem:[%s2 + $0x24] sm:$0xf]
  %v291 = vld [vmem:[%s2 + $0x28] sm:$0xf]
  %v292 = vld [vmem:[%s2 + $0x2c] sm:$0xf]
  %v293 = vld [vmem:[%s2 + $0x30] sm:$0xf]
  %v294 = vld [vmem:[%s2 + $0x34] sm:$0xf]
  %v295 = vld [vmem:[%s2 + $0x38] sm:$0xf]
  %v296 = vld [vmem:[%s2 + $0x3c] sm:$0xf]
  %v297 = vld [vmem:[%s3] sm:$0x1]
  %v299 = vlaneseq
  %v300 = vshrl.u32 %v299, 7
  %v301 = vsub.s32 0, %v300
  %v302 = vrot.slane %v297, %v301
  %v320 = vunpack.c.l.b16 %v281
  %v321 = vunpack.c.l.b16 %v282
  %v322 = vunpack.c.l.b16 %v283
  %v323 = vunpack.c.l.b16 %v284
  %v324 = vunpack.c.l.b16 %v285
  %v325 = vunpack.c.l.b16 %v286
  %v326 = vunpack.c.l.b16 %v287
  %v327 = vunpack.c.l.b16 %v288
  %v328 = vunpack.c.l.b16 %v289
  %v329 = vunpack.c.l.b16 %v290
  %v330 = vunpack.c.l.b16 %v291
  %v331 = vunpack.c.l.b16 %v292
  %v332 = vunpack.c.l.b16 %v293
  %v333 = vunpack.c.l.b16 %v294
  %v334 = vunpack.c.l.b16 %v295
  %v335 = vunpack.c.l.b16 %v296
  %v336 = vpack.c.b16 %v321, %v320
  %v337 = vpack.c.b16 %v323, %v322
  %v338 = vpack.c.b16 %v325, %v324
  %v339 = vpack.c.b16 %v327, %v326
  %v340 = vpack.c.b16 %v329, %v328
  %v341 = vpack.c.b16 %v331, %v330
  %v342 = vpack.c.b16 %v333, %v332
  %v343 = vpack.c.b16 %v335, %v334
  %352 = vmatprep.subr.bf16.mxu0 0
  %353 = vmatpush1.bf16.msra.mxu0 %v336
  %354 = vmatprep.subr.bf16.mxu0 0
  %355 = vmatpush1.bf16.msra.mxu0 %v337
  %356 = vmatprep.subr.bf16.mxu0 0
  %357 = vmatpush1.bf16.msra.mxu0 %v338
  %358 = vmatprep.subr.bf16.mxu0 0
  %359 = vmatpush1.bf16.msra.mxu0 %v339
  %360 = vmatprep.subr.bf16.mxu0 0
  %361 = vmatpush1.bf16.msra.mxu0 %v340
  %362 = vmatprep.subr.bf16.mxu0 0
  %363 = vmatpush1.bf16.msra.mxu0 %v341
  %364 = vmatprep.subr.bf16.mxu0 0
  %365 = vmatpush1.bf16.msra.mxu0 %v342
  %366 = vmatprep.subr.bf16.mxu0 0
  %367 = vmatpush1.bf16.msra.mxu0 %v343
  %368 = vmatprep.subr.bf16.mxu0 0
  %369 = vmatpush1.bf16.msra.mxu0 0
  %370 = vmatprep.subr.bf16.mxu0 0
  %371 = vmatpush1.bf16.msra.mxu0 0
  %372 = vmatprep.subr.bf16.mxu0 0
  %373 = vmatpush1.bf16.msra.mxu0 0
  %374 = vmatprep.subr.bf16.mxu0 0
  %375 = vmatpush1.bf16.msra.mxu0 0
  %376 = vmatprep.subr.bf16.mxu0 0
  %377 = vmatpush1.bf16.msra.mxu0 0
  %378 = vmatprep.subr.bf16.mxu0 0
  %379 = vmatpush1.bf16.msra.mxu0 0
  %380 = vmatprep.subr.bf16.mxu0 0
  %381 = vmatpush1.bf16.msra.mxu0 0
  %382 = vmatprep.subr.bf16.mxu0 0
  %383 = vmatpush1.bf16.msra.mxu0 0
  %384 = vmatprep.mubr.bf16.mxu0 0
  %385 = vmatmul.mubr.bf16.gmra.mrb[0].mxu0 %v273
  %v386 = vpop.f32.mrb[0].mxu0
  %v387 = vadd.f32 %v302, %v386
  %v388 = vpop.f32.mrb[0].mxu0
  %v389 = vpop.f32.mrb[0].mxu0
  %v390 = vadd.f32 %v302, %v389
  %v391 = vpop.f32.mrb[0].mxu0
  %392 = vmatprep.mubr.bf16.mxu0 0
  %393 = vmatmul.mubr.bf16.gmra.mrb[0].mxu0 %v274
  %v394 = vpop.f32.mrb[0].mxu0
  %v395 = vadd.f32 %v302, %v394
  %v396 = vpop.f32.mrb[0].mxu0
  %v397 = vpop.f32.mrb[0].mxu0
  %v398 = vadd.f32 %v302, %v397
  %v399 = vpop.f32.mrb[0].mxu0
  %400 = vmatprep.mubr.bf16.mxu0 0
  %401 = vmatmul.mubr.bf16.gmra.mrb[0].mxu0 %v275
  %v402 = vpop.f32.mrb[0].mxu0
  %v403 = vadd.f32 %v302, %v402
  %v404 = vpop.f32.mrb[0].mxu0
  %v405 = vpop.f32.mrb[0].mxu0
  %v406 = vadd.f32 %v302, %v405
  %v407 = vpop.f32.mrb[0].mxu0
  %408 = vmatprep.mubr.bf16.mxu0 0
  %409 = vmatmul.mubr.bf16.gmra.mrb[0].mxu0 %v276
  %v410 = vpop.f32.mrb[0].mxu0
  %v411 = vadd.f32 %v302, %v410
  %v412 = vpop.f32.mrb[0].mxu0
  %v413 = vpop.f32.mrb[0].mxu0
  %v414 = vadd.f32 %v302, %v413
  %v415 = vpop.f32.mrb[0].mxu0
  %416 = vmatprep.mubr.bf16.mxu0 0
  %417 = vmatmul.mubr.bf16.gmra.mrb[0].mxu0 %v277
  %v418 = vpop.f32.mrb[0].mxu0
  %v419 = vadd.f32 %v302, %v418
  %v420 = vpop.f32.mrb[0].mxu0
  %v421 = vpop.f32.mrb[0].mxu0
  %v422 = vadd.f32 %v302, %v421
  %v423 = vpop.f32.mrb[0].mxu0
  %424 = vmatprep.mubr.bf16.mxu0 0
  %425 = vmatmul.mubr.bf16.gmra.mrb[0].mxu0 %v278
  %v426 = vpop.f32.mrb[0].mxu0
  %v427 = vadd.f32 %v302, %v426
  %v428 = vpop.f32.mrb[0].mxu0
  %v429 = vpop.f32.mrb[0].mxu0
  %v430 = vadd.f32 %v302, %v429
  %v431 = vpop.f32.mrb[0].mxu0
  %432 = vmatprep.mubr.bf16.mxu0 0
  %433 = vmatmul.mubr.bf16.gmra.mrb[0].mxu0 %v279
  %v434 = vpop.f32.mrb[0].mxu0
  %v435 = vadd.f32 %v302, %v434
  %v436 = vpop.f32.mrb[0].mxu0
  %v437 = vpop.f32.mrb[0].mxu0
  %v438 = vadd.f32 %v302, %v437
  %v439 = vpop.f32.mrb[0].mxu0
  %440 = vmatprep.mubr.bf16.mxu0 0
  %441 = vmatmul.mubr.bf16.gmra.mrb[0].mxu0 %v280
  %v442 = vpop.f32.mrb[0].mxu0
  %v443 = vadd.f32 %v302, %v442
  %v444 = vpop.f32.mrb[0].mxu0
  %v445 = vpop.f32.mrb[0].mxu0
  %v446 = vadd.f32 %v302, %v445
  %v447 = vpop.f32.mrb[0].mxu0
  %448 = vdwg.mxu0
  %v457 = vunpack.c.l.b16 %v273
  %v458 = vunpack.c.h.b16 %v273
  %v459 = vunpack.c.l.b16 %v274
  %v460 = vunpack.c.h.b16 %v274
  %v461 = vunpack.c.l.b16 %v275
  %v462 = vunpack.c.h.b16 %v275
  %v463 = vunpack.c.l.b16 %v276
  %v464 = vunpack.c.h.b16 %v276
  %v465 = vunpack.c.l.b16 %v277
  %v466 = vunpack.c.h.b16 %v277
  %v467 = vunpack.c.l.b16 %v278
  %v468 = vunpack.c.h.b16 %v278
  %v469 = vunpack.c.l.b16 %v279
  %v470 = vunpack.c.h.b16 %v279
  %v471 = vunpack.c.l.b16 %v280
  %v472 = vunpack.c.h.b16 %v280
  %v473 = vpack.c.b16 %v457, %v457
  %v474 = vpack.c.b16 %v458, %v458
  %v475 = vpack.c.b16 %v459, %v459
  %v476 = vpack.c.b16 %v460, %v460
  %v477 = vpack.c.b16 %v461, %v461
  %v478 = vpack.c.b16 %v462, %v462
  %v479 = vpack.c.b16 %v463, %v463
  %v480 = vpack.c.b16 %v464, %v464
  %v481 = vpack.c.b16 %v465, %v465
  %v482 = vpack.c.b16 %v466, %v466
  %v483 = vpack.c.b16 %v467, %v467
  %v484 = vpack.c.b16 %v468, %v468
  %v485 = vpack.c.b16 %v469, %v469
  %v486 = vpack.c.b16 %v470, %v470
  %v487 = vpack.c.b16 %v471, %v471
  %v488 = vpack.c.b16 %v472, %v472
  %505 = vst [vmem:[%s4] sm:$0xf] %v473
  %506 = vst [vmem:[%s4 + $0x4] sm:$0xf] %v474
  %507 = vst [vmem:[%s4 + $0x8] sm:$0xf] %v475
  %508 = vst [vmem:[%s4 + $0xc] sm:$0xf] %v476
  %509 = vst [vmem:[%s4 + $0x10] sm:$0xf] %v477
  %510 = vst [vmem:[%s4 + $0x14] sm:$0xf] %v478
  %511 = vst [vmem:[%s4 + $0x18] sm:$0xf] %v479
  %512 = vst [vmem:[%s4 + $0x1c] sm:$0xf] %v480
  %513 = vst [vmem:[%s4 + $0x20] sm:$0xf] %v481
  %514 = vst [vmem:[%s4 + $0x24] sm:$0xf] %v482
  %515 = vst [vmem:[%s4 + $0x28] sm:$0xf] %v483
  %516 = vst [vmem:[%s4 + $0x2c] sm:$0xf] %v484
  %517 = vst [vmem:[%s4 + $0x30] sm:$0xf] %v485
  %518 = vst [vmem:[%s4 + $0x34] sm:$0xf] %v486
  %519 = vst [vmem:[%s4 + $0x38] sm:$0xf] %v487
  %520 = vst [vmem:[%s4 + $0x3c] sm:$0xf] %v488
  %v521 = vpack.c.bf16 %v390, %v387
  %v522 = vpack.c.bf16 %v398, %v395
  %v523 = vpack.c.bf16 %v406, %v403
  %v524 = vpack.c.bf16 %v414, %v411
  %v525 = vpack.c.bf16 %v422, %v419
  %v526 = vpack.c.bf16 %v430, %v427
  %v527 = vpack.c.bf16 %v438, %v435
  %v528 = vpack.c.bf16 %v446, %v443
  %v537 = vunpack.c.l.b16 %v521
  %v538 = vunpack.c.h.b16 %v521
  %v539 = vunpack.c.l.b16 %v522
  %v540 = vunpack.c.h.b16 %v522
  %v541 = vunpack.c.l.b16 %v523
  %v542 = vunpack.c.h.b16 %v523
  %v543 = vunpack.c.l.b16 %v524
  %v544 = vunpack.c.h.b16 %v524
  %v545 = vunpack.c.l.b16 %v525
  %v546 = vunpack.c.h.b16 %v525
  %v547 = vunpack.c.l.b16 %v526
  %v548 = vunpack.c.h.b16 %v526
  %v549 = vunpack.c.l.b16 %v527
  %v550 = vunpack.c.h.b16 %v527
  %v551 = vunpack.c.l.b16 %v528
  %v552 = vunpack.c.h.b16 %v528
  %v553 = vpack.c.b16 %v537, %v537
  %v554 = vpack.c.b16 %v538, %v538
  %v555 = vpack.c.b16 %v539, %v539
  %v556 = vpack.c.b16 %v540, %v540
  %v557 = vpack.c.b16 %v541, %v541
  %v558 = vpack.c.b16 %v542, %v542
  %v559 = vpack.c.b16 %v543, %v543
  %v560 = vpack.c.b16 %v544, %v544
  %v561 = vpack.c.b16 %v545, %v545
  %v562 = vpack.c.b16 %v546, %v546
  %v563 = vpack.c.b16 %v547, %v547
  %v564 = vpack.c.b16 %v548, %v548
  %v565 = vpack.c.b16 %v549, %v549
  %v566 = vpack.c.b16 %v550, %v550
  %v567 = vpack.c.b16 %v551, %v551
  %v568 = vpack.c.b16 %v552, %v552
  %585 = vst [vmem:[%s5] sm:$0xf] %v553
  %586 = vst [vmem:[%s5 + $0x4] sm:$0xf] %v554
  %587 = vst [vmem:[%s5 + $0x8] sm:$0xf] %v555
  %588 = vst [vmem:[%s5 + $0xc] sm:$0xf] %v556
  %589 = vst [vmem:[%s5 + $0x10] sm:$0xf] %v557
  %590 = vst [vmem:[%s5 + $0x14] sm:$0xf] %v558
  %591 = vst [vmem:[%s5 + $0x18] sm:$0xf] %v559
  %592 = vst [vmem:[%s5 + $0x1c] sm:$0xf] %v560
  %593 = vst [vmem:[%s5 + $0x20] sm:$0xf] %v561
  %594 = vst [vmem:[%s5 + $0x24] sm:$0xf] %v562
  %595 = vst [vmem:[%s5 + $0x28] sm:$0xf] %v563
  %596 = vst [vmem:[%s5 + $0x2c] sm:$0xf] %v564
  %597 = vst [vmem:[%s5 + $0x30] sm:$0xf] %v565
  %598 = vst [vmem:[%s5 + $0x34] sm:$0xf] %v566
  %599 = vst [vmem:[%s5 + $0x38] sm:$0xf] %v567
  %600 = vst [vmem:[%s5 + $0x3c] sm:$0xf] %v568
  // Predicated region
  $region18: #{pvt_v2_block.7} parent=0 // pred_check
    _
  $region19: #{pvt_v2_block.7} parent=0 // pred_check_branch
    %602 = sbr.rel (0) target = $region21
  $region20: #{pvt_v2_block.7} parent=0 // pred_region
    _
  $region21: #{pvt_v2_block.7} parent=0 // pred_fallthru
    _
  // Predicated region
  $region22: #{pvt_v2_block.7} parent=0 // pred_check
    _
  $region23: #{pvt_v2_block.7} parent=0 // pred_check_branch
    %604 = sbr.rel (0) target = $region25
  $region24: #{pvt_v2_block.7} parent=0 // pred_region
    _
  $region25: #{pvt_v2_block.7} parent=0 // pred_fallthru
    _
  // Predicated region
  $region26: #{pvt_v2_block.7} parent=0 // pred_check
    _
  $region27: #{pvt_v2_block.7} parent=0 // pred_check_branch
    %606 = sbr.rel (0) target = $region29
  $region28: #{pvt_v2_block.7} parent=0 // pred_region
    _
  $region29: #{pvt_v2_block.7} parent=0 // pred_fallthru
    _
  // Predicated region
  $region30: #{pvt_v2_block.7} parent=0 // pred_check
    _
  $region31: #{pvt_v2_block.7} parent=0 // pred_check_branch
    %608 = sbr.rel (0) target = $region33
  $region32: #{pvt_v2_block.7} parent=0 // pred_region
    _
  $region33: #{pvt_v2_block.7} parent=0 // pred_fallthru
    _

// kernel: pvt_v2_block.9
$region0: #{pvt_v2_block.9}
  #allocation0 [shape = 'u32[]', space=smem, size = 0x4, offset = 0x4, fixed_abs, tag = 'smem constant byte address 0x4 - core index']
  #allocation1 [shape = 'u32[144,128]{1,0:T(1,128)}', space=vmem, size = 0x12000, scoped, tag = 'internal scratch']
  %s0 = inlined_call_operand.vmem [shape: f32[32,128], index: 0, kind: input, shape index: {}]
  %s1 = inlined_call_operand.vmem [shape: f32[2,128], index: 1, kind: input, shape index: {}]
  %s2 = inlined_call_operand.vmem [shape: bf16[128,128], index: 2, kind: input, shape index: {}]
  %s3 = inlined_call_operand.vmem [shape: f32[1,128], index: 3, kind: input, shape index: {}]
  %s4 = inlined_call_operand.vmem [shape: bf16[32,128], index: 4, kind: output, shape index: {}]
  %s5 = sld [smem:[#allocation0]]
  $region26: #{pvt_v2_block.9} parent=0
    _
  %s7 = ssub.s32 1, %s5
  %s8 = scalar_select 0, %s7, %s5
  // Predicated region
  $region2: #{pvt_v2_block.9} parent=0 // pred_check
    _
  $region3: #{pvt_v2_block.9} parent=0 // pred_check_branch
    %10 = sbr.rel (0) target = $region5
  $region4: #{pvt_v2_block.9} parent=0 // pred_region
    _
  $region5: #{pvt_v2_block.9} parent=0 // pred_fallthru
    _
  // Predicated region
  $region6: #{pvt_v2_block.9} parent=0 // pred_check
    _
  $region7: #{pvt_v2_block.9} parent=0 // pred_check_branch
    %12 = sbr.rel (0) target = $region9
  $region8: #{pvt_v2_block.9} parent=0 // pred_region
    _
  $region9: #{pvt_v2_block.9} parent=0 // pred_fallthru
    _
  // Predicated region
  $region10: #{pvt_v2_block.9} parent=0 // pred_check
    _
  $region11: #{pvt_v2_block.9} parent=0 // pred_check_branch
    %14 = sbr.rel (0) target = $region13
  $region12: #{pvt_v2_block.9} parent=0 // pred_region
    _
  $region13: #{pvt_v2_block.9} parent=0 // pred_fallthru
    _
  // Predicated region
  $region14: #{pvt_v2_block.9} parent=0 // pred_check
    _
  $region15: #{pvt_v2_block.9} parent=0 // pred_check_branch
    %16 = sbr.rel (0) target = $region17
  $region16: #{pvt_v2_block.9} parent=0 // pred_region
    _
  $region17: #{pvt_v2_block.9} parent=0 // pred_fallthru
    _
  %v18 = vld [vmem:[%s0] sm:$0xff]
  %v19 = vld [vmem:[%s0 + $0x8] sm:$0xff]
  %v20 = vld [vmem:[%s0 + $0x10] sm:$0xff]
  %v21 = vld [vmem:[%s0 + $0x18] sm:$0xff]
  %v22 = vlaneseq
  %v23 = vand.u32 %v22, 127
  %vm24 = vcmp.lt.s32.totalorder %v23, 32
  %25 = vadd.xlane.f32.xlu0 %v18
  %v26 = vpop.xlane.xlu0 %25
  %27 = vadd.xlane.f32.xlu0 %v19
  %v28 = vpop.xlane.xlu0 %27
  %29 = vadd.xlane.f32.xlu0 %v20
  %v30 = vpop.xlane.xlu0 %29
  %31 = vadd.xlane.f32.xlu0 %v21
  %v32 = vpop.xlane.xlu0 %31
  %v33 = vmul.f32 %v26, 0.03125
  %v34 = vmul.f32 %v28, 0.03125
  %v35 = vmul.f32 %v30, 0.03125
  %v36 = vmul.f32 %v32, 0.03125
  %v37 = vsub.f32 %v18, %v33
  %v38 = vsub.f32 %v19, %v34
  %v39 = vsub.f32 %v20, %v35
  %v40 = vsub.f32 %v21, %v36
  %v41 = vsel %vm24, %v37, 0.0
  %v42 = vsel %vm24, %v38, 0.0
  %v43 = vsel %vm24, %v39, 0.0
  %v44 = vsel %vm24, %v40, 0.0
  %v45 = vmul.f32 %v41, %v41
  %v46 = vmul.f32 %v42, %v42
  %v47 = vmul.f32 %v43, %v43
  %v48 = vmul.f32 %v44, %v44
  %49 = vadd.xlane.f32.xlu0 %v45
  %v50 = vpop.xlane.xlu0 %49
  %51 = vadd.xlane.f32.xlu0 %v46
  %v52 = vpop.xlane.xlu0 %51
  %53 = vadd.xlane.f32.xlu0 %v47
  %v54 = vpop.xlane.xlu0 %53
  %55 = vadd.xlane.f32.xlu0 %v48
  %v56 = vpop.xlane.xlu0 %55
  %v57 = vmul.f32 %v50, 0.03125
  %v58 = vmul.f32 %v52, 0.03125
  %v59 = vmul.f32 %v54, 0.03125
  %v60 = vmul.f32 %v56, 0.03125
  %v61 = vadd.f32 %v57, 1e-05
  %v62 = vadd.f32 %v58, 1e-05
  %v63 = vadd.f32 %v59, 1e-05
  %v64 = vadd.f32 %v60, 1e-05
  %v65 = vrsqrt.pop %v61
  %v66 = vrsqrt.pop %v62
  %v67 = vrsqrt.pop %v63
  %v68 = vrsqrt.pop %v64
  %v69 = vmul.f32 %v41, %v65
  %v70 = vmul.f32 %v42, %v66
  %v71 = vmul.f32 %v43, %v67
  %v72 = vmul.f32 %v44, %v68
  %v73 = vld [vmem:[%s1] sm:$0x1]
  %v74 = vlaneseq
  %v75 = vshrl.u32 %v74, 7
  %v76 = vsub.s32 0, %v75
  %v77 = vrot.slane %v73, %v76
  %v78 = vmul.f32 %v69, %v77
  %v79 = vmul.f32 %v70, %v77
  %v80 = vmul.f32 %v71, %v77
  %v81 = vmul.f32 %v72, %v77
  %v82 = vld [vmem:[%s1 + $0x1] sm:$0x1]
  %v83 = vlaneseq
  %v84 = vshrl.u32 %v83, 7
  %v85 = vsub.s32 0, %v84
  %v86 = vrot.slane %v82, %v85
  %v87 = vadd.f32 %v78, %v86
  %v88 = vadd.f32 %v79, %v86
  %v89 = vadd.f32 %v80, %v86
  %v90 = vadd.f32 %v81, %v86
  %v91 = vpack.c.bf16 %v88, %v87
  %v92 = vpack.c.bf16 %v90, %v89
  %v93 = vld [vmem:[%s2] sm:$0xf]
  %v94 = vld [vmem:[%s2 + $0x4] sm:$0xf]
  %v95 = vld [vmem:[%s2 + $0x8] sm:$0xf]
  %v96 = vld [vmem:[%s2 + $0xc] sm:$0xf]
  %v97 = vld [vmem:[%s2 + $0x10] sm:$0xf]
  %v98 = vld [vmem:[%s2 + $0x14] sm:$0xf]
  %v99 = vld [vmem:[%s2 + $0x18] sm:$0xf]
  %v100 = vld [vmem:[%s2 + $0x1c] sm:$0xf]
  %v101 = vld [vmem:[%s2 + $0x20] sm:$0xf]
  %v102 = vld [vmem:[%s2 + $0x24] sm:$0xf]
  %v103 = vld [vmem:[%s2 + $0x28] sm:$0xf]
  %v104 = vld [vmem:[%s2 + $0x2c] sm:$0xf]
  %v105 = vld [vmem:[%s2 + $0x30] sm:$0xf]
  %v106 = vld [vmem:[%s2 + $0x34] sm:$0xf]
  %v107 = vld [vmem:[%s2 + $0x38] sm:$0xf]
  %v108 = vld [vmem:[%s2 + $0x3c] sm:$0xf]
  %v109 = vld [vmem:[%s3] sm:$0x1]
  %v111 = vlaneseq
  %v112 = vshrl.u32 %v111, 7
  %v113 = vsub.s32 0, %v112
  %v114 = vrot.slane %v109, %v113
  %v132 = vunpack.c.l.b16 %v93
  %v133 = vunpack.c.l.b16 %v94
  %v134 = vunpack.c.l.b16 %v95
  %v135 = vunpack.c.l.b16 %v96
  %v136 = vunpack.c.l.b16 %v97
  %v137 = vunpack.c.l.b16 %v98
  %v138 = vunpack.c.l.b16 %v99
  %v139 = vunpack.c.l.b16 %v100
  %v140 = vunpack.c.l.b16 %v101
  %v141 = vunpack.c.l.b16 %v102
  %v142 = vunpack.c.l.b16 %v103
  %v143 = vunpack.c.l.b16 %v104
  %v144 = vunpack.c.l.b16 %v105
  %v145 = vunpack.c.l.b16 %v106
  %v146 = vunpack.c.l.b16 %v107
  %v147 = vunpack.c.l.b16 %v108
  %v148 = vpack.c.b16 %v133, %v132
  %v149 = vpack.c.b16 %v135, %v134
  %v150 = vpack.c.b16 %v137, %v136
  %v151 = vpack.c.b16 %v139, %v138
  %v152 = vpack.c.b16 %v141, %v140
  %v153 = vpack.c.b16 %v143, %v142
  %v154 = vpack.c.b16 %v145, %v144
  %v155 = vpack.c.b16 %v147, %v146
  %164 = vmatprep.subr.bf16.mxu0 0
  %165 = vmatpush1.bf16.msra.mxu0 %v148
  %166 = vmatprep.subr.bf16.mxu0 0
  %167 = vmatpush1.bf16.msra.mxu0 %v149
  %168 = vmatprep.subr.bf16.mxu0 0
  %169 = vmatpush1.bf16.msra.mxu0 %v150
  %170 = vmatprep.subr.bf16.mxu0 0
  %171 = vmatpush1.bf16.msra.mxu0 %v151
  %172 = vmatprep.subr.bf16.mxu0 0
  %173 = vmatpush1.bf16.msra.mxu0 %v152
  %174 = vmatprep.subr.bf16.mxu0 0
  %175 = vmatpush1.bf16.msra.mxu0 %v153
  %176 = vmatprep.subr.bf16.mxu0 0
  %177 = vmatpush1.bf16.msra.mxu0 %v154
  %178 = vmatprep.subr.bf16.mxu0 0
  %179 = vmatpush1.bf16.msra.mxu0 %v155
  %180 = vmatprep.subr.bf16.mxu0 0
  %181 = vmatpush1.bf16.msra.mxu0 0
  %182 = vmatprep.subr.bf16.mxu0 0
  %183 = vmatpush1.bf16.msra.mxu0 0
  %184 = vmatprep.subr.bf16.mxu0 0
  %185 = vmatpush1.bf16.msra.mxu0 0
  %186 = vmatprep.subr.bf16.mxu0 0
  %187 = vmatpush1.bf16.msra.mxu0 0
  %188 = vmatprep.subr.bf16.mxu0 0
  %189 = vmatpush1.bf16.msra.mxu0 0
  %190 = vmatprep.subr.bf16.mxu0 0
  %191 = vmatpush1.bf16.msra.mxu0 0
  %192 = vmatprep.subr.bf16.mxu0 0
  %193 = vmatpush1.bf16.msra.mxu0 0
  %194 = vmatprep.subr.bf16.mxu0 0
  %195 = vmatpush1.bf16.msra.mxu0 0
  %196 = vmatprep.mubr.bf16.mxu0 0
  %197 = vmatmul.mubr.bf16.gmra.mrb[0].mxu0 %v91
  %v198 = vpop.f32.mrb[0].mxu0
  %v199 = vadd.f32 %v114, %v198
  %v200 = vpop.f32.mrb[0].mxu0
  %v201 = vpop.f32.mrb[0].mxu0
  %v202 = vadd.f32 %v114, %v201
  %v203 = vpop.f32.mrb[0].mxu0
  %204 = vmatprep.mubr.bf16.mxu0 0
  %205 = vmatmul.mubr.bf16.gmra.mrb[0].mxu0 %v92
  %v206 = vpop.f32.mrb[0].mxu0
  %v207 = vadd.f32 %v114, %v206
  %v208 = vpop.f32.mrb[0].mxu0
  %v209 = vpop.f32.mrb[0].mxu0
  %v210 = vadd.f32 %v114, %v209
  %v211 = vpop.f32.mrb[0].mxu0
  %212 = vdwg.mxu0
  %v213 = vpack.c.bf16 %v202, %v199
  %v214 = vpack.c.bf16 %v210, %v207
  %v217 = vunpack.c.l.b16 %v213
  %v218 = vunpack.c.h.b16 %v213
  %v219 = vunpack.c.l.b16 %v214
  %v220 = vunpack.c.h.b16 %v214
  %v221 = vpack.c.b16 %v217, %v217
  %v222 = vpack.c.b16 %v218, %v218
  %v223 = vpack.c.b16 %v219, %v219
  %v224 = vpack.c.b16 %v220, %v220
  %229 = vst [vmem:[%s4] sm:$0xf] %v221
  %230 = vst [vmem:[%s4 + $0x4] sm:$0xf] %v222
  %231 = vst [vmem:[%s4 + $0x8] sm:$0xf] %v223
  %232 = vst [vmem:[%s4 + $0xc] sm:$0xf] %v224
  // Predicated region
  $region18: #{pvt_v2_block.9} parent=0 // pred_check
    _
  $region19: #{pvt_v2_block.9} parent=0 // pred_check_branch
    %234 = sbr.rel (0) target = $region21
  $region20: #{pvt_v2_block.9} parent=0 // pred_region
    _
  $region21: #{pvt_v2_block.9} parent=0 // pred_fallthru
    _
  // Predicated region
  $region22: #{pvt_v2_block.9} parent=0 // pred_check
    _
  $region23: #{pvt_v2_block.9} parent=0 // pred_check_branch
    %236 = sbr.rel (0) target = $region25
  $region24: #{pvt_v2_block.9} parent=0 // pred_region
    _
  $region25: #{pvt_v2_block.9} parent=0 // pred_fallthru
    _

// kernel: pvt_v2_block.8
$region0: #{pvt_v2_block.8}
  #allocation0 [shape = 'u32[]', space=smem, size = 0x4, offset = 0x4, fixed_abs, tag = 'smem constant byte address 0x4 - core index']
  #allocation1 [shape = 'u32[144,128]{1,0:T(1,128)}', space=vmem, size = 0x12000, scoped, tag = 'internal scratch']
  %s0 = inlined_call_operand.vmem [shape: bf16[32,128], index: 0, kind: input, shape index: {}]
  %s1 = inlined_call_operand.vmem [shape: bf16[128,128], index: 1, kind: input, shape index: {}]
  %s2 = inlined_call_operand.vmem [shape: f32[2,128], index: 2, kind: input, shape index: {}]
  %s3 = inlined_call_operand.vmem [shape: f32[32,128], index: 3, kind: output, shape index: {}]
  %s4 = sld [smem:[#allocation0]]
  $region22: #{pvt_v2_block.8} parent=0
    _
  %s6 = ssub.s32 1, %s4
  %s7 = scalar_select 0, %s6, %s4
  // Predicated region
  $region2: #{pvt_v2_block.8} parent=0 // pred_check
    _
  $region3: #{pvt_v2_block.8} parent=0 // pred_check_branch
    %9 = sbr.rel (0) target = $region5
  $region4: #{pvt_v2_block.8} parent=0 // pred_region
    _
  $region5: #{pvt_v2_block.8} parent=0 // pred_fallthru
    _
  // Predicated region
  $region6: #{pvt_v2_block.8} parent=0 // pred_check
    _
  $region7: #{pvt_v2_block.8} parent=0 // pred_check_branch
    %11 = sbr.rel (0) target = $region9
  $region8: #{pvt_v2_block.8} parent=0 // pred_region
    _
  $region9: #{pvt_v2_block.8} parent=0 // pred_fallthru
    _
  // Predicated region
  $region10: #{pvt_v2_block.8} parent=0 // pred_check
    _
  $region11: #{pvt_v2_block.8} parent=0 // pred_check_branch
    %13 = sbr.rel (0) target = $region13
  $region12: #{pvt_v2_block.8} parent=0 // pred_region
    _
  $region13: #{pvt_v2_block.8} parent=0 // pred_fallthru
    _
  %v15 = vld [vmem:[%s0] sm:$0xf]
  %v16 = vld [vmem:[%s0 + $0x4] sm:$0xf]
  %v17 = vld [vmem:[%s0 + $0x8] sm:$0xf]
  %v18 = vld [vmem:[%s0 + $0xc] sm:$0xf]
  %v19 = vld [vmem:[%s1] sm:$0xf]
  %v20 = vld [vmem:[%s1 + $0x4] sm:$0xf]
  %v21 = vld [vmem:[%s1 + $0x8] sm:$0xf]
  %v22 = vld [vmem:[%s1 + $0xc] sm:$0xf]
  %v23 = vld [vmem:[%s1 + $0x10] sm:$0xf]
  %v24 = vld [vmem:[%s1 + $0x14] sm:$0xf]
  %v25 = vld [vmem:[%s1 + $0x18] sm:$0xf]
  %v26 = vld [vmem:[%s1 + $0x1c] sm:$0xf]
  %v27 = vld [vmem:[%s1 + $0x20] sm:$0xf]
  %v28 = vld [vmem:[%s1 + $0x24] sm:$0xf]
  %v29 = vld [vmem:[%s1 + $0x28] sm:$0xf]
  %v30 = vld [vmem:[%s1 + $0x2c] sm:$0xf]
  %v31 = vld [vmem:[%s1 + $0x30] sm:$0xf]
  %v32 = vld [vmem:[%s1 + $0x34] sm:$0xf]
  %v33 = vld [vmem:[%s1 + $0x38] sm:$0xf]
  %v34 = vld [vmem:[%s1 + $0x3c] sm:$0xf]
  %v35 = vld [vmem:[%s2] sm:$0x1]
  %v36 = vlaneseq
  %v37 = vshrl.u32 %v36, 7
  %v38 = vsub.s32 0, %v37
  %v39 = vrot.slane %v35, %v38
  %v44 = vunpack.c.l.b16 %v15
  %v45 = vunpack.c.l.b16 %v16
  %v46 = vunpack.c.l.b16 %v17
  %v47 = vunpack.c.l.b16 %v18
  %v48 = vpack.c.b16 %v45, %v44
  %v49 = vpack.c.b16 %v47, %v46
  %v68 = vunpack.c.l.b16 %v19
  %v69 = vunpack.c.l.b16 %v20
  %v70 = vunpack.c.l.b16 %v21
  %v71 = vunpack.c.l.b16 %v22
  %v72 = vunpack.c.l.b16 %v23
  %v73 = vunpack.c.l.b16 %v24
  %v74 = vunpack.c.l.b16 %v25
  %v75 = vunpack.c.l.b16 %v26
  %v76 = vunpack.c.l.b16 %v27
  %v77 = vunpack.c.l.b16 %v28
  %v78 = vunpack.c.l.b16 %v29
  %v79 = vunpack.c.l.b16 %v30
  %v80 = vunpack.c.l.b16 %v31
  %v81 = vunpack.c.l.b16 %v32
  %v82 = vunpack.c.l.b16 %v33
  %v83 = vunpack.c.l.b16 %v34
  %v84 = vpack.c.b16 %v69, %v68
  %v85 = vpack.c.b16 %v71, %v70
  %v86 = vpack.c.b16 %v73, %v72
  %v87 = vpack.c.b16 %v75, %v74
  %v88 = vpack.c.b16 %v77, %v76
  %v89 = vpack.c.b16 %v79, %v78
  %v90 = vpack.c.b16 %v81, %v80
  %v91 = vpack.c.b16 %v83, %v82
  %100 = vmatprep.subr.bf16.mxu0 0
  %101 = vmatpush1.bf16.msra.mxu0 %v84
  %102 = vmatprep.subr.bf16.mxu0 0
  %103 = vmatpush1.bf16.msra.mxu0 %v85
  %104 = vmatprep.subr.bf16.mxu0 0
  %105 = vmatpush1.bf16.msra.mxu0 %v86
  %106 = vmatprep.subr.bf16.mxu0 0
  %107 = vmatpush1.bf16.msra.mxu0 %v87
  %108 = vmatprep.subr.bf16.mxu0 0
  %109 = vmatpush1.bf16.msra.mxu0 %v88
  %110 = vmatprep.subr.bf16.mxu0 0
  %111 = vmatpush1.bf16.msra.mxu0 %v89
  %112 = vmatprep.subr.bf16.mxu0 0
  %113 = vmatpush1.bf16.msra.mxu0 %v90
  %114 = vmatprep.subr.bf16.mxu0 0
  %115 = vmatpush1.bf16.msra.mxu0 %v91
  %116 = vmatprep.subr.bf16.mxu0 0
  %117 = vmatpush1.bf16.msra.mxu0 0
  %118 = vmatprep.subr.bf16.mxu0 0
  %119 = vmatpush1.bf16.msra.mxu0 0
  %120 = vmatprep.subr.bf16.mxu0 0
  %121 = vmatpush1.bf16.msra.mxu0 0
  %122 = vmatprep.subr.bf16.mxu0 0
  %123 = vmatpush1.bf16.msra.mxu0 0
  %124 = vmatprep.subr.bf16.mxu0 0
  %125 = vmatpush1.bf16.msra.mxu0 0
  %126 = vmatprep.subr.bf16.mxu0 0
  %127 = vmatpush1.bf16.msra.mxu0 0
  %128 = vmatprep.subr.bf16.mxu0 0
  %129 = vmatpush1.bf16.msra.mxu0 0
  %130 = vmatprep.subr.bf16.mxu0 0
  %131 = vmatpush1.bf16.msra.mxu0 0
  %132 = vmatprep.mubr.bf16.mxu0 0
  %133 = vmatmul.mubr.bf16.gmra.mrb[0].mxu0 %v48
  %v134 = vpop.f32.mrb[0].mxu0
  %v135 = vadd.f32 %v39, %v134
  %v136 = vpop.f32.mrb[0].mxu0
  %v137 = vpop.f32.mrb[0].mxu0
  %v138 = vadd.f32 %v39, %v137
  %v139 = vpop.f32.mrb[0].mxu0
  %140 = vmatprep.mubr.bf16.mxu0 0
  %141 = vmatmul.mubr.bf16.gmra.mrb[0].mxu0 %v49
  %v142 = vpop.f32.mrb[0].mxu0
  %v143 = vadd.f32 %v39, %v142
  %v144 = vpop.f32.mrb[0].mxu0
  %v145 = vpop.f32.mrb[0].mxu0
  %v146 = vadd.f32 %v39, %v145
  %v147 = vpop.f32.mrb[0].mxu0
  %148 = vdwg.mxu0
  %149 = vst [vmem:[%s3] sm:$0xff] %v135
  %150 = vst [vmem:[%s3 + $0x8] sm:$0xff] %v138
  %151 = vst [vmem:[%s3 + $0x10] sm:$0xff] %v143
  %152 = vst [vmem:[%s3 + $0x18] sm:$0xff] %v146
  // Predicated region
  $region14: #{pvt_v2_block.8} parent=0 // pred_check
    _
  $region15: #{pvt_v2_block.8} parent=0 // pred_check_branch
    %154 = sbr.rel (0) target = $region17
  $region16: #{pvt_v2_block.8} parent=0 // pred_region
    _
  $region17: #{pvt_v2_block.8} parent=0 // pred_fallthru
    _
  // Predicated region
  $region18: #{pvt_v2_block.8} parent=0 // pred_check
    _
  $region19: #{pvt_v2_block.8} parent=0 // pred_check_branch
    %156 = sbr.rel (0) target = $region21
  $region20: #{pvt_v2_block.8} parent=0 // pred_region
    _
  $region21: #{pvt_v2_block.8} parent=0 // pred_fallthru
    _

// kernel: pvt_v2_block.10
$region0: #{pvt_v2_block.10}
  #allocation0 [shape = 'u32[]', space=smem, size = 0x4, offset = 0x4, fixed_abs, tag = 'smem constant byte address 0x4 - core index']
  #allocation1 [shape = 'u32[144,128]{1,0:T(1,128)}', space=vmem, size = 0x12000, scoped, tag = 'internal scratch']
  %s0 = inlined_call_operand.vmem [shape: bf16[2,64,128], index: 0, kind: input, shape index: {}]
  %s1 = inlined_call_operand.vmem [shape: bf16[2,16,128], index: 1, kind: input, shape index: {}]
  %s2 = inlined_call_operand.vmem [shape: f32[2,64,128], index: 2, kind: input, shape index: {}]
  %s3 = inlined_call_operand.vmem [shape: bf16[128,128], index: 3, kind: input, shape index: {}]
  %s4 = inlined_call_operand.vmem [shape: f32[2,128], index: 4, kind: input, shape index: {}]
  %s5 = inlined_call_operand.vmem [shape: f32[2,64,128], index: 5, kind: output, shape index: {}]
  %s6 = sld [smem:[#allocation0]]
  $region53: #{pvt_v2_block.10} parent=0
    _
  %s8 = ssub.s32 1, %s6
  %s9 = scalar_select 0, %s8, %s6
  loop: start=0, step=1, limit=4
  $region2: #{pvt_v2_block.10} parent=0 // loop_pre_header
    _
  $region3: #{pvt_v2_block.10} parent=0 // loop_header
    %s11 = sphi 0, %s15
    %p12 = scmp.ge.s32.totalorder %s11, 4
    %s21 = sphi 0, %s23
    %s24 = sphi 0, %s21
    %s25 = sphi 0, %s24
    %s41 = sphi 0, %s25
    %s47 = sphi 0, %s49
    %s50 = sphi 0, %s47
    %s51 = sphi 0, %s50
    %s67 = sphi 0, %s51
    %s73 = sphi 0, %s75
    %s76 = sphi 0, %s73
    %s77 = sphi 0, %s76
    %s93 = sphi 0, %s77
    %s97 = sphi 0, %s97
    %s99 = sphi 0, %s97
    %s100 = sphi 0, %s99
    %s114 = sphi 0, %s100
    %s118 = sphi 0, %s118
    %s120 = sphi 0, %s118
    %s121 = sphi 0, %s120
    %s135 = sphi 0, %s121
    %s141 = sphi 0, %s143
    %s144 = sphi 0, %s141
    %s145 = sphi 0, %s144
    %s161 = sphi 0, %s145
  $region4: #{pvt_v2_block.10} parent=0 // loop_header_branch
    %14 = sbr.rel (%p12) target = $region8
  $region5: #{pvt_v2_block.10} parent=0 // loop_body
    %s16 = ssub.s32 %s11, 1
    %s17 = ssub.s32 %s11, 2
    %s18 = sadd.s32 %s11, 1
    %s19 = ssub.s32 %s11, %s18
    %p20 = scmp.eq.s32.totalorder %s19, 0
    %s22 = sadd.s32 %s21, 1
    %s23 = scalar_select %p20, %s21, %s22
    %p26 = pneg %p20
    %p27 = scmp.eq.s32.totalorder %s11, 1
    %p28 = por %p26, %p27
    %p29 = scmp.ne.s32.totalorder %s21, %s24
    %p30 = scmp.eq.s32.totalorder %s11, 0
    %p31 = por %p29, %p30
    %p32 = scmp.ne.s32.totalorder %s21, %s24
    %p33 = scmp.eq.s32.totalorder %s16, 1
    %p34 = por %p32, %p33
    %p35 = scmp.ne.s32.totalorder %s24, %s25
    %p36 = scmp.eq.s32.totalorder %s16, 0
    %p37 = por %p35, %p36
    %p38 = scmp.ne.s32.totalorder %s24, %s25
    %p39 = scmp.eq.s32.totalorder %s17, 1
    %p40 = por %p38, %p39
    %p42 = scmp.ne.s32.totalorder %s25, %s41
    %p43 = scmp.eq.s32.totalorder %s17, 0
    %p44 = por %p42, %p43
    %s45 = ssub.s32 %s11, %s18
    %p46 = scmp.eq.s32.totalorder %s45, 0
    %s48 = sadd.s32 %s47, 1
    %s49 = scalar_select %p46, %s47, %s48
    %p52 = pneg %p46
    %p53 = scmp.eq.s32.totalorder %s11, 1
    %p54 = por %p52, %p53
    %p55 = scmp.ne.s32.totalorder %s47, %s50
    %p56 = scmp.eq.s32.totalorder %s11, 0
    %p57 = por %p55, %p56
    %p58 = scmp.ne.s32.totalorder %s47, %s50
    %p59 = scmp.eq.s32.totalorder %s16, 1
    %p60 = por %p58, %p59
    %p61 = scmp.ne.s32.totalorder %s50, %s51
    %p62 = scmp.eq.s32.totalorder %s16, 0
    %p63 = por %p61, %p62
    %p64 = scmp.ne.s32.totalorder %s50, %s51
    %p65 = scmp.eq.s32.totalorder %s17, 1
    %p66 = por %p64, %p65
    %p68 = scmp.ne.s32.totalorder %s51, %s67
    %p69 = scmp.eq.s32.totalorder %s17, 0
    %p70 = por %p68, %p69
    %s71 = ssub.s32 %s11, %s18
    %p72 = scmp.eq.s32.totalorder %s71, 0
    %s74 = sadd.s32 %s73, 1
    %s75 = scalar_select %p72, %s73, %s74
    %p78 = pneg %p72
    %p79 = scmp.eq.s32.totalorder %s11, 1
    %p80 = por %p78, %p79
    %p81 = scmp.ne.s32.totalorder %s73, %s76
    %p82 = scmp.eq.s32.totalorder %s11, 0
    %p83 = por %p81, %p82
    %p84 = scmp.ne.s32.totalorder %s73, %s76
    %p85 = scmp.eq.s32.totalorder %s16, 1
    %p86 = por %p84, %p85
    %p87 = scmp.ne.s32.totalorder %s76, %s77
    %p88 = scmp.eq.s32.totalorder %s16, 0
    %p89 = por %p87, %p88
    %p90 = scmp.ne.s32.totalorder %s76, %s77
    %p91 = scmp.eq.s32.totalorder %s17, 1
    %p92 = por %p90, %p91
    %p94 = scmp.ne.s32.totalorder %s77, %s93
    %p95 = scmp.eq.s32.totalorder %s17, 0
    %p96 = por %p94, %p95
    %s98 = sadd.s32 %s97, 1
    %p101 = scmp.eq.s32.totalorder %s11, 1
    %p102 = scmp.ne.s32.totalorder %s97, %s99
    %p103 = scmp.eq.s32.totalorder %s11, 0
    %p104 = por %p102, %p103
    %p105 = scmp.ne.s32.totalorder %s97, %s99
    %p106 = scmp.eq.s32.totalorder %s16, 1
    %p107 = por %p105, %p106
    %p108 = scmp.ne.s32.totalorder %s99, %s100
    %p109 = scmp.eq.s32.totalorder %s16, 0
    %p110 = por %p108, %p109
    %p111 = scmp.ne.s32.totalorder %s99, %s100
    %p112 = scmp.eq.s32.totalorder %s17, 1
    %p113 = por %p111, %p112
    %p115 = scmp.ne.s32.totalorder %s100, %s114
    %p116 = scmp.eq.s32.totalorder %s17, 0
    %p117 = por %p115, %p116
    %s119 = sadd.s32 %s118, 1
    %p122 = scmp.eq.s32.totalorder %s11, 1
    %p123 = scmp.ne.s32.totalorder %s118, %s120
    %p124 = scmp.eq.s32.totalorder %s11, 0
    %p125 = por %p123, %p124
    %p126 = scmp.ne.s32.totalorder %s118, %s120
    %p127 = scmp.eq.s32.totalorder %s16, 1
    %p128 = por %p126, %p127
    %p129 = scmp.ne.s32.totalorder %s120, %s121
    %p130 = scmp.eq.s32.totalorder %s16, 0
    %p131 = por %p129, %p130
    %p132 = scmp.ne.s32.totalorder %s120, %s121
    %p133 = scmp.eq.s32.totalorder %s17, 1
    %p134 = por %p132, %p133
    %p136 = scmp.ne.s32.totalorder %s121, %s135
    %p137 = scmp.eq.s32.totalorder %s17, 0
    %p138 = por %p136, %p137
    %s139 = ssub.s32 %s11, %s18
    %p140 = scmp.eq.s32.totalorder %s139, 0
    %s142 = sadd.s32 %s141, 1
    %s143 = scalar_select %p140, %s141, %s142
    %p146 = pneg %p140
    %p147 = scmp.eq.s32.totalorder %s11, 1
    %p148 = por %p146, %p147
    %p149 = scmp.ne.s32.totalorder %s141, %s144
    %p150 = scmp.eq.s32.totalorder %s11, 0
    %p151 = por %p149, %p150
    %p152 = scmp.ne.s32.totalorder %s141, %s144
    %p153 = scmp.eq.s32.totalorder %s16, 1
    %p154 = por %p152, %p153
    %p155 = scmp.ne.s32.totalorder %s144, %s145
    %p156 = scmp.eq.s32.totalorder %s16, 0
    %p157 = por %p155, %p156
    %p158 = scmp.ne.s32.totalorder %s144, %s145
    %p159 = scmp.eq.s32.totalorder %s17, 1
    %p160 = por %p158, %p159
    %p162 = scmp.ne.s32.totalorder %s145, %s161
    %p163 = scmp.eq.s32.totalorder %s17, 0
    %p164 = por %p162, %p163
    %p165 = scmp.le.s32.totalorder 1, %s11
    %p166 = scmp.lt.s32.totalorder %s11, 3
    %p167 = pnand %p165, %p166
    %p168 = pneg %p167
    // Predicated region
    $region9: #{pvt_v2_block.10} parent=5 // pred_check
      _
    $region10: #{pvt_v2_block.10} parent=5 // pred_check_branch
      %170 = sbr.rel (%p167) target = $region12
    $region11: #{pvt_v2_block.10} parent=5 // pred_region
      %s171 = ssub.s32 %s11, 1
      // Predicated region
      $region13: #{pvt_v2_block.10} parent=11 // pred_check
        %p172 = pneg %p110
      $region14: #{pvt_v2_block.10} parent=11 // pred_check_branch
        %174 = sbr.rel (%p172) target = $region16
      $region15: #{pvt_v2_block.10} parent=11 // pred_region
        _
      $region16: #{pvt_v2_block.10} parent=11 // pred_fallthru
        _
      // Predicated region
      $region17: #{pvt_v2_block.10} parent=11 // pred_check
        %p175 = pneg %p131
      $region18: #{pvt_v2_block.10} parent=11 // pred_check_branch
        %177 = sbr.rel (%p175) target = $region20
      $region19: #{pvt_v2_block.10} parent=11 // pred_region
        _
      $region20: #{pvt_v2_block.10} parent=11 // pred_fallthru
        _
    $region12: #{pvt_v2_block.10} parent=5 // pred_fallthru
      _
    %p178 = scmp.lt.s32.totalorder %s11, 2
    // Predicated region
    $region21: #{pvt_v2_block.10} parent=5 // pred_check
      %p179 = pneg %p178
    $region22: #{pvt_v2_block.10} parent=5 // pred_check_branch
      %181 = sbr.rel (%p179) target = $region24
    $region23: #{pvt_v2_block.10} parent=5 // pred_region
      // Predicated region
      $region25: #{pvt_v2_block.10} parent=23 // pred_check
        %p182 = pneg %p31
      $region26: #{pvt_v2_block.10} parent=23 // pred_check_branch
        %184 = sbr.rel (%p182) target = $region28
      $region27: #{pvt_v2_block.10} parent=23 // pred_region
        %p185 = scmp.lt.s32.totalorder %s11, 1
        %s186 = scalar_select %p185, %s11, 1
        %s187 = smul.addr %s186, 8
        %s188 = smul.addr %s187, 4
        %s189 = scalar_lea.vmem %s0, %s188
      $region28: #{pvt_v2_block.10} parent=23 // pred_fallthru
        _
      // Predicated region
      $region29: #{pvt_v2_block.10} parent=23 // pred_check
        %p190 = pneg %p57
      $region30: #{pvt_v2_block.10} parent=23 // pred_check_branch
        %192 = sbr.rel (%p190) target = $region32
      $region31: #{pvt_v2_block.10} parent=23 // pred_region
        %p193 = scmp.lt.s32.totalorder %s11, 1
        %s194 = scalar_select %p193, %s11, 1
        %s195 = smul.addr %s194, 2
        %s196 = smul.addr %s195, 4
        %s197 = scalar_lea.vmem %s1, %s196
      $region32: #{pvt_v2_block.10} parent=23 // pred_fallthru
        _
      // Predicated region
      $region33: #{pvt_v2_block.10} parent=23 // pred_check
        %p198 = pneg %p83
      $region34: #{pvt_v2_block.10} parent=23 // pred_check_branch
        %200 = sbr.rel (%p198) target = $region36
      $region35: #{pvt_v2_block.10} parent=23 // pred_region
        %p201 = scmp.lt.s32.totalorder %s11, 1
        %s202 = scalar_select %p201, %s11, 1
        %s203 = smul.addr %s202, 8
        %s204 = smul.addr %s203, 8
        %s205 = scalar_lea.vmem %s2, %s204
      $region36: #{pvt_v2_block.10} parent=23 // pred_fallthru
        _
    $region24: #{pvt_v2_block.10} parent=5 // pred_fallthru
      _
    %p206 = scmp.le.s32.totalorder 1, %s11
    %p207 = scmp.lt.s32.totalorder %s11, 3
    %p208 = pnand %p206, %p207
    %p209 = pneg %p208
    // Predicated region
    $region37: #{pvt_v2_block.10} parent=5 // pred_check
      _
    $region38: #{pvt_v2_block.10} parent=5 // pred_check_branch
      %211 = sbr.rel (%p208) target = $region40
    $region39: #{pvt_v2_block.10} parent=5 // pred_region
      %s212 = ssub.s32 %s11, 1
      %p213 = scmp.lt.s32.totalorder %s16, 1
      %s214 = scalar_select %p213, %s16, 1
      %s215 = smul.addr %s214, 8
      %s216 = smul.addr %s215, 4
      %s217 = scalar_lea.vmem %s0, %s216
      %p218 = pneg %p37
      %p219 = pneg %p34
      %p220 = scmp.lt.s32.totalorder %s16, 1
      %s221 = scalar_select %p220, %s16, 1
      %s222 = smul.addr %s221, 2
      %s223 = smul.addr %s222, 4
      %s224 = scalar_lea.vmem %s1, %s223
      %p225 = pneg %p63
      %p226 = pneg %p60
      %p227 = scmp.lt.s32.totalorder %s16, 1
      %s228 = scalar_select %p227, %s16, 1
      %s229 = smul.addr %s228, 8
      %s230 = smul.addr %s229, 8
      %s231 = scalar_lea.vmem %s2, %s230
      %p232 = pneg %p89
      %p233 = pneg %p86
      %p234 = pneg %p110
      %p235 = pneg %p107
      %p236 = pneg %p131
      %p237 = pneg %p128
      %p238 = pneg %p157
      %p239 = pneg %p154
      %p240 = scmp.lt.s32.totalorder %s16, 1
      %s241 = scalar_select %p240, %s16, 1
      %s242 = smul.addr %s241, 8
      %s243 = smul.addr %s242, 8
      %s244 = scalar_lea.vmem %s5, %s243
      %p245 = scmp.lt.s32.totalorder %s16, 1
      %s246 = scalar_select %p245, %s16, 1
      %s247 = smul.addr %s246, 8
      %s248 = smul.addr %s247, 4
      %s249 = scalar_lea.vmem %s0, %s248
      %p250 = scmp.lt.s32.totalorder %s16, 1
      %s251 = scalar_select %p250, %s16, 1
      %s252 = smul.addr %s251, 2
      %s253 = smul.addr %s252, 4
      %s254 = scalar_lea.vmem %s1, %s253
      %p255 = scmp.lt.s32.totalorder %s16, 1
      %s256 = scalar_select %p255, %s16, 1
      %s257 = smul.addr %s256, 8
      %s258 = smul.addr %s257, 8
      %s259 = scalar_lea.vmem %s2, %s258
      %p260 = scmp.lt.s32.totalorder %s16, 1
      %s261 = scalar_select %p260, %s16, 1
      %s262 = smul.addr %s261, 8
      %s263 = smul.addr %s262, 8
      %s264 = scalar_lea.vmem %s5, %s263
      %v266 = vld [vmem:[%s249] sm:$0xf]
      %v267 = vld [vmem:[%s249 + $0x4] sm:$0xf]
      %v268 = vld [vmem:[%s249 + $0x8] sm:$0xf]
      %v269 = vld [vmem:[%s249 + $0xc] sm:$0xf]
      %v270 = vld [vmem:[%s249 + $0x10] sm:$0xf]
      %v271 = vld [vmem:[%s249 + $0x14] sm:$0xf]
      %v272 = vld [vmem:[%s249 + $0x18] sm:$0xf]
      %v273 = vld [vmem:[%s249 + $0x1c] sm:$0xf]
      %v274 = vunpack.c.l.bf16 %v266
      %v275 = vunpack.c.l.bf16 %v267
      %v276 = vunpack.c.l.bf16 %v268
      %v277 = vunpack.c.l.bf16 %v269
      %v278 = vunpack.c.l.bf16 %v270
      %v279 = vunpack.c.l.bf16 %v271
      %v280 = vunpack.c.l.bf16 %v272
      %v281 = vunpack.c.l.bf16 %v273
      %v282 = vmul.f32 %v274, 0.25
      %v283 = vmul.f32 %v275, 0.25
      %v284 = vmul.f32 %v276, 0.25
      %v285 = vmul.f32 %v277, 0.25
      %v286 = vmul.f32 %v278, 0.25
      %v287 = vmul.f32 %v279, 0.25
      %v288 = vmul.f32 %v280, 0.25
      %v289 = vmul.f32 %v281, 0.25
      %v290 = vpack.c.bf16 %v283, %v282
      %v291 = vpack.c.bf16 %v285, %v284
      %v292 = vpack.c.bf16 %v287, %v286
      %v293 = vpack.c.bf16 %v289, %v288
      %v294 = vld [vmem:[%s254] sm:$0xf]
      %v295 = vld [vmem:[%s254 + $0x4] sm:$0xf]
      %v298 = vunpack.c.l.b16 %v294
      %v299 = vunpack.c.l.b16 %v295
      %v300 = vpack.c.b16 %v299, %v298
      %vm301 = vcmask 130048
      %v303 = vsel %vm301, %v290, 0
      %v306 = vsel %vm301, %v291, 0
      %v309 = vsel %vm301, %v292, 0
      %v312 = vsel %vm301, %v293, 0
      %v315 = vsel %vm301, %v300, 0
      %317 = vmatprep.subr.bf16.mxu0 0
      %318 = vmatpush1.bf16.xpose.msra.mxu0 %v315
      %319 = vmatprep.subr.bf16.mxu0 0
      %320 = vmatpush1.bf16.xpose.msra.mxu0 0
      %321 = vmatprep.subr.bf16.mxu0 0
      %322 = vmatpush1.bf16.xpose.msra.mxu0 0
      %323 = vmatprep.subr.bf16.mxu0 0
      %324 = vmatpush1.bf16.xpose.msra.mxu0 0
      %325 = vmatprep.subr.bf16.mxu0 0
      %326 = vmatpush1.bf16.xpose.msra.mxu0 0
      %327 = vmatprep.subr.bf16.mxu0 0
      %328 = vmatpush1.bf16.xpose.msra.mxu0 0
      %329 = vmatprep.subr.bf16.mxu0 0
      %330 = vmatpush1.bf16.xpose.msra.mxu0 0
      %331 = vmatprep.subr.bf16.mxu0 0
      %332 = vmatpush1.bf16.xpose.msra.mxu0 0
      %333 = vmatprep.subr.bf16.mxu0 0
      %334 = vmatpush1.bf16.xpose.msra.mxu0 0
      %335 = vmatprep.subr.bf16.mxu0 0
      %336 = vmatpush1.bf16.xpose.msra.mxu0 0
      %337 = vmatprep.subr.bf16.mxu0 0
      %338 = vmatpush1.bf16.xpose.msra.mxu0 0
      %339 = vmatprep.subr.bf16.mxu0 0
      %340 = vmatpush1.bf16.xpose.msra.mxu0 0
      %341 = vmatprep.subr.bf16.mxu0 0
      %342 = vmatpush1.bf16.xpose.msra.mxu0 0
      %343 = vmatprep.subr.bf16.mxu0 0
      %344 = vmatpush1.bf16.xpose.msra.mxu0 0
      %345 = vmatprep.subr.bf16.mxu0 0
      %346 = vmatpush1.bf16.xpose.msra.mxu0 0
      %347 = vmatprep.subr.bf16.mxu0 0
      %348 = vmatpush1.bf16.xpose.msra.mxu0 0
      %349 = vmatprep.mubr.bf16.mxu0 0
      %350 = vmatmul.mubr.bf16.gmra.mrb[0].mxu0 %v303
      %v351 = vpop.f32.mrb[0].mxu0
      %v352 = vadd.f32 0.0, %v351
      %v353 = vpop.f32.mrb[0].mxu0
      %v354 = vpop.f32.mrb[0].mxu0
      %v355 = vadd.f32 0.0, %v354
      %v356 = vpop.f32.mrb[0].mxu0
      %357 = vmatprep.mubr.bf16.mxu0 0
      %358 = vmatmul.mubr.bf16.gmra.mrb[0].mxu0 %v306
      %v359 = vpop.f32.mrb[0].mxu0
      %v360 = vadd.f32 0.0, %v359
      %v361 = vpop.f32.mrb[0].mxu0
      %v362 = vpop.f32.mrb[0].mxu0
      %v363 = vadd.f32 0.0, %v362
      %v364 = vpop.f32.mrb[0].mxu0
      %365 = vmatprep.mubr.bf16.mxu0 0
      %366 = vmatmul.mubr.bf16.gmra.mrb[0].mxu0 %v309
      %v367 = vpop.f32.mrb[0].mxu0
      %v368 = vadd.f32 0.0, %v367
      %v369 = vpop.f32.mrb[0].mxu0
      %v370 = vpop.f32.mrb[0].mxu0
      %v371 = vadd.f32 0.0, %v370
      %v372 = vpop.f32.mrb[0].mxu0
      %373 = vmatprep.mubr.bf16.mxu0 0
      %374 = vmatmul.mubr.bf16.gmra.mrb[0].mxu0 %v312
      %v375 = vpop.f32.mrb[0].mxu0
      %v376 = vadd.f32 0.0, %v375
      %v377 = vpop.f32.mrb[0].mxu0
      %v378 = vpop.f32.mrb[0].mxu0
      %v379 = vadd.f32 0.0, %v378
      %v380 = vpop.f32.mrb[0].mxu0
      %381 = vdwg.mxu0
      %v382 = vsel %vm301, %v352, -inf
      %383 = vmax.xlane.f32.xlu0 %v382
      %v384 = vpop.xlane.xlu0 %383
      %v385 = vsel %vm301, %v355, -inf
      %386 = vmax.xlane.f32.xlu0 %v385
      %v387 = vpop.xlane.xlu0 %386
      %v388 = vsel %vm301, %v360, -inf
      %389 = vmax.xlane.f32.xlu0 %v388
      %v390 = vpop.xlane.xlu0 %389
      %v391 = vsel %vm301, %v363, -inf
      %392 = vmax.xlane.f32.xlu0 %v391
      %v393 = vpop.xlane.xlu0 %392
      %v394 = vsel %vm301, %v368, -inf
      %395 = vmax.xlane.f32.xlu0 %v394
      %v396 = vpop.xlane.xlu0 %395
      %v397 = vsel %vm301, %v371, -inf
      %398 = vmax.xlane.f32.xlu0 %v397
      %v399 = vpop.xlane.xlu0 %398
      %v400 = vsel %vm301, %v376, -inf
      %401 = vmax.xlane.f32.xlu0 %v400
      %v402 = vpop.xlane.xlu0 %401
      %v403 = vsel %vm301, %v379, -inf
      %404 = vmax.xlane.f32.xlu0 %v403
      %v405 = vpop.xlane.xlu0 %404
      %v406 = vsub.f32 %v352, %v384
      %v407 = vsub.f32 %v355, %v387
      %v408 = vsub.f32 %v360, %v390
      %v409 = vsub.f32 %v363, %v393
      %v410 = vsub.f32 %v368, %v396
      %v411 = vsub.f32 %v371, %v399
      %v412 = vsub.f32 %v376, %v402
      %v413 = vsub.f32 %v379, %v405
      %v414 = vmul.f32 %v406, 1.442695
      %v415 = vpow.pop %v414
      %v416 = vmul.f32 %v407, 1.442695
      %v417 = vpow.pop %v416
      %v418 = vmul.f32 %v408, 1.442695
      %v419 = vpow.pop %v418
      %v420 = vmul.f32 %v409, 1.442695
      %v421 = vpow.pop %v420
      %v422 = vmul.f32 %v410, 1.442695
      %v423 = vpow.pop %v422
      %v424 = vmul.f32 %v411, 1.442695
      %v425 = vpow.pop %v424
      %v426 = vmul.f32 %v412, 1.442695
      %v427 = vpow.pop %v426
      %v428 = vmul.f32 %v413, 1.442695
      %v429 = vpow.pop %v428
      %v430 = vsel %vm301, %v415, 0.0
      %431 = vadd.xlane.f32.xlu0 %v430
      %v432 = vpop.xlane.xlu0 %431
      %v433 = vsel %vm301, %v417, 0.0
      %434 = vadd.xlane.f32.xlu0 %v433
      %v435 = vpop.xlane.xlu0 %434
      %v436 = vsel %vm301, %v419, 0.0
      %437 = vadd.xlane.f32.xlu0 %v436
      %v438 = vpop.xlane.xlu0 %437
      %v439 = vsel %vm301, %v421, 0.0
      %440 = vadd.xlane.f32.xlu0 %v439
      %v441 = vpop.xlane.xlu0 %440
      %v442 = vsel %vm301, %v423, 0.0
      %443 = vadd.xlane.f32.xlu0 %v442
      %v444 = vpop.xlane.xlu0 %443
      %v445 = vsel %vm301, %v425, 0.0
      %446 = vadd.xlane.f32.xlu0 %v445
      %v447 = vpop.xlane.xlu0 %446
      %v448 = vsel %vm301, %v427, 0.0
      %449 = vadd.xlane.f32.xlu0 %v448
      %v450 = vpop.xlane.xlu0 %449
      %v451 = vsel %vm301, %v429, 0.0
      %452 = vadd.xlane.f32.xlu0 %v451
      %v453 = vpop.xlane.xlu0 %452
      %v454 = vrcp.pop %v432
      %v455 = vrcp.pop %v435
      %v456 = vrcp.pop %v438
      %v457 = vrcp.pop %v441
      %v458 = vrcp.pop %v444
      %v459 = vrcp.pop %v447
      %v460 = vrcp.pop %v450
      %v461 = vrcp.pop %v453
      %v462 = vmul.f32 %v415, %v454
      %v463 = vmul.f32 %v417, %v455
      %v464 = vmul.f32 %v419, %v456
      %v465 = vmul.f32 %v421, %v457
      %v466 = vmul.f32 %v423, %v458
      %v467 = vmul.f32 %v425, %v459
      %v468 = vmul.f32 %v427, %v460
      %v469 = vmul.f32 %v429, %v461
      %v470 = vpack.c.bf16 %v463, %v462
      %v471 = vpack.c.bf16 %v465, %v464
      %v472 = vpack.c.bf16 %v467, %v466
      %v473 = vpack.c.bf16 %v469, %v468
      %474 = vrot.lane.b32.xlu0 %v300, 96
      %v475 = vpop.permute.xlu0 %474
      %v478 = vsel %vm301, %v470, 0
      %v481 = vsel %vm301, %v471, 0
      %v484 = vsel %vm301, %v472, 0
      %v487 = vsel %vm301, %v473, 0
      %489 = vmatprep.subr.bf16.mxu0 0
      %490 = vmatpush1.bf16.msra.mxu0 %v475
      %491 = vmatprep.subr.bf16.mxu0 0
      %492 = vmatpush1.bf16.msra.mxu0 0
      %493 = vmatprep.subr.bf16.mxu0 0
      %494 = vmatpush1.bf16.msra.mxu0 0
      %495 = vmatprep.subr.bf16.mxu0 0
      %496 = vmatpush1.bf16.msra.mxu0 0
      %497 = vmatprep.subr.bf16.mxu0 0
      %498 = vmatpush1.bf16.msra.mxu0 0
      %499 = vmatprep.subr.bf16.mxu0 0
      %500 = vmatpush1.bf16.msra.mxu0 0
      %501 = vmatprep.subr.bf16.mxu0 0
      %502 = vmatpush1.bf16.msra.mxu0 0
      %503 = vmatprep.subr.bf16.mxu0 0
      %504 = vmatpush1.bf16.msra.mxu0 0
      %505 = vmatprep.subr.bf16.mxu0 0
      %506 = vmatpush1.bf16.msra.mxu0 0
      %507 = vmatprep.subr.bf16.mxu0 0
      %508 = vmatpush1.bf16.msra.mxu0 0
      %509 = vmatprep.subr.bf16.mxu0 0
      %510 = vmatpush1.bf16.msra.mxu0 0
      %511 = vmatprep.subr.bf16.mxu0 0
      %512 = vmatpush1.bf16.msra.mxu0 0
      %513 = vmatprep.subr.bf16.mxu0 0
      %514 = vmatpush1.bf16.msra.mxu0 0
      %515 = vmatprep.subr.bf16.mxu0 0
      %516 = vmatpush1.bf16.msra.mxu0 0
      %517 = vmatprep.subr.bf16.mxu0 0
      %518 = vmatpush1.bf16.msra.mxu0 0
      %519 = vmatprep.subr.bf16.mxu0 0
      %520 = vmatpush1.bf16.msra.mxu0 0
      %521 = vmatprep.mubr.bf16.mxu0 0
      %522 = vmatmul.mubr.bf16.gmra.mrb[0].mxu0 %v478
      %v523 = vpop.f32.mrb[0].mxu0
      %v524 = vadd.f32 0.0, %v523
      %v525 = vpop.f32.mrb[0].mxu0
      %v526 = vpop.f32.mrb[0].mxu0
      %v527 = vadd.f32 0.0, %v526
      %v528 = vpop.f32.mrb[0].mxu0
      %529 = vmatprep.mubr.bf16.mxu0 0
      %530 = vmatmul.mubr.bf16.gmra.mrb[0].mxu0 %v481
      %v531 = vpop.f32.mrb[0].mxu0
      %v532 = vadd.f32 0.0, %v531
      %v533 = vpop.f32.mrb[0].mxu0
      %v534 = vpop.f32.mrb[0].mxu0
      %v535 = vadd.f32 0.0, %v534
      %v536 = vpop.f32.mrb[0].mxu0
      %537 = vmatprep.mubr.bf16.mxu0 0
      %538 = vmatmul.mubr.bf16.gmra.mrb[0].mxu0 %v484
      %v539 = vpop.f32.mrb[0].mxu0
      %v540 = vadd.f32 0.0, %v539
      %v541 = vpop.f32.mrb[0].mxu0
      %v542 = vpop.f32.mrb[0].mxu0
      %v543 = vadd.f32 0.0, %v542
      %v544 = vpop.f32.mrb[0].mxu0
      %545 = vmatprep.mubr.bf16.mxu0 0
      %546 = vmatmul.mubr.bf16.gmra.mrb[0].mxu0 %v487
      %v547 = vpop.f32.mrb[0].mxu0
      %v548 = vadd.f32 0.0, %v547
      %v549 = vpop.f32.mrb[0].mxu0
      %v550 = vpop.f32.mrb[0].mxu0
      %v551 = vadd.f32 0.0, %v550
      %v552 = vpop.f32.mrb[0].mxu0
      %553 = vdwg.mxu0
      %v554 = vpack.c.bf16 %v527, %v524
      %v555 = vpack.c.bf16 %v535, %v532
      %v556 = vpack.c.bf16 %v543, %v540
      %v557 = vpack.c.bf16 %v551, %v548
      %v558 = vld [vmem:[%s3] sm:$0xf]
      %v559 = vld [vmem:[%s3 + $0x4] sm:$0xf]
      %564 = vrot.lane.b32.xlu0 %v290, 112
      %v565 = vpop.permute.xlu0 %564
      %566 = vrot.lane.b32.xlu0 %v291, 112
      %v567 = vpop.permute.xlu0 %566
      %568 = vrot.lane.b32.xlu0 %v292, 112
      %v569 = vpop.permute.xlu0 %568
      %570 = vrot.lane.b32.xlu0 %v293, 112
      %v571 = vpop.permute.xlu0 %570
      %572 = vrot.lane.b32.xlu0 %v300, 112
      %v573 = vpop.permute.xlu0 %572
      %v575 = vsel %vm301, %v565, 0
      %v578 = vsel %vm301, %v567, 0
      %v581 = vsel %vm301, %v569, 0
      %v584 = vsel %vm301, %v571, 0
      %v587 = vsel %vm301, %v573, 0
      %589 = vmatprep.subr.bf16.mxu0 0
      %590 = vmatpush1.bf16.xpose.msra.mxu0 %v587
      %591 = vmatprep.subr.bf16.mxu0 0
      %592 = vmatpush1.bf16.xpose.msra.mxu0 0
      %593 = vmatprep.subr.bf16.mxu0 0
      %594 = vmatpush1.bf16.xpose.msra.mxu0 0
      %595 = vmatprep.subr.bf16.mxu0 0
      %596 = vmatpush1.bf16.xpose.msra.mxu0 0
      %597 = vmatprep.subr.bf16.mxu0 0
      %598 = vmatpush1.bf16.xpose.msra.mxu0 0
      %599 = vmatprep.subr.bf16.mxu0 0
      %600 = vmatpush1.bf16.xpose.msra.mxu0 0
      %601 = vmatprep.subr.bf16.mxu0 0
      %602 = vmatpush1.bf16.xpose.msra.mxu0 0
      %603 = vmatprep.subr.bf16.mxu0 0
      %604 = vmatpush1.bf16.xpose.msra.mxu0 0
      %605 = vmatprep.subr.bf16.mxu0 0
      %606 = vmatpush1.bf16.xpose.msra.mxu0 0
      %607 = vmatprep.subr.bf16.mxu0 0
      %608 = vmatpush1.bf16.xpose.msra.mxu0 0
      %609 = vmatprep.subr.bf16.mxu0 0
      %610 = vmatpush1.bf16.xpose.msra.mxu0 0
      %611 = vmatprep.subr.bf16.mxu0 0
      %612 = vmatpush1.bf16.xpose.msra.mxu0 0
      %613 = vmatprep.subr.bf16.mxu0 0
      %614 = vmatpush1.bf16.xpose.msra.mxu0 0
      %615 = vmatprep.subr.bf16.mxu0 0
      %616 = vmatpush1.bf16.xpose.msra.mxu0 0
      %617 = vmatprep.subr.bf16.mxu0 0
      %618 = vmatpush1.bf16.xpose.msra.mxu0 0
      %619 = vmatprep.subr.bf16.mxu0 0
      %620 = vmatpush1.bf16.xpose.msra.mxu0 0
      %621 = vmatprep.mubr.bf16.mxu0 0
      %622 = vmatmul.mubr.bf16.gmra.mrb[0].mxu0 %v575
      %v623 = vpop.f32.mrb[0].mxu0
      %v624 = vadd.f32 0.0, %v623
      %v625 = vpop.f32.mrb[0].mxu0
      %v626 = vpop.f32.mrb[0].mxu0
      %v627 = vadd.f32 0.0, %v626
      %v628 = vpop.f32.mrb[0].mxu0
      %629 = vmatprep.mubr.bf16.mxu0 0
      %630 = vmatmul.mubr.bf16.gmra.mrb[0].mxu0 %v578
      %v631 = vpop.f32.mrb[0].mxu0
      %v632 = vadd.f32 0.0, %v631
      %v633 = vpop.f32.mrb[0].mxu0
      %v634 = vpop.f32.mrb[0].mxu0
      %v635 = vadd.f32 0.0, %v634
      %v636 = vpop.f32.mrb[0].mxu0
      %637 = vmatprep.mubr.bf16.mxu0 0
      %638 = vmatmul.mubr.bf16.gmra.mrb[0].mxu0 %v581
      %v639 = vpop.f32.mrb[0].mxu0
      %v640 = vadd.f32 0.0, %v639
      %v641 = vpop.f32.mrb[0].mxu0
      %v642 = vpop.f32.mrb[0].mxu0
      %v643 = vadd.f32 0.0, %v642
      %v644 = vpop.f32.mrb[0].mxu0
      %645 = vmatprep.mubr.bf16.mxu0 0
      %646 = vmatmul.mubr.bf16.gmra.mrb[0].mxu0 %v584
      %v647 = vpop.f32.mrb[0].mxu0
      %v648 = vadd.f32 0.0, %v647
      %v649 = vpop.f32.mrb[0].mxu0
      %v650 = vpop.f32.mrb[0].mxu0
      %v651 = vadd.f32 0.0, %v650
      %v652 = vpop.f32.mrb[0].mxu0
      %653 = vdwg.mxu0
      %v654 = vsel %vm301, %v624, -inf
      %655 = vmax.xlane.f32.xlu0 %v654
      %v656 = vpop.xlane.xlu0 %655
      %v657 = vsel %vm301, %v627, -inf
      %658 = vmax.xlane.f32.xlu0 %v657
      %v659 = vpop.xlane.xlu0 %658
      %v660 = vsel %vm301, %v632, -inf
      %661 = vmax.xlane.f32.xlu0 %v660
      %v662 = vpop.xlane.xlu0 %661
      %v663 = vsel %vm301, %v635, -inf
      %664 = vmax.xlane.f32.xlu0 %v663
      %v665 = vpop.xlane.xlu0 %664
      %v666 = vsel %vm301, %v640, -inf
      %667 = vmax.xlane.f32.xlu0 %v666
      %v668 = vpop.xlane.xlu0 %667
      %v669 = vsel %vm301, %v643, -inf
      %670 = vmax.xlane.f32.xlu0 %v669
      %v671 = vpop.xlane.xlu0 %670
      %v672 = vsel %vm301, %v648, -inf
      %673 = vmax.xlane.f32.xlu0 %v672
      %v674 = vpop.xlane.xlu0 %673
      %v675 = vsel %vm301, %v651, -inf
      %676 = vmax.xlane.f32.xlu0 %v675
      %v677 = vpop.xlane.xlu0 %676
      %v678 = vsub.f32 %v624, %v656
      %v679 = vsub.f32 %v627, %v659
      %v680 = vsub.f32 %v632, %v662
      %v681 = vsub.f32 %v635, %v665
      %v682 = vsub.f32 %v640, %v668
      %v683 = vsub.f32 %v643, %v671
      %v684 = vsub.f32 %v648, %v674
      %v685 = vsub.f32 %v651, %v677
      %v686 = vmul.f32 %v678, 1.442695
      %v687 = vpow.pop %v686
      %v688 = vmul.f32 %v679, 1.442695
      %v689 = vpow.pop %v688
      %v690 = vmul.f32 %v680, 1.442695
      %v691 = vpow.pop %v690
      %v692 = vmul.f32 %v681, 1.442695
      %v693 = vpow.pop %v692
      %v694 = vmul.f32 %v682, 1.442695
      %v695 = vpow.pop %v694
      %v696 = vmul.f32 %v683, 1.442695
      %v697 = vpow.pop %v696
      %v698 = vmul.f32 %v684, 1.442695
      %v699 = vpow.pop %v698
      %v700 = vmul.f32 %v685, 1.442695
      %v701 = vpow.pop %v700
      %v702 = vsel %vm301, %v687, 0.0
      %703 = vadd.xlane.f32.xlu0 %v702
      %v704 = vpop.xlane.xlu0 %703
      %v705 = vsel %vm301, %v689, 0.0
      %706 = vadd.xlane.f32.xlu0 %v705
      %v707 = vpop.xlane.xlu0 %706
      %v708 = vsel %vm301, %v691, 0.0
      %709 = vadd.xlane.f32.xlu0 %v708
      %v710 = vpop.xlane.xlu0 %709
      %v711 = vsel %vm301, %v693, 0.0
      %712 = vadd.xlane.f32.xlu0 %v711
      %v713 = vpop.xlane.xlu0 %712
      %v714 = vsel %vm301, %v695, 0.0
      %715 = vadd.xlane.f32.xlu0 %v714
      %v716 = vpop.xlane.xlu0 %715
      %v717 = vsel %vm301, %v697, 0.0
      %718 = vadd.xlane.f32.xlu0 %v717
      %v719 = vpop.xlane.xlu0 %718
      %v720 = vsel %vm301, %v699, 0.0
      %721 = vadd.xlane.f32.xlu0 %v720
      %v722 = vpop.xlane.xlu0 %721
      %v723 = vsel %vm301, %v701, 0.0
      %724 = vadd.xlane.f32.xlu0 %v723
      %v725 = vpop.xlane.xlu0 %724
      %v726 = vrcp.pop %v704
      %v727 = vrcp.pop %v707
      %v728 = vrcp.pop %v710
      %v729 = vrcp.pop %v713
      %v730 = vrcp.pop %v716
      %v731 = vrcp.pop %v719
      %v732 = vrcp.pop %v722
      %v733 = vrcp.pop %v725
      %v734 = vmul.f32 %v687, %v726
      %v735 = vmul.f32 %v689, %v727
      %v736 = vmul.f32 %v691, %v728
      %v737 = vmul.f32 %v693, %v729
      %v738 = vmul.f32 %v695, %v730
      %v739 = vmul.f32 %v697, %v731
      %v740 = vmul.f32 %v699, %v732
      %v741 = vmul.f32 %v701, %v733
      %v742 = vpack.c.bf16 %v735, %v734
      %v743 = vpack.c.bf16 %v737, %v736
      %v744 = vpack.c.bf16 %v739, %v738
      %v745 = vpack.c.bf16 %v741, %v740
      %746 = vrot.lane.b32.xlu0 %v300, 80
      %v747 = vpop.permute.xlu0 %746
      %v750 = vsel %vm301, %v742, 0
      %v753 = vsel %vm301, %v743, 0
      %v756 = vsel %vm301, %v744, 0
      %v759 = vsel %vm301, %v745, 0
      %761 = vmatprep.subr.bf16.mxu0 0
      %762 = vmatpush1.bf16.msra.mxu0 %v747
      %763 = vmatprep.subr.bf16.mxu0 0
      %764 = vmatpush1.bf16.msra.mxu0 0
      %765 = vmatprep.subr.bf16.mxu0 0
      %766 = vmatpush1.bf16.msra.mxu0 0
      %767 = vmatprep.subr.bf16.mxu0 0
      %768 = vmatpush1.bf16.msra.mxu0 0
      %769 = vmatprep.subr.bf16.mxu0 0
      %770 = vmatpush1.bf16.msra.mxu0 0
      %771 = vmatprep.subr.bf16.mxu0 0
      %772 = vmatpush1.bf16.msra.mxu0 0
      %773 = vmatprep.subr.bf16.mxu0 0
      %774 = vmatpush1.bf16.msra.mxu0 0
      %775 = vmatprep.subr.bf16.mxu0 0
      %776 = vmatpush1.bf16.msra.mxu0 0
      %777 = vmatprep.subr.bf16.mxu0 0
      %778 = vmatpush1.bf16.msra.mxu0 0
      %779 = vmatprep.subr.bf16.mxu0 0
      %780 = vmatpush1.bf16.msra.mxu0 0
      %781 = vmatprep.subr.bf16.mxu0 0
      %782 = vmatpush1.bf16.msra.mxu0 0
      %783 = vmatprep.subr.bf16.mxu0 0
      %784 = vmatpush1.bf16.msra.mxu0 0
      %785 = vmatprep.subr.bf16.mxu0 0
      %786 = vmatpush1.bf16.msra.mxu0 0
      %787 = vmatprep.subr.bf16.mxu0 0
      %788 = vmatpush1.bf16.msra.mxu0 0
      %789 = vmatprep.subr.bf16.mxu0 0
      %790 = vmatpush1.bf16.msra.mxu0 0
      %791 = vmatprep.subr.bf16.mxu0 0
      %792 = vmatpush1.bf16.msra.mxu0 0
      %793 = vmatprep.mubr.bf16.mxu0 0
      %794 = vmatmul.mubr.bf16.gmra.mrb[0].mxu0 %v750
      %v795 = vpop.f32.mrb[0].mxu0
      %v796 = vadd.f32 0.0, %v795
      %v797 = vpop.f32.mrb[0].mxu0
      %v798 = vpop.f32.mrb[0].mxu0
      %v799 = vadd.f32 0.0, %v798
      %v800 = vpop.f32.mrb[0].mxu0
      %801 = vmatprep.mubr.bf16.mxu0 0
      %802 = vmatmul.mubr.bf16.gmra.mrb[0].mxu0 %v753
      %v803 = vpop.f32.mrb[0].mxu0
      %v804 = vadd.f32 0.0, %v803
      %v805 = vpop.f32.mrb[0].mxu0
      %v806 = vpop.f32.mrb[0].mxu0
      %v807 = vadd.f32 0.0, %v806
      %v808 = vpop.f32.mrb[0].mxu0
      %809 = vmatprep.mubr.bf16.mxu0 0
      %810 = vmatmul.mubr.bf16.gmra.mrb[0].mxu0 %v756
      %v811 = vpop.f32.mrb[0].mxu0
      %v812 = vadd.f32 0.0, %v811
      %v813 = vpop.f32.mrb[0].mxu0
      %v814 = vpop.f32.mrb[0].mxu0
      %v815 = vadd.f32 0.0, %v814
      %v816 = vpop.f32.mrb[0].mxu0
      %817 = vmatprep.mubr.bf16.mxu0 0
      %818 = vmatmul.mubr.bf16.gmra.mrb[0].mxu0 %v759
      %v819 = vpop.f32.mrb[0].mxu0
      %v820 = vadd.f32 0.0, %v819
      %v821 = vpop.f32.mrb[0].mxu0
      %v822 = vpop.f32.mrb[0].mxu0
      %v823 = vadd.f32 0.0, %v822
      %v824 = vpop.f32.mrb[0].mxu0
      %825 = vdwg.mxu0
      %v826 = vpack.c.bf16 %v799, %v796
      %v827 = vpack.c.bf16 %v807, %v804
      %v828 = vpack.c.bf16 %v815, %v812
      %v829 = vpack.c.bf16 %v823, %v820
      %v830 = vld [vmem:[%s3 + $0x8] sm:$0xf]
      %v831 = vld [vmem:[%s3 + $0xc] sm:$0xf]
      %v834 = vunpack.c.l.b16 %v830
      %v835 = vunpack.c.l.b16 %v831
      %v836 = vpack.c.b16 %v835, %v834
      %v839 = vsel %vm301, %v826, 0
      %v842 = vsel %vm301, %v827, 0
      %v845 = vsel %vm301, %v828, 0
      %v848 = vsel %vm301, %v829, 0
      %850 = vmatprep.subr.bf16.mxu0 0
      %851 = vmatpush1.bf16.msra.mxu0 %v836
      %852 = vmatprep.subr.bf16.mxu0 0
      %853 = vmatpush1.bf16.msra.mxu0 0
      %854 = vmatprep.subr.bf16.mxu0 0
      %855 = vmatpush1.bf16.msra.mxu0 0
      %856 = vmatprep.subr.bf16.mxu0 0
      %857 = vmatpush1.bf16.msra.mxu0 0
      %858 = vmatprep.subr.bf16.mxu0 0
      %859 = vmatpush1.bf16.msra.mxu0 0
      %860 = vmatprep.subr.bf16.mxu0 0
      %861 = vmatpush1.bf16.msra.mxu0 0
      %862 = vmatprep.subr.bf16.mxu0 0
      %863 = vmatpush1.bf16.msra.mxu0 0
      %864 = vmatprep.subr.bf16.mxu0 0
      %865 = vmatpush1.bf16.msra.mxu0 0
      %866 = vmatprep.subr.bf16.mxu0 0
      %867 = vmatpush1.bf16.msra.mxu0 0
      %868 = vmatprep.subr.bf16.mxu0 0
      %869 = vmatpush1.bf16.msra.mxu0 0
      %870 = vmatprep.subr.bf16.mxu0 0
      %871 = vmatpush1.bf16.msra.mxu0 0
      %872 = vmatprep.subr.bf16.mxu0 0
      %873 = vmatpush1.bf16.msra.mxu0 0
      %874 = vmatprep.subr.bf16.mxu0 0
      %875 = vmatpush1.bf16.msra.mxu0 0
      %876 = vmatprep.subr.bf16.mxu0 0
      %877 = vmatpush1.bf16.msra.mxu0 0
      %878 = vmatprep.subr.bf16.mxu0 0
      %879 = vmatpush1.bf16.msra.mxu0 0
      %880 = vmatprep.subr.bf16.mxu0 0
      %881 = vmatpush1.bf16.msra.mxu0 0
      %882 = vmatprep.mubr.bf16.mxu0 0
      %883 = vmatmul.mubr.bf16.gmra.mrb[0].mxu0 %v839
      %v884 = vpop.f32.mrb[0].mxu0
      %v885 = vadd.f32 0.0, %v884
      %v886 = vpop.f32.mrb[0].mxu0
      %v887 = vpop.f32.mrb[0].mxu0
      %v888 = vadd.f32 0.0, %v887
      %v889 = vpop.f32.mrb[0].mxu0
      %890 = vmatprep.mubr.bf16.mxu0 0
      %891 = vmatmul.mubr.bf16.gmra.mrb[0].mxu0 %v842
      %v892 = vpop.f32.mrb[0].mxu0
      %v893 = vadd.f32 0.0, %v892
      %v894 = vpop.f32.mrb[0].mxu0
      %v895 = vpop.f32.mrb[0].mxu0
      %v896 = vadd.f32 0.0, %v895
      %v897 = vpop.f32.mrb[0].mxu0
      %898 = vmatprep.mubr.bf16.mxu0 0
      %899 = vmatmul.mubr.bf16.gmra.mrb[0].mxu0 %v845
      %v900 = vpop.f32.mrb[0].mxu0
      %v901 = vadd.f32 0.0, %v900
      %v902 = vpop.f32.mrb[0].mxu0
      %v903 = vpop.f32.mrb[0].mxu0
      %v904 = vadd.f32 0.0, %v903
      %v905 = vpop.f32.mrb[0].mxu0
      %906 = vmatprep.mubr.bf16.mxu0 0
      %907 = vmatmul.mubr.bf16.gmra.mrb[0].mxu0 %v848
      %v908 = vpop.f32.mrb[0].mxu0
      %v909 = vadd.f32 0.0, %v908
      %v910 = vpop.f32.mrb[0].mxu0
      %v911 = vpop.f32.mrb[0].mxu0
      %v912 = vadd.f32 0.0, %v911
      %v913 = vpop.f32.mrb[0].mxu0
      %914 = vdwg.mxu0
      %v917 = vunpack.c.l.b16 %v558
      %v918 = vunpack.c.l.b16 %v559
      %v919 = vpack.c.b16 %v918, %v917
      %v922 = vsel %vm301, %v554, 0
      %v925 = vsel %vm301, %v555, 0
      %v928 = vsel %vm301, %v556, 0
      %v931 = vsel %vm301, %v557, 0
      %933 = vmatprep.subr.bf16.mxu0 0
      %934 = vmatpush1.bf16.msra.mxu0 %v919
      %935 = vmatprep.subr.bf16.mxu0 0
      %936 = vmatpush1.bf16.msra.mxu0 0
      %937 = vmatprep.subr.bf16.mxu0 0
      %938 = vmatpush1.bf16.msra.mxu0 0
      %939 = vmatprep.subr.bf16.mxu0 0
      %940 = vmatpush1.bf16.msra.mxu0 0
      %941 = vmatprep.subr.bf16.mxu0 0
      %942 = vmatpush1.bf16.msra.mxu0 0
      %943 = vmatprep.subr.bf16.mxu0 0
      %944 = vmatpush1.bf16.msra.mxu0 0
      %945 = vmatprep.subr.bf16.mxu0 0
      %946 = vmatpush1.bf16.msra.mxu0 0
      %947 = vmatprep.subr.bf16.mxu0 0
      %948 = vmatpush1.bf16.msra.mxu0 0
      %949 = vmatprep.subr.bf16.mxu0 0
      %950 = vmatpush1.bf16.msra.mxu0 0
      %951 = vmatprep.subr.bf16.mxu0 0
      %952 = vmatpush1.bf16.msra.mxu0 0
      %953 = vmatprep.subr.bf16.mxu0 0
      %954 = vmatpush1.bf16.msra.mxu0 0
      %955 = vmatprep.subr.bf16.mxu0 0
      %956 = vmatpush1.bf16.msra.mxu0 0
      %957 = vmatprep.subr.bf16.mxu0 0
      %958 = vmatpush1.bf16.msra.mxu0 0
      %959 = vmatprep.subr.bf16.mxu0 0
      %960 = vmatpush1.bf16.msra.mxu0 0
      %961 = vmatprep.subr.bf16.mxu0 0
      %962 = vmatpush1.bf16.msra.mxu0 0
      %963 = vmatprep.subr.bf16.mxu0 0
      %964 = vmatpush1.bf16.msra.mxu0 0
      %965 = vmatprep.mubr.bf16.mxu0 0
      %966 = vmatmul.mubr.bf16.gmra.mrb[0].mxu0 %v922
      %v967 = vpop.f32.mrb[0].mxu0
      %v968 = vadd.f32 %v885, %v967
      %v969 = vpop.f32.mrb[0].mxu0
      %v970 = vpop.f32.mrb[0].mxu0
      %v971 = vadd.f32 %v888, %v970
      %v972 = vpop.f32.mrb[0].mxu0
      %973 = vmatprep.mubr.bf16.mxu0 0
      %974 = vmatmul.mubr.bf16.gmra.mrb[0].mxu0 %v925
      %v975 = vpop.f32.mrb[0].mxu0
      %v976 = vadd.f32 %v893, %v975
      %v977 = vpop.f32.mrb[0].mxu0
      %v978 = vpop.f32.mrb[0].mxu0
      %v979 = vadd.f32 %v896, %v978
      %v980 = vpop.f32.mrb[0].mxu0
      %981 = vmatprep.mubr.bf16.mxu0 0
      %982 = vmatmul.mubr.bf16.gmra.mrb[0].mxu0 %v928
      %v983 = vpop.f32.mrb[0].mxu0
      %v984 = vadd.f32 %v901, %v983
      %v985 = vpop.f32.mrb[0].mxu0
      %v986 = vpop.f32.mrb[0].mxu0
      %v987 = vadd.f32 %v904, %v986
      %v988 = vpop.f32.mrb[0].mxu0
      %989 = vmatprep.mubr.bf16.mxu0 0
      %990 = vmatmul.mubr.bf16.gmra.mrb[0].mxu0 %v931
      %v991 = vpop.f32.mrb[0].mxu0
      %v992 = vadd.f32 %v909, %v991
      %v993 = vpop.f32.mrb[0].mxu0
      %v994 = vpop.f32.mrb[0].mxu0
      %v995 = vadd.f32 %v912, %v994
      %v996 = vpop.f32.mrb[0].mxu0
      %997 = vdwg.mxu0
      %v998 = vld [vmem:[%s4] sm:$0x1]
      %v999 = vlaneseq
      %v1000 = vshrl.u32 %v999, 7
      %v1001 = vsub.s32 0, %v1000
      %v1002 = vrot.slane %v998, %v1001
      %v1003 = vadd.f32 %v968, %v1002
      %v1004 = vadd.f32 %v971, %v1002
      %v1005 = vadd.f32 %v976, %v1002
      %v1006 = vadd.f32 %v979, %v1002
      %v1007 = vadd.f32 %v984, %v1002
      %v1008 = vadd.f32 %v987, %v1002
      %v1009 = vadd.f32 %v992, %v1002
      %v1010 = vadd.f32 %v995, %v1002
      %v1011 = vld [vmem:[%s259] sm:$0xff]
      %v1012 = vld [vmem:[%s259 + $0x8] sm:$0xff]
      %v1013 = vld [vmem:[%s259 + $0x10] sm:$0xff]
      %v1014 = vld [vmem:[%s259 + $0x18] sm:$0xff]
      %v1015 = vld [vmem:[%s259 + $0x20] sm:$0xff]
      %v1016 = vld [vmem:[%s259 + $0x28] sm:$0xff]
      %v1017 = vld [vmem:[%s259 + $0x30] sm:$0xff]
      %v1018 = vld [vmem:[%s259 + $0x38] sm:$0xff]
      %v1019 = vld [vmem:[%s4 + $0x1] sm:$0x1]
      %v1020 = vlaneseq
      %v1021 = vshrl.u32 %v1020, 7
      %v1022 = vsub.s32 0, %v1021
      %v1023 = vrot.slane %v1019, %v1022
      %v1024 = vmul.f32 %v1023, %v1003
      %v1025 = vmul.f32 %v1023, %v1004
      %v1026 = vmul.f32 %v1023, %v1005
      %v1027 = vmul.f32 %v1023, %v1006
      %v1028 = vmul.f32 %v1023, %v1007
      %v1029 = vmul.f32 %v1023, %v1008
      %v1030 = vmul.f32 %v1023, %v1009
      %v1031 = vmul.f32 %v1023, %v1010
      %v1032 = vadd.f32 %v1011, %v1024
      %v1033 = vadd.f32 %v1012, %v1025
      %v1034 = vadd.f32 %v1013, %v1026
      %v1035 = vadd.f32 %v1014, %v1027
      %v1036 = vadd.f32 %v1015, %v1028
      %v1037 = vadd.f32 %v1016, %v1029
      %v1038 = vadd.f32 %v1017, %v1030
      %v1039 = vadd.f32 %v1018, %v1031
      %1040 = vst [vmem:[%s264] sm:$0xff] %v1032
      %1041 = vst [vmem:[%s264 + $0x8] sm:$0xff] %v1033
      %1042 = vst [vmem:[%s264 + $0x10] sm:$0xff] %v1034
      %1043 = vst [vmem:[%s264 + $0x18] sm:$0xff] %v1035
      %1044 = vst [vmem:[%s264 + $0x20] sm:$0xff] %v1036
      %1045 = vst [vmem:[%s264 + $0x28] sm:$0xff] %v1037
      %1046 = vst [vmem:[%s264 + $0x30] sm:$0xff] %v1038
      %1047 = vst [vmem:[%s264 + $0x38] sm:$0xff] %v1039
      %p1048 = scmp.lt.s32.totalorder %s16, 1
      %s1049 = scalar_select %p1048, %s16, 1
      %s1050 = smul.addr %s1049, 8
      %s1051 = smul.addr %s1050, 8
      %s1052 = scalar_lea.vmem %s5, %s1051
      // Predicated region
      $region41: #{pvt_v2_block.10} parent=39 // pred_check
        %p1053 = pneg %p154
      $region42: #{pvt_v2_block.10} parent=39 // pred_check_branch
        %1055 = sbr.rel (%p1053) target = $region44
      $region43: #{pvt_v2_block.10} parent=39 // pred_region
        _
      $region44: #{pvt_v2_block.10} parent=39 // pred_fallthru
        _
    $region40: #{pvt_v2_block.10} parent=5 // pred_fallthru
      _
    %p1056 = scmp.le.s32.totalorder 2, %s11
    // Predicated region
    $region45: #{pvt_v2_block.10} parent=5 // pred_check
      %p1057 = pneg %p1056
    $region46: #{pvt_v2_block.10} parent=5 // pred_check_branch
      %1059 = sbr.rel (%p1057) target = $region48
    $region47: #{pvt_v2_block.10} parent=5 // pred_region
      %s1060 = ssub.s32 %s11, 2
      // Predicated region
      $region49: #{pvt_v2_block.10} parent=47 // pred_check
        %p1061 = pneg %p160
      $region50: #{pvt_v2_block.10} parent=47 // pred_check_branch
        %1063 = sbr.rel (%p1061) target = $region52
      $region51: #{pvt_v2_block.10} parent=47 // pred_region
        %p1064 = scmp.lt.s32.totalorder %s17, 1
        %s1065 = scalar_select %p1064, %s17, 1
        %s1066 = smul.addr %s1065, 8
        %s1067 = smul.addr %s1066, 8
        %s1068 = scalar_lea.vmem %s5, %s1067
      $region52: #{pvt_v2_block.10} parent=47 // pred_fallthru
        _
    $region48: #{pvt_v2_block.10} parent=5 // pred_fallthru
      _
  $region6: #{pvt_v2_block.10} parent=0 // loop_footer
    %s15 = sadd.s32 1, %s11
  $region7: #{pvt_v2_block.10} parent=0 // loop_footer_branch
    %10 = sbr.rel target = $region3
  $region8: #{pvt_v2_block.10} parent=0 // loop_exit
    _

// kernel: pvt_v2_block.13
$region0: #{pvt_v2_block.13}
  #allocation0 [shape = 'u32[]', space=smem, size = 0x4, offset = 0x4, fixed_abs, tag = 'smem constant byte address 0x4 - core index']
  #allocation1 [shape = 'u32[144,128]{1,0:T(1,128)}', space=vmem, size = 0x12000, scoped, tag = 'internal scratch']
  %s0 = inlined_call_operand.vmem [shape: bf16[128,128], index: 0, kind: input, shape index: {}]
  %s1 = inlined_call_operand.vmem [shape: bf16[128,128], index: 1, kind: input, shape index: {}]
  %s2 = inlined_call_operand.vmem [shape: f32[2,128], index: 2, kind: input, shape index: {}]
  %s3 = inlined_call_operand.vmem [shape: f32[128,128], index: 3, kind: input, shape index: {}]
  %s4 = inlined_call_operand.hbm [shape: f32[128,128], index: 4, kind: output, shape index: {}]
  %s5 = sld [smem:[#allocation0]]
  $region26: #{pvt_v2_block.13} parent=0
    _
  %s7 = ssub.s32 1, %s5
  %s8 = scalar_select 0, %s7, %s5
  $region1: #{pvt_v2_block.13} parent=0
    #allocation2 [shape = 'u8[65536]{0}', space=vmem, size = 0x10000, scoped, tag = 'output window, operand 0, single buffered']
    #allocation3 [shape = 's32[1]{0}', space=sflag, size = 0x4, scoped, tag = 'scoped memory for pvt_v2_block.13']
    %9 = vsyncpa [#allocation3], 0
    // Predicated region
    $region2: #{pvt_v2_block.13} parent=1 // pred_check
      _
    $region3: #{pvt_v2_block.13} parent=1 // pred_check_branch
      %11 = sbr.rel (0) target = $region5
    $region4: #{pvt_v2_block.13} parent=1 // pred_region
      _
    $region5: #{pvt_v2_block.13} parent=1 // pred_fallthru
      _
    // Predicated region
    $region6: #{pvt_v2_block.13} parent=1 // pred_check
      _
    $region7: #{pvt_v2_block.13} parent=1 // pred_check_branch
      %13 = sbr.rel (0) target = $region9
    $region8: #{pvt_v2_block.13} parent=1 // pred_region
      _
    $region9: #{pvt_v2_block.13} parent=1 // pred_fallthru
      _
    // Predicated region
    $region10: #{pvt_v2_block.13} parent=1 // pred_check
      _
    $region11: #{pvt_v2_block.13} parent=1 // pred_check_branch
      %15 = sbr.rel (0) target = $region13
    $region12: #{pvt_v2_block.13} parent=1 // pred_region
      _
    $region13: #{pvt_v2_block.13} parent=1 // pred_fallthru
      _
    // Predicated region
    $region14: #{pvt_v2_block.13} parent=1 // pred_check
      _
    $region15: #{pvt_v2_block.13} parent=1 // pred_check_branch
      %17 = sbr.rel (0) target = $region17
    $region16: #{pvt_v2_block.13} parent=1 // pred_region
      _
    $region17: #{pvt_v2_block.13} parent=1 // pred_fallthru
      _
    %v19 = vld [vmem:[%s0] sm:$0xf]
    %v20 = vld [vmem:[%s0 + $0x4] sm:$0xf]
    %v21 = vld [vmem:[%s0 + $0x8] sm:$0xf]
    %v22 = vld [vmem:[%s0 + $0xc] sm:$0xf]
    %v23 = vld [vmem:[%s0 + $0x10] sm:$0xf]
    %v24 = vld [vmem:[%s0 + $0x14] sm:$0xf]
    %v25 = vld [vmem:[%s0 + $0x18] sm:$0xf]
    %v26 = vld [vmem:[%s0 + $0x1c] sm:$0xf]
    %v27 = vld [vmem:[%s0 + $0x20] sm:$0xf]
    %v28 = vld [vmem:[%s0 + $0x24] sm:$0xf]
    %v29 = vld [vmem:[%s0 + $0x28] sm:$0xf]
    %v30 = vld [vmem:[%s0 + $0x2c] sm:$0xf]
    %v31 = vld [vmem:[%s0 + $0x30] sm:$0xf]
    %v32 = vld [vmem:[%s0 + $0x34] sm:$0xf]
    %v33 = vld [vmem:[%s0 + $0x38] sm:$0xf]
    %v34 = vld [vmem:[%s0 + $0x3c] sm:$0xf]
    %v35 = vld [vmem:[%s1] sm:$0xf]
    %v36 = vld [vmem:[%s1 + $0x4] sm:$0xf]
    %v37 = vld [vmem:[%s1 + $0x8] sm:$0xf]
    %v38 = vld [vmem:[%s1 + $0xc] sm:$0xf]
    %v39 = vld [vmem:[%s1 + $0x10] sm:$0xf]
    %v40 = vld [vmem:[%s1 + $0x14] sm:$0xf]
    %v41 = vld [vmem:[%s1 + $0x18] sm:$0xf]
    %v42 = vld [vmem:[%s1 + $0x1c] sm:$0xf]
    %v43 = vld [vmem:[%s1 + $0x20] sm:$0xf]
    %v44 = vld [vmem:[%s1 + $0x24] sm:$0xf]
    %v45 = vld [vmem:[%s1 + $0x28] sm:$0xf]
    %v46 = vld [vmem:[%s1 + $0x2c] sm:$0xf]
    %v47 = vld [vmem:[%s1 + $0x30] sm:$0xf]
    %v48 = vld [vmem:[%s1 + $0x34] sm:$0xf]
    %v49 = vld [vmem:[%s1 + $0x38] sm:$0xf]
    %v50 = vld [vmem:[%s1 + $0x3c] sm:$0xf]
    %v51 = vld [vmem:[%s2] sm:$0x1]
    %v52 = vlaneseq
    %v53 = vshrl.u32 %v52, 7
    %v54 = vsub.s32 0, %v53
    %v55 = vrot.slane %v51, %v54
    %v72 = vunpack.c.l.b16 %v19
    %v73 = vunpack.c.l.b16 %v20
    %v74 = vunpack.c.l.b16 %v21
    %v75 = vunpack.c.l.b16 %v22
    %v76 = vunpack.c.l.b16 %v23
    %v77 = vunpack.c.l.b16 %v24
    %v78 = vunpack.c.l.b16 %v25
    %v79 = vunpack.c.l.b16 %v26
    %v80 = vunpack.c.l.b16 %v27
    %v81 = vunpack.c.l.b16 %v28
    %v82 = vunpack.c.l.b16 %v29
    %v83 = vunpack.c.l.b16 %v30
    %v84 = vunpack.c.l.b16 %v31
    %v85 = vunpack.c.l.b16 %v32
    %v86 = vunpack.c.l.b16 %v33
    %v87 = vunpack.c.l.b16 %v34
    %v88 = vpack.c.b16 %v73, %v72
    %v89 = vpack.c.b16 %v75, %v74
    %v90 = vpack.c.b16 %v77, %v76
    %v91 = vpack.c.b16 %v79, %v78
    %v92 = vpack.c.b16 %v81, %v80
    %v93 = vpack.c.b16 %v83, %v82
    %v94 = vpack.c.b16 %v85, %v84
    %v95 = vpack.c.b16 %v87, %v86
    %v120 = vunpack.c.l.b16 %v35
    %v121 = vunpack.c.l.b16 %v36
    %v122 = vunpack.c.l.b16 %v37
    %v123 = vunpack.c.l.b16 %v38
    %v124 = vunpack.c.l.b16 %v39
    %v125 = vunpack.c.l.b16 %v40
    %v126 = vunpack.c.l.b16 %v41
    %v127 = vunpack.c.l.b16 %v42
    %v128 = vunpack.c.l.b16 %v43
    %v129 = vunpack.c.l.b16 %v44
    %v130 = vunpack.c.l.b16 %v45
    %v131 = vunpack.c.l.b16 %v46
    %v132 = vunpack.c.l.b16 %v47
    %v133 = vunpack.c.l.b16 %v48
    %v134 = vunpack.c.l.b16 %v49
    %v135 = vunpack.c.l.b16 %v50
    %v136 = vpack.c.b16 %v121, %v120
    %v137 = vpack.c.b16 %v123, %v122
    %v138 = vpack.c.b16 %v125, %v124
    %v139 = vpack.c.b16 %v127, %v126
    %v140 = vpack.c.b16 %v129, %v128
    %v141 = vpack.c.b16 %v131, %v130
    %v142 = vpack.c.b16 %v133, %v132
    %v143 = vpack.c.b16 %v135, %v134
    %152 = vmatprep.subr.bf16.mxu0 0
    %153 = vmatpush1.bf16.msra.mxu0 %v136
    %154 = vmatprep.subr.bf16.mxu0 0
    %155 = vmatpush1.bf16.msra.mxu0 %v137
    %156 = vmatprep.subr.bf16.mxu0 0
    %157 = vmatpush1.bf16.msra.mxu0 %v138
    %158 = vmatprep.subr.bf16.mxu0 0
    %159 = vmatpush1.bf16.msra.mxu0 %v139
    %160 = vmatprep.subr.bf16.mxu0 0
    %161 = vmatpush1.bf16.msra.mxu0 %v140
    %162 = vmatprep.subr.bf16.mxu0 0
    %163 = vmatpush1.bf16.msra.mxu0 %v141
    %164 = vmatprep.subr.bf16.mxu0 0
    %165 = vmatpush1.bf16.msra.mxu0 %v142
    %166 = vmatprep.subr.bf16.mxu0 0
    %167 = vmatpush1.bf16.msra.mxu0 %v143
    %168 = vmatprep.subr.bf16.mxu0 0
    %169 = vmatpush1.bf16.msra.mxu0 0
    %170 = vmatprep.subr.bf16.mxu0 0
    %171 = vmatpush1.bf16.msra.mxu0 0
    %172 = vmatprep.subr.bf16.mxu0 0
    %173 = vmatpush1.bf16.msra.mxu0 0
    %174 = vmatprep.subr.bf16.mxu0 0
    %175 = vmatpush1.bf16.msra.mxu0 0
    %176 = vmatprep.subr.bf16.mxu0 0
    %177 = vmatpush1.bf16.msra.mxu0 0
    %178 = vmatprep.subr.bf16.mxu0 0
    %179 = vmatpush1.bf16.msra.mxu0 0
    %180 = vmatprep.subr.bf16.mxu0 0
    %181 = vmatpush1.bf16.msra.mxu0 0
    %182 = vmatprep.subr.bf16.mxu0 0
    %183 = vmatpush1.bf16.msra.mxu0 0
    %184 = vmatprep.mubr.bf16.mxu0 0
    %185 = vmatmul.mubr.bf16.gmra.mrb[0].mxu0 %v88
    %v186 = vpop.f32.mrb[0].mxu0
    %v187 = vadd.f32 %v55, %v186
    %v188 = vpop.f32.mrb[0].mxu0
    %v189 = vpop.f32.mrb[0].mxu0
    %v190 = vadd.f32 %v55, %v189
    %v191 = vpop.f32.mrb[0].mxu0
    %192 = vmatprep.mubr.bf16.mxu0 0
    %193 = vmatmul.mubr.bf16.gmra.mrb[0].mxu0 %v89
    %v194 = vpop.f32.mrb[0].mxu0
    %v195 = vadd.f32 %v55, %v194
    %v196 = vpop.f32.mrb[0].mxu0
    %v197 = vpop.f32.mrb[0].mxu0
    %v198 = vadd.f32 %v55, %v197
    %v199 = vpop.f32.mrb[0].mxu0
    %200 = vmatprep.mubr.bf16.mxu0 0
    %201 = vmatmul.mubr.bf16.gmra.mrb[0].mxu0 %v90
    %v202 = vpop.f32.mrb[0].mxu0
    %v203 = vadd.f32 %v55, %v202
    %v204 = vpop.f32.mrb[0].mxu0
    %v205 = vpop.f32.mrb[0].mxu0
    %v206 = vadd.f32 %v55, %v205
    %v207 = vpop.f32.mrb[0].mxu0
    %208 = vmatprep.mubr.bf16.mxu0 0
    %209 = vmatmul.mubr.bf16.gmra.mrb[0].mxu0 %v91
    %v210 = vpop.f32.mrb[0].mxu0
    %v211 = vadd.f32 %v55, %v210
    %v212 = vpop.f32.mrb[0].mxu0
    %v213 = vpop.f32.mrb[0].mxu0
    %v214 = vadd.f32 %v55, %v213
    %v215 = vpop.f32.mrb[0].mxu0
    %216 = vmatprep.mubr.bf16.mxu0 0
    %217 = vmatmul.mubr.bf16.gmra.mrb[0].mxu0 %v92
    %v218 = vpop.f32.mrb[0].mxu0
    %v219 = vadd.f32 %v55, %v218
    %v220 = vpop.f32.mrb[0].mxu0
    %v221 = vpop.f32.mrb[0].mxu0
    %v222 = vadd.f32 %v55, %v221
    %v223 = vpop.f32.mrb[0].mxu0
    %224 = vmatprep.mubr.bf16.mxu0 0
    %225 = vmatmul.mubr.bf16.gmra.mrb[0].mxu0 %v93
    %v226 = vpop.f32.mrb[0].mxu0
    %v227 = vadd.f32 %v55, %v226
    %v228 = vpop.f32.mrb[0].mxu0
    %v229 = vpop.f32.mrb[0].mxu0
    %v230 = vadd.f32 %v55, %v229
    %v231 = vpop.f32.mrb[0].mxu0
    %232 = vmatprep.mubr.bf16.mxu0 0
    %233 = vmatmul.mubr.bf16.gmra.mrb[0].mxu0 %v94
    %v234 = vpop.f32.mrb[0].mxu0
    %v235 = vadd.f32 %v55, %v234
    %v236 = vpop.f32.mrb[0].mxu0
    %v237 = vpop.f32.mrb[0].mxu0
    %v238 = vadd.f32 %v55, %v237
    %v239 = vpop.f32.mrb[0].mxu0
    %240 = vmatprep.mubr.bf16.mxu0 0
    %241 = vmatmul.mubr.bf16.gmra.mrb[0].mxu0 %v95
    %v242 = vpop.f32.mrb[0].mxu0
    %v243 = vadd.f32 %v55, %v242
    %v244 = vpop.f32.mrb[0].mxu0
    %v245 = vpop.f32.mrb[0].mxu0
    %v246 = vadd.f32 %v55, %v245
    %v247 = vpop.f32.mrb[0].mxu0
    %248 = vdwg.mxu0
    %v249 = vld [vmem:[%s3] sm:$0xff]
    %v250 = vld [vmem:[%s3 + $0x8] sm:$0xff]
    %v251 = vld [vmem:[%s3 + $0x10] sm:$0xff]
    %v252 = vld [vmem:[%s3 + $0x18] sm:$0xff]
    %v253 = vld [vmem:[%s3 + $0x20] sm:$0xff]
    %v254 = vld [vmem:[%s3 + $0x28] sm:$0xff]
    %v255 = vld [vmem:[%s3 + $0x30] sm:$0xff]
    %v256 = vld [vmem:[%s3 + $0x38] sm:$0xff]
    %v257 = vld [vmem:[%s3 + $0x40] sm:$0xff]
    %v258 = vld [vmem:[%s3 + $0x48] sm:$0xff]
    %v259 = vld [vmem:[%s3 + $0x50] sm:$0xff]
    %v260 = vld [vmem:[%s3 + $0x58] sm:$0xff]
    %v261 = vld [vmem:[%s3 + $0x60] sm:$0xff]
    %v262 = vld [vmem:[%s3 + $0x68] sm:$0xff]
    %v263 = vld [vmem:[%s3 + $0x70] sm:$0xff]
    %v264 = vld [vmem:[%s3 + $0x78] sm:$0xff]
    %v265 = vld [vmem:[%s2 + $0x1] sm:$0x1]
    %v266 = vlaneseq
    %v267 = vshrl.u32 %v266, 7
    %v268 = vsub.s32 0, %v267
    %v269 = vrot.slane %v265, %v268
    %v270 = vmul.f32 %v269, %v187
    %v271 = vmul.f32 %v269, %v190
    %v272 = vmul.f32 %v269, %v195
    %v273 = vmul.f32 %v269, %v198
    %v274 = vmul.f32 %v269, %v203
    %v275 = vmul.f32 %v269, %v206
    %v276 = vmul.f32 %v269, %v211
    %v277 = vmul.f32 %v269, %v214
    %v278 = vmul.f32 %v269, %v219
    %v279 = vmul.f32 %v269, %v222
    %v280 = vmul.f32 %v269, %v227
    %v281 = vmul.f32 %v269, %v230
    %v282 = vmul.f32 %v269, %v235
    %v283 = vmul.f32 %v269, %v238
    %v284 = vmul.f32 %v269, %v243
    %v285 = vmul.f32 %v269, %v246
    %v286 = vadd.f32 %v249, %v270
    %v287 = vadd.f32 %v250, %v271
    %v288 = vadd.f32 %v251, %v272
    %v289 = vadd.f32 %v252, %v273
    %v290 = vadd.f32 %v253, %v274
    %v291 = vadd.f32 %v254, %v275
    %v292 = vadd.f32 %v255, %v276
    %v293 = vadd.f32 %v256, %v277
    %v294 = vadd.f32 %v257, %v278
    %v295 = vadd.f32 %v258, %v279
    %v296 = vadd.f32 %v259, %v280
    %v297 = vadd.f32 %v260, %v281
    %v298 = vadd.f32 %v261, %v282
    %v299 = vadd.f32 %v262, %v283
    %v300 = vadd.f32 %v263, %v284
    %v301 = vadd.f32 %v264, %v285
    %302 = vst [vmem:[#allocation2] sm:$0xff] %v286
    %303 = vst [vmem:[#allocation2 + $0x8] sm:$0xff] %v287
    %304 = vst [vmem:[#allocation2 + $0x10] sm:$0xff] %v288
    %305 = vst [vmem:[#allocation2 + $0x18] sm:$0xff] %v289
    %306 = vst [vmem:[#allocation2 + $0x20] sm:$0xff] %v290
    %307 = vst [vmem:[#allocation2 + $0x28] sm:$0xff] %v291
    %308 = vst [vmem:[#allocation2 + $0x30] sm:$0xff] %v292
    %309 = vst [vmem:[#allocation2 + $0x38] sm:$0xff] %v293
    %310 = vst [vmem:[#allocation2 + $0x40] sm:$0xff] %v294
    %311 = vst [vmem:[#allocation2 + $0x48] sm:$0xff] %v295
    %312 = vst [vmem:[#allocation2 + $0x50] sm:$0xff] %v296
    %313 = vst [vmem:[#allocation2 + $0x58] sm:$0xff] %v297
    %314 = vst [vmem:[#allocation2 + $0x60] sm:$0xff] %v298
    %315 = vst [vmem:[#allocation2 + $0x68] sm:$0xff] %v299
    %316 = vst [vmem:[#allocation2 + $0x70] sm:$0xff] %v300
    %317 = vst [vmem:[#allocation2 + $0x78] sm:$0xff] %v301
    // Predicated region
    $region18: #{pvt_v2_block.13} parent=1 // pred_check
      _
    $region19: #{pvt_v2_block.13} parent=1 // pred_check_branch
      %319 = sbr.rel (0) target = $region21
    $region20: #{pvt_v2_block.13} parent=1 // pred_region
      %s321 = ssub.s32 2048, 2048
      %322 = vsyncadd [#allocation3], %s321
      %s323 = sshll.u32 [#allocation2], 4
      %s324 = int_to_ptr.vmem [resolvable:$true] %s323
      %329 = dma.vmem_to_hbm [thread:$0]  %s324, 2048, %s4, [#allocation3], 128, 128, 8
    $region21: #{pvt_v2_block.13} parent=1 // pred_fallthru
      _
    // Predicated region
    $region22: #{pvt_v2_block.13} parent=1 // pred_check
      _
    $region23: #{pvt_v2_block.13} parent=1 // pred_check_branch
      %331 = sbr.rel (0) target = $region25
    $region24: #{pvt_v2_block.13} parent=1 // pred_region
      %332 = dma.done [#allocation3], 2048
    $region25: #{pvt_v2_block.13} parent=1 // pred_fallthru
      _
    %333 = vsyncpa [#allocation3], 1

// kernel: pvt_v2_block.11
$region0: #{pvt_v2_block.11}
  #allocation0 [shape = 'u32[]', space=smem, size = 0x4, offset = 0x4, fixed_abs, tag = 'smem constant byte address 0x4 - core index']
  #allocation1 [shape = 'u32[144,128]{1,0:T(1,128)}', space=vmem, size = 0x12000, scoped, tag = 'internal scratch']
  %s0 = inlined_call_operand.vmem [shape: f32[128,128], index: 0, kind: input, shape index: {}]
  %s1 = inlined_call_operand.vmem [shape: f32[2,128], index: 1, kind: input, shape index: {}]
  %s2 = inlined_call_operand.vmem [shape: bf16[128,128], index: 2, kind: input, shape index: {}]
  %s3 = inlined_call_operand.vmem [shape: f32[1,128], index: 3, kind: input, shape index: {}]
  %s4 = inlined_call_operand.vmem [shape: bf16[128,128], index: 4, kind: output, shape index: {}]
  %s5 = sld [smem:[#allocation0]]
  $region26: #{pvt_v2_block.11} parent=0
    _
  %s7 = ssub.s32 1, %s5
  %s8 = scalar_select 0, %s7, %s5
  // Predicated region
  $region2: #{pvt_v2_block.11} parent=0 // pred_check
    _
  $region3: #{pvt_v2_block.11} parent=0 // pred_check_branch
    %10 = sbr.rel (0) target = $region5
  $region4: #{pvt_v2_block.11} parent=0 // pred_region
    _
  $region5: #{pvt_v2_block.11} parent=0 // pred_fallthru
    _
  // Predicated region
  $region6: #{pvt_v2_block.11} parent=0 // pred_check
    _
  $region7: #{pvt_v2_block.11} parent=0 // pred_check_branch
    %12 = sbr.rel (0) target = $region9
  $region8: #{pvt_v2_block.11} parent=0 // pred_region
    _
  $region9: #{pvt_v2_block.11} parent=0 // pred_fallthru
    _
  // Predicated region
  $region10: #{pvt_v2_block.11} parent=0 // pred_check
    _
  $region11: #{pvt_v2_block.11} parent=0 // pred_check_branch
    %14 = sbr.rel (0) target = $region13
  $region12: #{pvt_v2_block.11} parent=0 // pred_region
    _
  $region13: #{pvt_v2_block.11} parent=0 // pred_fallthru
    _
  // Predicated region
  $region14: #{pvt_v2_block.11} parent=0 // pred_check
    _
  $region15: #{pvt_v2_block.11} parent=0 // pred_check_branch
    %16 = sbr.rel (0) target = $region17
  $region16: #{pvt_v2_block.11} parent=0 // pred_region
    _
  $region17: #{pvt_v2_block.11} parent=0 // pred_fallthru
    _
  %v18 = vld [vmem:[%s0] sm:$0xff]
  %v19 = vld [vmem:[%s0 + $0x8] sm:$0xff]
  %v20 = vld [vmem:[%s0 + $0x10] sm:$0xff]
  %v21 = vld [vmem:[%s0 + $0x18] sm:$0xff]
  %v22 = vld [vmem:[%s0 + $0x20] sm:$0xff]
  %v23 = vld [vmem:[%s0 + $0x28] sm:$0xff]
  %v24 = vld [vmem:[%s0 + $0x30] sm:$0xff]
  %v25 = vld [vmem:[%s0 + $0x38] sm:$0xff]
  %v26 = vld [vmem:[%s0 + $0x40] sm:$0xff]
  %v27 = vld [vmem:[%s0 + $0x48] sm:$0xff]
  %v28 = vld [vmem:[%s0 + $0x50] sm:$0xff]
  %v29 = vld [vmem:[%s0 + $0x58] sm:$0xff]
  %v30 = vld [vmem:[%s0 + $0x60] sm:$0xff]
  %v31 = vld [vmem:[%s0 + $0x68] sm:$0xff]
  %v32 = vld [vmem:[%s0 + $0x70] sm:$0xff]
  %v33 = vld [vmem:[%s0 + $0x78] sm:$0xff]
  %v34 = vlaneseq
  %v35 = vand.u32 %v34, 127
  %vm36 = vcmp.lt.s32.totalorder %v35, 32
  %37 = vadd.xlane.f32.xlu0 %v18
  %v38 = vpop.xlane.xlu0 %37
  %39 = vadd.xlane.f32.xlu0 %v19
  %v40 = vpop.xlane.xlu0 %39
  %41 = vadd.xlane.f32.xlu0 %v20
  %v42 = vpop.xlane.xlu0 %41
  %43 = vadd.xlane.f32.xlu0 %v21
  %v44 = vpop.xlane.xlu0 %43
  %45 = vadd.xlane.f32.xlu0 %v22
  %v46 = vpop.xlane.xlu0 %45
  %47 = vadd.xlane.f32.xlu0 %v23
  %v48 = vpop.xlane.xlu0 %47
  %49 = vadd.xlane.f32.xlu0 %v24
  %v50 = vpop.xlane.xlu0 %49
  %51 = vadd.xlane.f32.xlu0 %v25
  %v52 = vpop.xlane.xlu0 %51
  %53 = vadd.xlane.f32.xlu0 %v26
  %v54 = vpop.xlane.xlu0 %53
  %55 = vadd.xlane.f32.xlu0 %v27
  %v56 = vpop.xlane.xlu0 %55
  %57 = vadd.xlane.f32.xlu0 %v28
  %v58 = vpop.xlane.xlu0 %57
  %59 = vadd.xlane.f32.xlu0 %v29
  %v60 = vpop.xlane.xlu0 %59
  %61 = vadd.xlane.f32.xlu0 %v30
  %v62 = vpop.xlane.xlu0 %61
  %63 = vadd.xlane.f32.xlu0 %v31
  %v64 = vpop.xlane.xlu0 %63
  %65 = vadd.xlane.f32.xlu0 %v32
  %v66 = vpop.xlane.xlu0 %65
  %67 = vadd.xlane.f32.xlu0 %v33
  %v68 = vpop.xlane.xlu0 %67
  %v69 = vmul.f32 %v38, 0.03125
  %v70 = vmul.f32 %v40, 0.03125
  %v71 = vmul.f32 %v42, 0.03125
  %v72 = vmul.f32 %v44, 0.03125
  %v73 = vmul.f32 %v46, 0.03125
  %v74 = vmul.f32 %v48, 0.03125
  %v75 = vmul.f32 %v50, 0.03125
  %v76 = vmul.f32 %v52, 0.03125
  %v77 = vmul.f32 %v54, 0.03125
  %v78 = vmul.f32 %v56, 0.03125
  %v79 = vmul.f32 %v58, 0.03125
  %v80 = vmul.f32 %v60, 0.03125
  %v81 = vmul.f32 %v62, 0.03125
  %v82 = vmul.f32 %v64, 0.03125
  %v83 = vmul.f32 %v66, 0.03125
  %v84 = vmul.f32 %v68, 0.03125
  %v85 = vsub.f32 %v18, %v69
  %v86 = vsub.f32 %v19, %v70
  %v87 = vsub.f32 %v20, %v71
  %v88 = vsub.f32 %v21, %v72
  %v89 = vsub.f32 %v22, %v73
  %v90 = vsub.f32 %v23, %v74
  %v91 = vsub.f32 %v24, %v75
  %v92 = vsub.f32 %v25, %v76
  %v93 = vsub.f32 %v26, %v77
  %v94 = vsub.f32 %v27, %v78
  %v95 = vsub.f32 %v28, %v79
  %v96 = vsub.f32 %v29, %v80
  %v97 = vsub.f32 %v30, %v81
  %v98 = vsub.f32 %v31, %v82
  %v99 = vsub.f32 %v32, %v83
  %v100 = vsub.f32 %v33, %v84
  %v101 = vsel %vm36, %v85, 0.0
  %v102 = vsel %vm36, %v86, 0.0
  %v103 = vsel %vm36, %v87, 0.0
  %v104 = vsel %vm36, %v88, 0.0
  %v105 = vsel %vm36, %v89, 0.0
  %v106 = vsel %vm36, %v90, 0.0
  %v107 = vsel %vm36, %v91, 0.0
  %v108 = vsel %vm36, %v92, 0.0
  %v109 = vsel %vm36, %v93, 0.0
  %v110 = vsel %vm36, %v94, 0.0
  %v111 = vsel %vm36, %v95, 0.0
  %v112 = vsel %vm36, %v96, 0.0
  %v113 = vsel %vm36, %v97, 0.0
  %v114 = vsel %vm36, %v98, 0.0
  %v115 = vsel %vm36, %v99, 0.0
  %v116 = vsel %vm36, %v100, 0.0
  %v117 = vmul.f32 %v101, %v101
  %v118 = vmul.f32 %v102, %v102
  %v119 = vmul.f32 %v103, %v103
  %v120 = vmul.f32 %v104, %v104
  %v121 = vmul.f32 %v105, %v105
  %v122 = vmul.f32 %v106, %v106
  %v123 = vmul.f32 %v107, %v107
  %v124 = vmul.f32 %v108, %v108
  %v125 = vmul.f32 %v109, %v109
  %v126 = vmul.f32 %v110, %v110
  %v127 = vmul.f32 %v111, %v111
  %v128 = vmul.f32 %v112, %v112
  %v129 = vmul.f32 %v113, %v113
  %v130 = vmul.f32 %v114, %v114
  %v131 = vmul.f32 %v115, %v115
  %v132 = vmul.f32 %v116, %v116
  %133 = vadd.xlane.f32.xlu0 %v117
  %v134 = vpop.xlane.xlu0 %133
  %135 = vadd.xlane.f32.xlu0 %v118
  %v136 = vpop.xlane.xlu0 %135
  %137 = vadd.xlane.f32.xlu0 %v119
  %v138 = vpop.xlane.xlu0 %137
  %139 = vadd.xlane.f32.xlu0 %v120
  %v140 = vpop.xlane.xlu0 %139
  %141 = vadd.xlane.f32.xlu0 %v121
  %v142 = vpop.xlane.xlu0 %141
  %143 = vadd.xlane.f32.xlu0 %v122
  %v144 = vpop.xlane.xlu0 %143
  %145 = vadd.xlane.f32.xlu0 %v123
  %v146 = vpop.xlane.xlu0 %145
  %147 = vadd.xlane.f32.xlu0 %v124
  %v148 = vpop.xlane.xlu0 %147
  %149 = vadd.xlane.f32.xlu0 %v125
  %v150 = vpop.xlane.xlu0 %149
  %151 = vadd.xlane.f32.xlu0 %v126
  %v152 = vpop.xlane.xlu0 %151
  %153 = vadd.xlane.f32.xlu0 %v127
  %v154 = vpop.xlane.xlu0 %153
  %155 = vadd.xlane.f32.xlu0 %v128
  %v156 = vpop.xlane.xlu0 %155
  %157 = vadd.xlane.f32.xlu0 %v129
  %v158 = vpop.xlane.xlu0 %157
  %159 = vadd.xlane.f32.xlu0 %v130
  %v160 = vpop.xlane.xlu0 %159
  %161 = vadd.xlane.f32.xlu0 %v131
  %v162 = vpop.xlane.xlu0 %161
  %163 = vadd.xlane.f32.xlu0 %v132
  %v164 = vpop.xlane.xlu0 %163
  %v165 = vmul.f32 %v134, 0.03125
  %v166 = vmul.f32 %v136, 0.03125
  %v167 = vmul.f32 %v138, 0.03125
  %v168 = vmul.f32 %v140, 0.03125
  %v169 = vmul.f32 %v142, 0.03125
  %v170 = vmul.f32 %v144, 0.03125
  %v171 = vmul.f32 %v146, 0.03125
  %v172 = vmul.f32 %v148, 0.03125
  %v173 = vmul.f32 %v150, 0.03125
  %v174 = vmul.f32 %v152, 0.03125
  %v175 = vmul.f32 %v154, 0.03125
  %v176 = vmul.f32 %v156, 0.03125
  %v177 = vmul.f32 %v158, 0.03125
  %v178 = vmul.f32 %v160, 0.03125
  %v179 = vmul.f32 %v162, 0.03125
  %v180 = vmul.f32 %v164, 0.03125
  %v181 = vadd.f32 %v165, 1e-05
  %v182 = vadd.f32 %v166, 1e-05
  %v183 = vadd.f32 %v167, 1e-05
  %v184 = vadd.f32 %v168, 1e-05
  %v185 = vadd.f32 %v169, 1e-05
  %v186 = vadd.f32 %v170, 1e-05
  %v187 = vadd.f32 %v171, 1e-05
  %v188 = vadd.f32 %v172, 1e-05
  %v189 = vadd.f32 %v173, 1e-05
  %v190 = vadd.f32 %v174, 1e-05
  %v191 = vadd.f32 %v175, 1e-05
  %v192 = vadd.f32 %v176, 1e-05
  %v193 = vadd.f32 %v177, 1e-05
  %v194 = vadd.f32 %v178, 1e-05
  %v195 = vadd.f32 %v179, 1e-05
  %v196 = vadd.f32 %v180, 1e-05
  %v197 = vrsqrt.pop %v181
  %v198 = vrsqrt.pop %v182
  %v199 = vrsqrt.pop %v183
  %v200 = vrsqrt.pop %v184
  %v201 = vrsqrt.pop %v185
  %v202 = vrsqrt.pop %v186
  %v203 = vrsqrt.pop %v187
  %v204 = vrsqrt.pop %v188
  %v205 = vrsqrt.pop %v189
  %v206 = vrsqrt.pop %v190
  %v207 = vrsqrt.pop %v191
  %v208 = vrsqrt.pop %v192
  %v209 = vrsqrt.pop %v193
  %v210 = vrsqrt.pop %v194
  %v211 = vrsqrt.pop %v195
  %v212 = vrsqrt.pop %v196
  %v213 = vmul.f32 %v101, %v197
  %v214 = vmul.f32 %v102, %v198
  %v215 = vmul.f32 %v103, %v199
  %v216 = vmul.f32 %v104, %v200
  %v217 = vmul.f32 %v105, %v201
  %v218 = vmul.f32 %v106, %v202
  %v219 = vmul.f32 %v107, %v203
  %v220 = vmul.f32 %v108, %v204
  %v221 = vmul.f32 %v109, %v205
  %v222 = vmul.f32 %v110, %v206
  %v223 = vmul.f32 %v111, %v207
  %v224 = vmul.f32 %v112, %v208
  %v225 = vmul.f32 %v113, %v209
  %v226 = vmul.f32 %v114, %v210
  %v227 = vmul.f32 %v115, %v211
  %v228 = vmul.f32 %v116, %v212
  %v229 = vld [vmem:[%s1] sm:$0x1]
  %v230 = vlaneseq
  %v231 = vshrl.u32 %v230, 7
  %v232 = vsub.s32 0, %v231
  %v233 = vrot.slane %v229, %v232
  %v234 = vmul.f32 %v213, %v233
  %v235 = vmul.f32 %v214, %v233
  %v236 = vmul.f32 %v215, %v233
  %v237 = vmul.f32 %v216, %v233
  %v238 = vmul.f32 %v217, %v233
  %v239 = vmul.f32 %v218, %v233
  %v240 = vmul.f32 %v219, %v233
  %v241 = vmul.f32 %v220, %v233
  %v242 = vmul.f32 %v221, %v233
  %v243 = vmul.f32 %v222, %v233
  %v244 = vmul.f32 %v223, %v233
  %v245 = vmul.f32 %v224, %v233
  %v246 = vmul.f32 %v225, %v233
  %v247 = vmul.f32 %v226, %v233
  %v248 = vmul.f32 %v227, %v233
  %v249 = vmul.f32 %v228, %v233
  %v250 = vld [vmem:[%s1 + $0x1] sm:$0x1]
  %v251 = vlaneseq
  %v252 = vshrl.u32 %v251, 7
  %v253 = vsub.s32 0, %v252
  %v254 = vrot.slane %v250, %v253
  %v255 = vadd.f32 %v234, %v254
  %v256 = vadd.f32 %v235, %v254
  %v257 = vadd.f32 %v236, %v254
  %v258 = vadd.f32 %v237, %v254
  %v259 = vadd.f32 %v238, %v254
  %v260 = vadd.f32 %v239, %v254
  %v261 = vadd.f32 %v240, %v254
  %v262 = vadd.f32 %v241, %v254
  %v263 = vadd.f32 %v242, %v254
  %v264 = vadd.f32 %v243, %v254
  %v265 = vadd.f32 %v244, %v254
  %v266 = vadd.f32 %v245, %v254
  %v267 = vadd.f32 %v246, %v254
  %v268 = vadd.f32 %v247, %v254
  %v269 = vadd.f32 %v248, %v254
  %v270 = vadd.f32 %v249, %v254
  %v271 = vpack.c.bf16 %v256, %v255
  %v272 = vpack.c.bf16 %v258, %v257
  %v273 = vpack.c.bf16 %v260, %v259
  %v274 = vpack.c.bf16 %v262, %v261
  %v275 = vpack.c.bf16 %v264, %v263
  %v276 = vpack.c.bf16 %v266, %v265
  %v277 = vpack.c.bf16 %v268, %v267
  %v278 = vpack.c.bf16 %v270, %v269
  %v279 = vld [vmem:[%s2] sm:$0xf]
  %v280 = vld [vmem:[%s2 + $0x4] sm:$0xf]
  %v281 = vld [vmem:[%s2 + $0x8] sm:$0xf]
  %v282 = vld [vmem:[%s2 + $0xc] sm:$0xf]
  %v283 = vld [vmem:[%s2 + $0x10] sm:$0xf]
  %v284 = vld [vmem:[%s2 + $0x14] sm:$0xf]
  %v285 = vld [vmem:[%s2 + $0x18] sm:$0xf]
  %v286 = vld [vmem:[%s2 + $0x1c] sm:$0xf]
  %v287 = vld [vmem:[%s2 + $0x20] sm:$0xf]
  %v288 = vld [vmem:[%s2 + $0x24] sm:$0xf]
  %v289 = vld [vmem:[%s2 + $0x28] sm:$0xf]
  %v290 = vld [vmem:[%s2 + $0x2c] sm:$0xf]
  %v291 = vld [vmem:[%s2 + $0x30] sm:$0xf]
  %v292 = vld [vmem:[%s2 + $0x34] sm:$0xf]
  %v293 = vld [vmem:[%s2 + $0x38] sm:$0xf]
  %v294 = vld [vmem:[%s2 + $0x3c] sm:$0xf]
  %v295 = vld [vmem:[%s3] sm:$0x1]
  %v297 = vlaneseq
  %v298 = vshrl.u32 %v297, 7
  %v299 = vsub.s32 0, %v298
  %v300 = vrot.slane %v295, %v299
  %v318 = vunpack.c.l.b16 %v279
  %v319 = vunpack.c.l.b16 %v280
  %v320 = vunpack.c.l.b16 %v281
  %v321 = vunpack.c.l.b16 %v282
  %v322 = vunpack.c.l.b16 %v283
  %v323 = vunpack.c.l.b16 %v284
  %v324 = vunpack.c.l.b16 %v285
  %v325 = vunpack.c.l.b16 %v286
  %v326 = vunpack.c.l.b16 %v287
  %v327 = vunpack.c.l.b16 %v288
  %v328 = vunpack.c.l.b16 %v289
  %v329 = vunpack.c.l.b16 %v290
  %v330 = vunpack.c.l.b16 %v291
  %v331 = vunpack.c.l.b16 %v292
  %v332 = vunpack.c.l.b16 %v293
  %v333 = vunpack.c.l.b16 %v294
  %v334 = vpack.c.b16 %v319, %v318
  %v335 = vpack.c.b16 %v321, %v320
  %v336 = vpack.c.b16 %v323, %v322
  %v337 = vpack.c.b16 %v325, %v324
  %v338 = vpack.c.b16 %v327, %v326
  %v339 = vpack.c.b16 %v329, %v328
  %v340 = vpack.c.b16 %v331, %v330
  %v341 = vpack.c.b16 %v333, %v332
  %350 = vmatprep.subr.bf16.mxu0 0
  %351 = vmatpush1.bf16.msra.mxu0 %v334
  %352 = vmatprep.subr.bf16.mxu0 0
  %353 = vmatpush1.bf16.msra.mxu0 %v335
  %354 = vmatprep.subr.bf16.mxu0 0
  %355 = vmatpush1.bf16.msra.mxu0 %v336
  %356 = vmatprep.subr.bf16.mxu0 0
  %357 = vmatpush1.bf16.msra.mxu0 %v337
  %358 = vmatprep.subr.bf16.mxu0 0
  %359 = vmatpush1.bf16.msra.mxu0 %v338
  %360 = vmatprep.subr.bf16.mxu0 0
  %361 = vmatpush1.bf16.msra.mxu0 %v339
  %362 = vmatprep.subr.bf16.mxu0 0
  %363 = vmatpush1.bf16.msra.mxu0 %v340
  %364 = vmatprep.subr.bf16.mxu0 0
  %365 = vmatpush1.bf16.msra.mxu0 %v341
  %366 = vmatprep.subr.bf16.mxu0 0
  %367 = vmatpush1.bf16.msra.mxu0 0
  %368 = vmatprep.subr.bf16.mxu0 0
  %369 = vmatpush1.bf16.msra.mxu0 0
  %370 = vmatprep.subr.bf16.mxu0 0
  %371 = vmatpush1.bf16.msra.mxu0 0
  %372 = vmatprep.subr.bf16.mxu0 0
  %373 = vmatpush1.bf16.msra.mxu0 0
  %374 = vmatprep.subr.bf16.mxu0 0
  %375 = vmatpush1.bf16.msra.mxu0 0
  %376 = vmatprep.subr.bf16.mxu0 0
  %377 = vmatpush1.bf16.msra.mxu0 0
  %378 = vmatprep.subr.bf16.mxu0 0
  %379 = vmatpush1.bf16.msra.mxu0 0
  %380 = vmatprep.subr.bf16.mxu0 0
  %381 = vmatpush1.bf16.msra.mxu0 0
  %382 = vmatprep.mubr.bf16.mxu0 0
  %383 = vmatmul.mubr.bf16.gmra.mrb[0].mxu0 %v271
  %v384 = vpop.f32.mrb[0].mxu0
  %v385 = vadd.f32 %v300, %v384
  %v386 = vpop.f32.mrb[0].mxu0
  %v387 = vpop.f32.mrb[0].mxu0
  %v388 = vadd.f32 %v300, %v387
  %v389 = vpop.f32.mrb[0].mxu0
  %390 = vmatprep.mubr.bf16.mxu0 0
  %391 = vmatmul.mubr.bf16.gmra.mrb[0].mxu0 %v272
  %v392 = vpop.f32.mrb[0].mxu0
  %v393 = vadd.f32 %v300, %v392
  %v394 = vpop.f32.mrb[0].mxu0
  %v395 = vpop.f32.mrb[0].mxu0
  %v396 = vadd.f32 %v300, %v395
  %v397 = vpop.f32.mrb[0].mxu0
  %398 = vmatprep.mubr.bf16.mxu0 0
  %399 = vmatmul.mubr.bf16.gmra.mrb[0].mxu0 %v273
  %v400 = vpop.f32.mrb[0].mxu0
  %v401 = vadd.f32 %v300, %v400
  %v402 = vpop.f32.mrb[0].mxu0
  %v403 = vpop.f32.mrb[0].mxu0
  %v404 = vadd.f32 %v300, %v403
  %v405 = vpop.f32.mrb[0].mxu0
  %406 = vmatprep.mubr.bf16.mxu0 0
  %407 = vmatmul.mubr.bf16.gmra.mrb[0].mxu0 %v274
  %v408 = vpop.f32.mrb[0].mxu0
  %v409 = vadd.f32 %v300, %v408
  %v410 = vpop.f32.mrb[0].mxu0
  %v411 = vpop.f32.mrb[0].mxu0
  %v412 = vadd.f32 %v300, %v411
  %v413 = vpop.f32.mrb[0].mxu0
  %414 = vmatprep.mubr.bf16.mxu0 0
  %415 = vmatmul.mubr.bf16.gmra.mrb[0].mxu0 %v275
  %v416 = vpop.f32.mrb[0].mxu0
  %v417 = vadd.f32 %v300, %v416
  %v418 = vpop.f32.mrb[0].mxu0
  %v419 = vpop.f32.mrb[0].mxu0
  %v420 = vadd.f32 %v300, %v419
  %v421 = vpop.f32.mrb[0].mxu0
  %422 = vmatprep.mubr.bf16.mxu0 0
  %423 = vmatmul.mubr.bf16.gmra.mrb[0].mxu0 %v276
  %v424 = vpop.f32.mrb[0].mxu0
  %v425 = vadd.f32 %v300, %v424
  %v426 = vpop.f32.mrb[0].mxu0
  %v427 = vpop.f32.mrb[0].mxu0
  %v428 = vadd.f32 %v300, %v427
  %v429 = vpop.f32.mrb[0].mxu0
  %430 = vmatprep.mubr.bf16.mxu0 0
  %431 = vmatmul.mubr.bf16.gmra.mrb[0].mxu0 %v277
  %v432 = vpop.f32.mrb[0].mxu0
  %v433 = vadd.f32 %v300, %v432
  %v434 = vpop.f32.mrb[0].mxu0
  %v435 = vpop.f32.mrb[0].mxu0
  %v436 = vadd.f32 %v300, %v435
  %v437 = vpop.f32.mrb[0].mxu0
  %438 = vmatprep.mubr.bf16.mxu0 0
  %439 = vmatmul.mubr.bf16.gmra.mrb[0].mxu0 %v278
  %v440 = vpop.f32.mrb[0].mxu0
  %v441 = vadd.f32 %v300, %v440
  %v442 = vpop.f32.mrb[0].mxu0
  %v443 = vpop.f32.mrb[0].mxu0
  %v444 = vadd.f32 %v300, %v443
  %v445 = vpop.f32.mrb[0].mxu0
  %446 = vdwg.mxu0
  %v447 = vpack.c.bf16 %v388, %v385
  %v448 = vpack.c.bf16 %v396, %v393
  %v449 = vpack.c.bf16 %v404, %v401
  %v450 = vpack.c.bf16 %v412, %v409
  %v451 = vpack.c.bf16 %v420, %v417
  %v452 = vpack.c.bf16 %v428, %v425
  %v453 = vpack.c.bf16 %v436, %v433
  %v454 = vpack.c.bf16 %v444, %v441
  %v463 = vunpack.c.l.b16 %v447
  %v464 = vunpack.c.h.b16 %v447
  %v465 = vunpack.c.l.b16 %v448
  %v466 = vunpack.c.h.b16 %v448
  %v467 = vunpack.c.l.b16 %v449
  %v468 = vunpack.c.h.b16 %v449
  %v469 = vunpack.c.l.b16 %v450
  %v470 = vunpack.c.h.b16 %v450
  %v471 = vunpack.c.l.b16 %v451
  %v472 = vunpack.c.h.b16 %v451
  %v473 = vunpack.c.l.b16 %v452
  %v474 = vunpack.c.h.b16 %v452
  %v475 = vunpack.c.l.b16 %v453
  %v476 = vunpack.c.h.b16 %v453
  %v477 = vunpack.c.l.b16 %v454
  %v478 = vunpack.c.h.b16 %v454
  %v479 = vpack.c.b16 %v463, %v463
  %v480 = vpack.c.b16 %v464, %v464
  %v481 = vpack.c.b16 %v465, %v465
  %v482 = vpack.c.b16 %v466, %v466
  %v483 = vpack.c.b16 %v467, %v467
  %v484 = vpack.c.b16 %v468, %v468
  %v485 = vpack.c.b16 %v469, %v469
  %v486 = vpack.c.b16 %v470, %v470
  %v487 = vpack.c.b16 %v471, %v471
  %v488 = vpack.c.b16 %v472, %v472
  %v489 = vpack.c.b16 %v473, %v473
  %v490 = vpack.c.b16 %v474, %v474
  %v491 = vpack.c.b16 %v475, %v475
  %v492 = vpack.c.b16 %v476, %v476
  %v493 = vpack.c.b16 %v477, %v477
  %v494 = vpack.c.b16 %v478, %v478
  %511 = vst [vmem:[%s4] sm:$0xf] %v479
  %512 = vst [vmem:[%s4 + $0x4] sm:$0xf] %v480
  %513 = vst [vmem:[%s4 + $0x8] sm:$0xf] %v481
  %514 = vst [vmem:[%s4 + $0xc] sm:$0xf] %v482
  %515 = vst [vmem:[%s4 + $0x10] sm:$0xf] %v483
  %516 = vst [vmem:[%s4 + $0x14] sm:$0xf] %v484
  %517 = vst [vmem:[%s4 + $0x18] sm:$0xf] %v485
  %518 = vst [vmem:[%s4 + $0x1c] sm:$0xf] %v486
  %519 = vst [vmem:[%s4 + $0x20] sm:$0xf] %v487
  %520 = vst [vmem:[%s4 + $0x24] sm:$0xf] %v488
  %521 = vst [vmem:[%s4 + $0x28] sm:$0xf] %v489
  %522 = vst [vmem:[%s4 + $0x2c] sm:$0xf] %v490
  %523 = vst [vmem:[%s4 + $0x30] sm:$0xf] %v491
  %524 = vst [vmem:[%s4 + $0x34] sm:$0xf] %v492
  %525 = vst [vmem:[%s4 + $0x38] sm:$0xf] %v493
  %526 = vst [vmem:[%s4 + $0x3c] sm:$0xf] %v494
  // Predicated region
  $region18: #{pvt_v2_block.11} parent=0 // pred_check
    _
  $region19: #{pvt_v2_block.11} parent=0 // pred_check_branch
    %528 = sbr.rel (0) target = $region21
  $region20: #{pvt_v2_block.11} parent=0 // pred_region
    _
  $region21: #{pvt_v2_block.11} parent=0 // pred_fallthru
    _
  // Predicated region
  $region22: #{pvt_v2_block.11} parent=0 // pred_check
    _
  $region23: #{pvt_v2_block.11} parent=0 // pred_check_branch
    %530 = sbr.rel (0) target = $region25
  $region24: #{pvt_v2_block.11} parent=0 // pred_region
    _
  $region25: #{pvt_v2_block.11} parent=0 // pred_fallthru
    _

// kernel: pvt_v2_block.12
$region0: #{pvt_v2_block.12}
  #allocation0 [shape = 'u32[]', space=smem, size = 0x4, offset = 0x4, fixed_abs, tag = 'smem constant byte address 0x4 - core index']
  #allocation1 [shape = 'u32[144,128]{1,0:T(1,128)}', space=vmem, size = 0x12000, scoped, tag = 'internal scratch']
  #allocation2 [shape = 'bf16[10,10,128]{2,1,0:T(8,128)(2,1)}', space=vmem, size = 0xa000, scoped, tag = 'scratch operand']
  %s0 = inlined_call_operand.vmem [shape: bf16[2,8,8,128], index: 0, kind: input, shape index: {}]
  %s1 = inlined_call_operand.vmem [shape: f32[3,3,128], index: 1, kind: input, shape index: {}]
  %s2 = inlined_call_operand.vmem [shape: f32[1,1,128], index: 2, kind: input, shape index: {}]
  %s3 = inlined_call_operand.vmem [shape: bf16[2,8,8,128], index: 3, kind: output, shape index: {}]
  %s4 = sld [smem:[#allocation0]]
  $region45: #{pvt_v2_block.12} parent=0
    _
  %s6 = ssub.s32 1, %s4
  %s7 = scalar_select 0, %s6, %s4
  loop: start=0, step=1, limit=4
  $region2: #{pvt_v2_block.12} parent=0 // loop_pre_header
    _
  $region3: #{pvt_v2_block.12} parent=0 // loop_header
    %s9 = sphi 0, %s13
    %p10 = scmp.ge.s32.totalorder %s9, 4
    %s19 = sphi 0, %s21
    %s22 = sphi 0, %s19
    %s23 = sphi 0, %s22
    %s39 = sphi 0, %s23
    %s43 = sphi 0, %s43
    %s45 = sphi 0, %s43
    %s46 = sphi 0, %s45
    %s60 = sphi 0, %s46
    %s64 = sphi 0, %s64
    %s66 = sphi 0, %s64
    %s67 = sphi 0, %s66
    %s81 = sphi 0, %s67
    %s87 = sphi 0, %s89
    %s90 = sphi 0, %s87
    %s91 = sphi 0, %s90
    %s107 = sphi 0, %s91
  $region4: #{pvt_v2_block.12} parent=0 // loop_header_branch
    %12 = sbr.rel (%p10) target = $region8
  $region5: #{pvt_v2_block.12} parent=0 // loop_body
    %s14 = ssub.s32 %s9, 1
    %s15 = ssub.s32 %s9, 2
    %s16 = sadd.s32 %s9, 1
    %s17 = ssub.s32 %s9, %s16
    %p18 = scmp.eq.s32.totalorder %s17, 0
    %s20 = sadd.s32 %s19, 1
    %s21 = scalar_select %p18, %s19, %s20
    %p24 = pneg %p18
    %p25 = scmp.eq.s32.totalorder %s9, 1
    %p26 = por %p24, %p25
    %p27 = scmp.ne.s32.totalorder %s19, %s22
    %p28 = scmp.eq.s32.totalorder %s9, 0
    %p29 = por %p27, %p28
    %p30 = scmp.ne.s32.totalorder %s19, %s22
    %p31 = scmp.eq.s32.totalorder %s14, 1
    %p32 = por %p30, %p31
    %p33 = scmp.ne.s32.totalorder %s22, %s23
    %p34 = scmp.eq.s32.totalorder %s14, 0
    %p35 = por %p33, %p34
    %p36 = scmp.ne.s32.totalorder %s22, %s23
    %p37 = scmp.eq.s32.totalorder %s15, 1
    %p38 = por %p36, %p37
    %p40 = scmp.ne.s32.totalorder %s23, %s39
    %p41 = scmp.eq.s32.totalorder %s15, 0
    %p42 = por %p40, %p41
    %s44 = sadd.s32 %s43, 1
    %p47 = scmp.eq.s32.totalorder %s9, 1
    %p48 = scmp.ne.s32.totalorder %s43, %s45
    %p49 = scmp.eq.s32.totalorder %s9, 0
    %p50 = por %p48, %p49
    %p51 = scmp.ne.s32.totalorder %s43, %s45
    %p52 = scmp.eq.s32.totalorder %s14, 1
    %p53 = por %p51, %p52
    %p54 = scmp.ne.s32.totalorder %s45, %s46
    %p55 = scmp.eq.s32.totalorder %s14, 0
    %p56 = por %p54, %p55
    %p57 = scmp.ne.s32.totalorder %s45, %s46
    %p58 = scmp.eq.s32.totalorder %s15, 1
    %p59 = por %p57, %p58
    %p61 = scmp.ne.s32.totalorder %s46, %s60
    %p62 = scmp.eq.s32.totalorder %s15, 0
    %p63 = por %p61, %p62
    %s65 = sadd.s32 %s64, 1
    %p68 = scmp.eq.s32.totalorder %s9, 1
    %p69 = scmp.ne.s32.totalorder %s64, %s66
    %p70 = scmp.eq.s32.totalorder %s9, 0
    %p71 = por %p69, %p70
    %p72 = scmp.ne.s32.totalorder %s64, %s66
    %p73 = scmp.eq.s32.totalorder %s14, 1
    %p74 = por %p72, %p73
    %p75 = scmp.ne.s32.totalorder %s66, %s67
    %p76 = scmp.eq.s32.totalorder %s14, 0
    %p77 = por %p75, %p76
    %p78 = scmp.ne.s32.totalorder %s66, %s67
    %p79 = scmp.eq.s32.totalorder %s15, 1
    %p80 = por %p78, %p79
    %p82 = scmp.ne.s32.totalorder %s67, %s81
    %p83 = scmp.eq.s32.totalorder %s15, 0
    %p84 = por %p82, %p83
    %s85 = ssub.s32 %s9, %s16
    %p86 = scmp.eq.s32.totalorder %s85, 0
    %s88 = sadd.s32 %s87, 1
    %s89 = scalar_select %p86, %s87, %s88
    %p92 = pneg %p86
    %p93 = scmp.eq.s32.totalorder %s9, 1
    %p94 = por %p92, %p93
    %p95 = scmp.ne.s32.totalorder %s87, %s90
    %p96 = scmp.eq.s32.totalorder %s9, 0
    %p97 = por %p95, %p96
    %p98 = scmp.ne.s32.totalorder %s87, %s90
    %p99 = scmp.eq.s32.totalorder %s14, 1
    %p100 = por %p98, %p99
    %p101 = scmp.ne.s32.totalorder %s90, %s91
    %p102 = scmp.eq.s32.totalorder %s14, 0
    %p103 = por %p101, %p102
    %p104 = scmp.ne.s32.totalorder %s90, %s91
    %p105 = scmp.eq.s32.totalorder %s15, 1
    %p106 = por %p104, %p105
    %p108 = scmp.ne.s32.totalorder %s91, %s107
    %p109 = scmp.eq.s32.totalorder %s15, 0
    %p110 = por %p108, %p109
    %p111 = scmp.le.s32.totalorder 1, %s9
    %p112 = scmp.lt.s32.totalorder %s9, 3
    %p113 = pnand %p111, %p112
    %p114 = pneg %p113
    // Predicated region
    $region9: #{pvt_v2_block.12} parent=5 // pred_check
      _
    $region10: #{pvt_v2_block.12} parent=5 // pred_check_branch
      %116 = sbr.rel (%p113) target = $region12
    $region11: #{pvt_v2_block.12} parent=5 // pred_region
      %s117 = ssub.s32 %s9, 1
      // Predicated region
      $region13: #{pvt_v2_block.12} parent=11 // pred_check
        %p118 = pneg %p56
      $region14: #{pvt_v2_block.12} parent=11 // pred_check_branch
        %120 = sbr.rel (%p118) target = $region16
      $region15: #{pvt_v2_block.12} parent=11 // pred_region
        _
      $region16: #{pvt_v2_block.12} parent=11 // pred_fallthru
        _
      // Predicated region
      $region17: #{pvt_v2_block.12} parent=11 // pred_check
        %p121 = pneg %p77
      $region18: #{pvt_v2_block.12} parent=11 // pred_check_branch
        %123 = sbr.rel (%p121) target = $region20
      $region19: #{pvt_v2_block.12} parent=11 // pred_region
        _
      $region20: #{pvt_v2_block.12} parent=11 // pred_fallthru
        _
    $region12: #{pvt_v2_block.12} parent=5 // pred_fallthru
      _
    %p124 = scmp.lt.s32.totalorder %s9, 2
    // Predicated region
    $region21: #{pvt_v2_block.12} parent=5 // pred_check
      %p125 = pneg %p124
    $region22: #{pvt_v2_block.12} parent=5 // pred_check_branch
      %127 = sbr.rel (%p125) target = $region24
    $region23: #{pvt_v2_block.12} parent=5 // pred_region
      // Predicated region
      $region25: #{pvt_v2_block.12} parent=23 // pred_check
        %p128 = pneg %p29
      $region26: #{pvt_v2_block.12} parent=23 // pred_check_branch
        %130 = sbr.rel (%p128) target = $region28
      $region27: #{pvt_v2_block.12} parent=23 // pred_region
        %p131 = scmp.lt.s32.totalorder %s9, 1
        %s132 = scalar_select %p131, %s9, 1
        %s133 = smul.addr %s132, 8
        %s134 = smul.addr %s133, 4
        %s135 = scalar_lea.vmem %s0, %s134
      $region28: #{pvt_v2_block.12} parent=23 // pred_fallthru
        _
    $region24: #{pvt_v2_block.12} parent=5 // pred_fallthru
      _
    %p136 = scmp.le.s32.totalorder 1, %s9
    %p137 = scmp.lt.s32.totalorder %s9, 3
    %p138 = pnand %p136, %p137
    %p139 = pneg %p138
    // Predicated region
    $region29: #{pvt_v2_block.12} parent=5 // pred_check
      _
    $region30: #{pvt_v2_block.12} parent=5 // pred_check_branch
      %141 = sbr.rel (%p138) target = $region32
    $region31: #{pvt_v2_block.12} parent=5 // pred_region
      %s142 = ssub.s32 %s9, 1
      %p143 = scmp.lt.s32.totalorder %s14, 1
      %s144 = scalar_select %p143, %s14, 1
      %s145 = smul.addr %s144, 8
      %s146 = smul.addr %s145, 4
      %s147 = scalar_lea.vmem %s0, %s146
      %p148 = pneg %p35
      %p149 = pneg %p32
      %p150 = pneg %p56
      %p151 = pneg %p53
      %p152 = pneg %p77
      %p153 = pneg %p74
      %p154 = pneg %p103
      %p155 = pneg %p100
      %p156 = scmp.lt.s32.totalorder %s14, 1
      %s157 = scalar_select %p156, %s14, 1
      %s158 = smul.addr %s157, 8
      %s159 = smul.addr %s158, 4
      %s160 = scalar_lea.vmem %s3, %s159
      %p161 = scmp.lt.s32.totalorder %s14, 1
      %s162 = scalar_select %p161, %s14, 1
      %s163 = smul.addr %s162, 8
      %s164 = smul.addr %s163, 4
      %s165 = scalar_lea.vmem %s0, %s164
      %p166 = scmp.lt.s32.totalorder %s14, 1
      %s167 = scalar_select %p166, %s14, 1
      %s168 = smul.addr %s167, 8
      %s169 = smul.addr %s168, 4
      %s170 = scalar_lea.vmem %s3, %s169
      %172 = vst [vmem:[#allocation2] sm:$0xf] 0
      %173 = vst [vmem:[#allocation2 + $0x4] sm:$0x1] 0
      %174 = vst [vmem:[#allocation2 + $0x8] sm:$0xf] 0
      %175 = vst [vmem:[#allocation2 + $0xc] sm:$0x1] 0
      %176 = vst [vmem:[#allocation2 + $0x10] sm:$0xf] 0
      %177 = vst [vmem:[#allocation2 + $0x14] sm:$0x1] 0
      %178 = vst [vmem:[#allocation2 + $0x18] sm:$0xf] 0
      %179 = vst [vmem:[#allocation2 + $0x1c] sm:$0x1] 0
      %180 = vst [vmem:[#allocation2 + $0x20] sm:$0xf] 0
      %181 = vst [vmem:[#allocation2 + $0x24] sm:$0x1] 0
      %182 = vst [vmem:[#allocation2 + $0x28] sm:$0xf] 0
      %183 = vst [vmem:[#allocation2 + $0x2c] sm:$0x1] 0
      %184 = vst [vmem:[#allocation2 + $0x30] sm:$0xf] 0
      %185 = vst [vmem:[#allocation2 + $0x34] sm:$0x1] 0
      %186 = vst [vmem:[#allocation2 + $0x38] sm:$0xf] 0
      %187 = vst [vmem:[#allocation2 + $0x3c] sm:$0x1] 0
      %188 = vst [vmem:[#allocation2 + $0x40] sm:$0xf] 0
      %189 = vst [vmem:[#allocation2 + $0x44] sm:$0x1] 0
      %190 = vst [vmem:[#allocation2 + $0x48] sm:$0xf] 0
      %191 = vst [vmem:[#allocation2 + $0x4c] sm:$0x1] 0
      %v192 = vld [vmem:[%s165] sm:$0xf]
      %v193 = vld [vmem:[%s165 + $0x4] sm:$0xf]
      %v194 = vld [vmem:[%s165 + $0x8] sm:$0xf]
      %v195 = vld [vmem:[%s165 + $0xc] sm:$0xf]
      %v196 = vld [vmem:[%s165 + $0x10] sm:$0xf]
      %v197 = vld [vmem:[%s165 + $0x14] sm:$0xf]
      %v198 = vld [vmem:[%s165 + $0x18] sm:$0xf]
      %v199 = vld [vmem:[%s165 + $0x1c] sm:$0xf]
      %v201 = vshrl.u32 %v192, 16
      %v203 = vrot.slane %v201, 7
      %v204 = vshll.u32 %v192, 16
      %v206 = vor.u32 %v203, %v204
      %v207 = vrot.slane %v203, 4
      %v209 = vshrl.u32 %v193, 16
      %v211 = vrot.slane %v209, 7
      %v212 = vshll.u32 %v193, 16
      %v214 = vor.u32 %v211, %v212
      %v215 = vrot.slane %v211, 4
      %v217 = vshrl.u32 %v194, 16
      %v219 = vrot.slane %v217, 7
      %v220 = vshll.u32 %v194, 16
      %v222 = vor.u32 %v219, %v220
      %v223 = vrot.slane %v219, 4
      %v225 = vshrl.u32 %v195, 16
      %v227 = vrot.slane %v225, 7
      %v228 = vshll.u32 %v195, 16
      %v230 = vor.u32 %v227, %v228
      %v231 = vrot.slane %v227, 4
      %v233 = vshrl.u32 %v196, 16
      %v235 = vrot.slane %v233, 7
      %v236 = vshll.u32 %v196, 16
      %v238 = vor.u32 %v235, %v236
      %v239 = vrot.slane %v235, 4
      %v241 = vshrl.u32 %v197, 16
      %v243 = vrot.slane %v241, 7
      %v244 = vshll.u32 %v197, 16
      %v246 = vor.u32 %v243, %v244
      %v247 = vrot.slane %v243, 4
      %v249 = vshrl.u32 %v198, 16
      %v251 = vrot.slane %v249, 7
      %v252 = vshll.u32 %v198, 16
      %v254 = vor.u32 %v251, %v252
      %v255 = vrot.slane %v251, 4
      %v257 = vshrl.u32 %v199, 16
      %v259 = vrot.slane %v257, 7
      %v260 = vshll.u32 %v199, 16
      %v262 = vor.u32 %v259, %v260
      %v263 = vrot.slane %v259, 4
      %s280 = scalar_lea.vmem [#allocation2], 8
      %vm281 = vcmask 1043456
      %vm282 = vsmask.f32 7938
      %vm283 = vmand %vm281, %vm282
      %v284 = vld [vmem:[%s280] sm:$0xf]
      %v285 = vsel %vm283, %v206, %v284
      %286 = vst [vmem:[%s280] sm:$0xf] %v285
      %vm287 = vcmask 1040384
      %vm288 = vsmask.f32 256
      %vm289 = vmand %vm287, %vm288
      %v290 = vld [vmem:[%s280 + $0x4] sm:$0x1]
      %v291 = vsel %vm289, %v207, %v290
      %292 = vst [vmem:[%s280 + $0x4] sm:$0x1] %v291
      %v293 = vld [vmem:[%s280 + $0x8] sm:$0xf]
      %v294 = vsel %vm283, %v214, %v293
      %295 = vst [vmem:[%s280 + $0x8] sm:$0xf] %v294
      %v296 = vld [vmem:[%s280 + $0xc] sm:$0x1]
      %v297 = vsel %vm289, %v215, %v296
      %298 = vst [vmem:[%s280 + $0xc] sm:$0x1] %v297
      %v299 = vld [vmem:[%s280 + $0x10] sm:$0xf]
      %v300 = vsel %vm283, %v222, %v299
      %301 = vst [vmem:[%s280 + $0x10] sm:$0xf] %v300
      %v302 = vld [vmem:[%s280 + $0x14] sm:$0x1]
      %v303 = vsel %vm289, %v223, %v302
      %304 = vst [vmem:[%s280 + $0x14] sm:$0x1] %v303
      %v305 = vld [vmem:[%s280 + $0x18] sm:$0xf]
      %v306 = vsel %vm283, %v230, %v305
      %307 = vst [vmem:[%s280 + $0x18] sm:$0xf] %v306
      %v308 = vld [vmem:[%s280 + $0x1c] sm:$0x1]
      %v309 = vsel %vm289, %v231, %v308
      %310 = vst [vmem:[%s280 + $0x1c] sm:$0x1] %v309
      %v311 = vld [vmem:[%s280 + $0x20] sm:$0xf]
      %v312 = vsel %vm283, %v238, %v311
      %313 = vst [vmem:[%s280 + $0x20] sm:$0xf] %v312
      %v314 = vld [vmem:[%s280 + $0x24] sm:$0x1]
      %v315 = vsel %vm289, %v239, %v314
      %316 = vst [vmem:[%s280 + $0x24] sm:$0x1] %v315
      %v317 = vld [vmem:[%s280 + $0x28] sm:$0xf]
      %v318 = vsel %vm283, %v246, %v317
      %319 = vst [vmem:[%s280 + $0x28] sm:$0xf] %v318
      %v320 = vld [vmem:[%s280 + $0x2c] sm:$0x1]
      %v321 = vsel %vm289, %v247, %v320
      %322 = vst [vmem:[%s280 + $0x2c] sm:$0x1] %v321
      %v323 = vld [vmem:[%s280 + $0x30] sm:$0xf]
      %v324 = vsel %vm283, %v254, %v323
      %325 = vst [vmem:[%s280 + $0x30] sm:$0xf] %v324
      %v326 = vld [vmem:[%s280 + $0x34] sm:$0x1]
      %v327 = vsel %vm289, %v255, %v326
      %328 = vst [vmem:[%s280 + $0x34] sm:$0x1] %v327
      %v329 = vld [vmem:[%s280 + $0x38] sm:$0xf]
      %v330 = vsel %vm283, %v262, %v329
      %331 = vst [vmem:[%s280 + $0x38] sm:$0xf] %v330
      %v332 = vld [vmem:[%s280 + $0x3c] sm:$0x1]
      %v333 = vsel %vm289, %v263, %v332
      %334 = vst [vmem:[%s280 + $0x3c] sm:$0x1] %v333
      %v335 = vld [vmem:[#allocation2] sm:$0xf]
      %v336 = vld [vmem:[#allocation2 + $0x8] sm:$0xf]
      %v337 = vld [vmem:[#allocation2 + $0x10] sm:$0xf]
      %v338 = vld [vmem:[#allocation2 + $0x18] sm:$0xf]
      %v339 = vld [vmem:[#allocation2 + $0x20] sm:$0xf]
      %v340 = vld [vmem:[#allocation2 + $0x28] sm:$0xf]
      %v341 = vld [vmem:[#allocation2 + $0x30] sm:$0xf]
      %v342 = vld [vmem:[#allocation2 + $0x38] sm:$0xf]
      %v343 = vunpack.c.l.bf16 %v335
      %v344 = vunpack.c.l.bf16 %v336
      %v345 = vunpack.c.l.bf16 %v337
      %v346 = vunpack.c.l.bf16 %v338
      %v347 = vunpack.c.l.bf16 %v339
      %v348 = vunpack.c.l.bf16 %v340
      %v349 = vunpack.c.l.bf16 %v341
      %v350 = vunpack.c.l.bf16 %v342
      %v351 = vld [vmem:[%s1] sm:$0x1]
      %v352 = vlaneseq
      %v353 = vshrl.u32 %v352, 7
      %v354 = vsub.s32 0, %v353
      %v355 = vrot.slane %v351, %v354
      %v356 = vmul.f32 %v343, %v355
      %v357 = vmul.f32 %v344, %v355
      %v358 = vmul.f32 %v345, %v355
      %v359 = vmul.f32 %v346, %v355
      %v360 = vmul.f32 %v347, %v355
      %v361 = vmul.f32 %v348, %v355
      %v362 = vmul.f32 %v349, %v355
      %v363 = vmul.f32 %v350, %v355
      %v364 = vadd.f32 %v356, 0.0
      %v365 = vadd.f32 %v357, 0.0
      %v366 = vadd.f32 %v358, 0.0
      %v367 = vadd.f32 %v359, 0.0
      %v368 = vadd.f32 %v360, 0.0
      %v369 = vadd.f32 %v361, 0.0
      %v370 = vadd.f32 %v362, 0.0
      %v371 = vadd.f32 %v363, 0.0
      %v372 = vld [vmem:[#allocation2 + $0x4] sm:$0x1]
      %v373 = vld [vmem:[#allocation2 + $0xc] sm:$0x1]
      %v374 = vld [vmem:[#allocation2 + $0x14] sm:$0x1]
      %v375 = vld [vmem:[#allocation2 + $0x1c] sm:$0x1]
      %v376 = vld [vmem:[#allocation2 + $0x24] sm:$0x1]
      %v377 = vld [vmem:[#allocation2 + $0x2c] sm:$0x1]
      %v378 = vld [vmem:[#allocation2 + $0x34] sm:$0x1]
      %v379 = vld [vmem:[#allocation2 + $0x3c] sm:$0x1]
      %v380 = vunpack.c.l.bf16 %v372
      %v381 = vunpack.c.l.bf16 %v373
      %v382 = vunpack.c.l.bf16 %v374
      %v383 = vunpack.c.l.bf16 %v375
      %v384 = vunpack.c.l.bf16 %v376
      %v385 = vunpack.c.l.bf16 %v377
      %v386 = vunpack.c.l.bf16 %v378
      %v387 = vunpack.c.l.bf16 %v379
      %v388 = vld [vmem:[%s1 + $0x1] sm:$0x1]
      %v389 = vlaneseq
      %v390 = vshrl.u32 %v389, 7
      %v391 = vsub.s32 0, %v390
      %v392 = vrot.slane %v388, %v391
      %v393 = vmul.f32 %v343, %v392
      %v394 = vmul.f32 %v380, %v392
      %v395 = vmul.f32 %v344, %v392
      %v396 = vmul.f32 %v381, %v392
      %v397 = vmul.f32 %v345, %v392
      %v398 = vmul.f32 %v382, %v392
      %v399 = vmul.f32 %v346, %v392
      %v400 = vmul.f32 %v383, %v392
      %v401 = vmul.f32 %v347, %v392
      %v402 = vmul.f32 %v384, %v392
      %v403 = vmul.f32 %v348, %v392
      %v404 = vmul.f32 %v385, %v392
      %v405 = vmul.f32 %v349, %v392
      %v406 = vmul.f32 %v386, %v392
      %v407 = vmul.f32 %v350, %v392
      %v408 = vmul.f32 %v387, %v392
      %vm425 = vcmask 1046528
      %v426 = vrot.slane %v393, 1
      %v427 = vrot.slane %v394, 1
      %v428 = vsel %vm425, %v426, %v427
      %v429 = vrot.slane %v395, 1
      %v430 = vrot.slane %v396, 1
      %v431 = vsel %vm425, %v429, %v430
      %v432 = vrot.slane %v397, 1
      %v433 = vrot.slane %v398, 1
      %v434 = vsel %vm425, %v432, %v433
      %v435 = vrot.slane %v399, 1
      %v436 = vrot.slane %v400, 1
      %v437 = vsel %vm425, %v435, %v436
      %v438 = vrot.slane %v401, 1
      %v439 = vrot.slane %v402, 1
      %v440 = vsel %vm425, %v438, %v439
      %v441 = vrot.slane %v403, 1
      %v442 = vrot.slane %v404, 1
      %v443 = vsel %vm425, %v441, %v442
      %v444 = vrot.slane %v405, 1
      %v445 = vrot.slane %v406, 1
      %v446 = vsel %vm425, %v444, %v445
      %v447 = vrot.slane %v407, 1
      %v448 = vrot.slane %v408, 1
      %v449 = vsel %vm425, %v447, %v448
      %v458 = vadd.f32 %v364, %v428
      %v459 = vadd.f32 %v365, %v431
      %v460 = vadd.f32 %v366, %v434
      %v461 = vadd.f32 %v367, %v437
      %v462 = vadd.f32 %v368, %v440
      %v463 = vadd.f32 %v369, %v443
      %v464 = vadd.f32 %v370, %v446
      %v465 = vadd.f32 %v371, %v449
      %v466 = vld [vmem:[#allocation2] sm:$0xe]
      %v467 = vld [vmem:[#allocation2 + $0x8] sm:$0xe]
      %v468 = vld [vmem:[#allocation2 + $0x10] sm:$0xe]
      %v469 = vld [vmem:[#allocation2 + $0x18] sm:$0xe]
      %v470 = vld [vmem:[#allocation2 + $0x20] sm:$0xe]
      %v471 = vld [vmem:[#allocation2 + $0x28] sm:$0xe]
      %v472 = vld [vmem:[#allocation2 + $0x30] sm:$0xe]
      %v473 = vld [vmem:[#allocation2 + $0x38] sm:$0xe]
      %v474 = vunpack.c.l.bf16 %v466
      %v475 = vunpack.c.l.bf16 %v467
      %v476 = vunpack.c.l.bf16 %v468
      %v477 = vunpack.c.l.bf16 %v469
      %v478 = vunpack.c.l.bf16 %v470
      %v479 = vunpack.c.l.bf16 %v471
      %v480 = vunpack.c.l.bf16 %v472
      %v481 = vunpack.c.l.bf16 %v473
      %v482 = vld [vmem:[%s1 + $0x2] sm:$0x1]
      %v483 = vlaneseq
      %v484 = vshrl.u32 %v483, 7
      %v485 = vsub.s32 0, %v484
      %v486 = vrot.slane %v482, %v485
      %v487 = vmul.f32 %v474, %v486
      %v488 = vmul.f32 %v380, %v486
      %v489 = vmul.f32 %v475, %v486
      %v490 = vmul.f32 %v381, %v486
      %v491 = vmul.f32 %v476, %v486
      %v492 = vmul.f32 %v382, %v486
      %v493 = vmul.f32 %v477, %v486
      %v494 = vmul.f32 %v383, %v486
      %v495 = vmul.f32 %v478, %v486
      %v496 = vmul.f32 %v384, %v486
      %v497 = vmul.f32 %v479, %v486
      %v498 = vmul.f32 %v385, %v486
      %v499 = vmul.f32 %v480, %v486
      %v500 = vmul.f32 %v386, %v486
      %v501 = vmul.f32 %v481, %v486
      %v502 = vmul.f32 %v387, %v486
      %vm519 = vcmask 1045504
      %v520 = vrot.slane %v487, 2
      %v521 = vrot.slane %v488, 2
      %v522 = vsel %vm519, %v520, %v521
      %v523 = vrot.slane %v489, 2
      %v524 = vrot.slane %v490, 2
      %v525 = vsel %vm519, %v523, %v524
      %v526 = vrot.slane %v491, 2
      %v527 = vrot.slane %v492, 2
      %v528 = vsel %vm519, %v526, %v527
      %v529 = vrot.slane %v493, 2
      %v530 = vrot.slane %v494, 2
      %v531 = vsel %vm519, %v529, %v530
      %v532 = vrot.slane %v495, 2
      %v533 = vrot.slane %v496, 2
      %v534 = vsel %vm519, %v532, %v533
      %v535 = vrot.slane %v497, 2
      %v536 = vrot.slane %v498, 2
      %v537 = vsel %vm519, %v535, %v536
      %v538 = vrot.slane %v499, 2
      %v539 = vrot.slane %v500, 2
      %v540 = vsel %vm519, %v538, %v539
      %v541 = vrot.slane %v501, 2
      %v542 = vrot.slane %v502, 2
      %v543 = vsel %vm519, %v541, %v542
      %v552 = vadd.f32 %v458, %v522
      %v553 = vadd.f32 %v459, %v525
      %v554 = vadd.f32 %v460, %v528
      %v555 = vadd.f32 %v461, %v531
      %v556 = vadd.f32 %v462, %v534
      %v557 = vadd.f32 %v463, %v537
      %v558 = vadd.f32 %v464, %v540
      %v559 = vadd.f32 %v465, %v543
      %v560 = vld [vmem:[%s280] sm:$0xf]
      %v561 = vld [vmem:[%s280 + $0x8] sm:$0xf]
      %v562 = vld [vmem:[%s280 + $0x10] sm:$0xf]
      %v563 = vld [vmem:[%s280 + $0x18] sm:$0xf]
      %v564 = vld [vmem:[%s280 + $0x20] sm:$0xf]
      %v565 = vld [vmem:[%s280 + $0x28] sm:$0xf]
      %v566 = vld [vmem:[%s280 + $0x30] sm:$0xf]
      %v567 = vld [vmem:[%s280 + $0x38] sm:$0xf]
      %v568 = vunpack.c.l.bf16 %v560
      %v569 = vunpack.c.l.bf16 %v561
      %v570 = vunpack.c.l.bf16 %v562
      %v571 = vunpack.c.l.bf16 %v563
      %v572 = vunpack.c.l.bf16 %v564
      %v573 = vunpack.c.l.bf16 %v565
      %v574 = vunpack.c.l.bf16 %v566
      %v575 = vunpack.c.l.bf16 %v567
      %s576 = scalar_lea.vmem %s1, 4
      %v577 = vld [vmem:[%s576] sm:$0x1]
      %v578 = vlaneseq
      %v579 = vshrl.u32 %v578, 7
      %v580 = vsub.s32 0, %v579
      %v581 = vrot.slane %v577, %v580
      %v582 = vmul.f32 %v568, %v581
      %v583 = vmul.f32 %v569, %v581
      %v584 = vmul.f32 %v570, %v581
      %v585 = vmul.f32 %v571, %v581
      %v586 = vmul.f32 %v572, %v581
      %v587 = vmul.f32 %v573, %v581
      %v588 = vmul.f32 %v574, %v581
      %v589 = vmul.f32 %v575, %v581
      %v590 = vadd.f32 %v552, %v582
      %v591 = vadd.f32 %v553, %v583
      %v592 = vadd.f32 %v554, %v584
      %v593 = vadd.f32 %v555, %v585
      %v594 = vadd.f32 %v556, %v586
      %v595 = vadd.f32 %v557, %v587
      %v596 = vadd.f32 %v558, %v588
      %v597 = vadd.f32 %v559, %v589
      %v598 = vld [vmem:[%s280 + $0x4] sm:$0x1]
      %v599 = vld [vmem:[%s280 + $0xc] sm:$0x1]
      %v600 = vld [vmem:[%s280 + $0x14] sm:$0x1]
      %v601 = vld [vmem:[%s280 + $0x1c] sm:$0x1]
      %v602 = vld [vmem:[%s280 + $0x24] sm:$0x1]
      %v603 = vld [vmem:[%s280 + $0x2c] sm:$0x1]
      %v604 = vld [vmem:[%s280 + $0x34] sm:$0x1]
      %v605 = vld [vmem:[%s280 + $0x3c] sm:$0x1]
      %v606 = vunpack.c.l.bf16 %v598
      %v607 = vunpack.c.l.bf16 %v599
      %v608 = vunpack.c.l.bf16 %v600
      %v609 = vunpack.c.l.bf16 %v601
      %v610 = vunpack.c.l.bf16 %v602
      %v611 = vunpack.c.l.bf16 %v603
      %v612 = vunpack.c.l.bf16 %v604
      %v613 = vunpack.c.l.bf16 %v605
      %v614 = vld [vmem:[%s576 + $0x1] sm:$0x1]
      %v615 = vlaneseq
      %v616 = vshrl.u32 %v615, 7
      %v617 = vsub.s32 0, %v616
      %v618 = vrot.slane %v614, %v617
      %v619 = vmul.f32 %v568, %v618
      %v620 = vmul.f32 %v606, %v618
      %v621 = vmul.f32 %v569, %v618
      %v622 = vmul.f32 %v607, %v618
      %v623 = vmul.f32 %v570, %v618
      %v624 = vmul.f32 %v608, %v618
      %v625 = vmul.f32 %v571, %v618
      %v626 = vmul.f32 %v609, %v618
      %v627 = vmul.f32 %v572, %v618
      %v628 = vmul.f32 %v610, %v618
      %v629 = vmul.f32 %v573, %v618
      %v630 = vmul.f32 %v611, %v618
      %v631 = vmul.f32 %v574, %v618
      %v632 = vmul.f32 %v612, %v618
      %v633 = vmul.f32 %v575, %v618
      %v634 = vmul.f32 %v613, %v618
      %v651 = vrot.slane %v619, 1
      %v652 = vrot.slane %v620, 1
      %v653 = vsel %vm425, %v651, %v652
      %v654 = vrot.slane %v621, 1
      %v655 = vrot.slane %v622, 1
      %v656 = vsel %vm425, %v654, %v655
      %v657 = vrot.slane %v623, 1
      %v658 = vrot.slane %v624, 1
      %v659 = vsel %vm425, %v657, %v658
      %v660 = vrot.slane %v625, 1
      %v661 = vrot.slane %v626, 1
      %v662 = vsel %vm425, %v660, %v661
      %v663 = vrot.slane %v627, 1
      %v664 = vrot.slane %v628, 1
      %v665 = vsel %vm425, %v663, %v664
      %v666 = vrot.slane %v629, 1
      %v667 = vrot.slane %v630, 1
      %v668 = vsel %vm425, %v666, %v667
      %v669 = vrot.slane %v631, 1
      %v670 = vrot.slane %v632, 1
      %v671 = vsel %vm425, %v669, %v670
      %v672 = vrot.slane %v633, 1
      %v673 = vrot.slane %v634, 1
      %v674 = vsel %vm425, %v672, %v673
      %v683 = vadd.f32 %v590, %v653
      %v684 = vadd.f32 %v591, %v656
      %v685 = vadd.f32 %v592, %v659
      %v686 = vadd.f32 %v593, %v662
      %v687 = vadd.f32 %v594, %v665
      %v688 = vadd.f32 %v595, %v668
      %v689 = vadd.f32 %v596, %v671
      %v690 = vadd.f32 %v597, %v674
      %v691 = vld [vmem:[%s280] sm:$0xe]
      %v692 = vld [vmem:[%s280 + $0x8] sm:$0xe]
      %v693 = vld [vmem:[%s280 + $0x10] sm:$0xe]
      %v694 = vld [vmem:[%s280 + $0x18] sm:$0xe]
      %v695 = vld [vmem:[%s280 + $0x20] sm:$0xe]
      %v696 = vld [vmem:[%s280 + $0x28] sm:$0xe]
      %v697 = vld [vmem:[%s280 + $0x30] sm:$0xe]
      %v698 = vld [vmem:[%s280 + $0x38] sm:$0xe]
      %v699 = vunpack.c.l.bf16 %v691
      %v700 = vunpack.c.l.bf16 %v692
      %v701 = vunpack.c.l.bf16 %v693
      %v702 = vunpack.c.l.bf16 %v694
      %v703 = vunpack.c.l.bf16 %v695
      %v704 = vunpack.c.l.bf16 %v696
      %v705 = vunpack.c.l.bf16 %v697
      %v706 = vunpack.c.l.bf16 %v698
      %v707 = vld [vmem:[%s576 + $0x2] sm:$0x1]
      %v708 = vlaneseq
      %v709 = vshrl.u32 %v708, 7
      %v710 = vsub.s32 0, %v709
      %v711 = vrot.slane %v707, %v710
      %v712 = vmul.f32 %v699, %v711
      %v713 = vmul.f32 %v606, %v711
      %v714 = vmul.f32 %v700, %v711
      %v715 = vmul.f32 %v607, %v711
      %v716 = vmul.f32 %v701, %v711
      %v717 = vmul.f32 %v608, %v711
      %v718 = vmul.f32 %v702, %v711
      %v719 = vmul.f32 %v609, %v711
      %v720 = vmul.f32 %v703, %v711
      %v721 = vmul.f32 %v610, %v711
      %v722 = vmul.f32 %v704, %v711
      %v723 = vmul.f32 %v611, %v711
      %v724 = vmul.f32 %v705, %v711
      %v725 = vmul.f32 %v612, %v711
      %v726 = vmul.f32 %v706, %v711
      %v727 = vmul.f32 %v613, %v711
      %v744 = vrot.slane %v712, 2
      %v745 = vrot.slane %v713, 2
      %v746 = vsel %vm519, %v744, %v745
      %v747 = vrot.slane %v714, 2
      %v748 = vrot.slane %v715, 2
      %v749 = vsel %vm519, %v747, %v748
      %v750 = vrot.slane %v716, 2
      %v751 = vrot.slane %v717, 2
      %v752 = vsel %vm519, %v750, %v751
      %v753 = vrot.slane %v718, 2
      %v754 = vrot.slane %v719, 2
      %v755 = vsel %vm519, %v753, %v754
      %v756 = vrot.slane %v720, 2
      %v757 = vrot.slane %v721, 2
      %v758 = vsel %vm519, %v756, %v757
      %v759 = vrot.slane %v722, 2
      %v760 = vrot.slane %v723, 2
      %v761 = vsel %vm519, %v759, %v760
      %v762 = vrot.slane %v724, 2
      %v763 = vrot.slane %v725, 2
      %v764 = vsel %vm519, %v762, %v763
      %v765 = vrot.slane %v726, 2
      %v766 = vrot.slane %v727, 2
      %v767 = vsel %vm519, %v765, %v766
      %v776 = vadd.f32 %v683, %v746
      %v777 = vadd.f32 %v684, %v749
      %v778 = vadd.f32 %v685, %v752
      %v779 = vadd.f32 %v686, %v755
      %v780 = vadd.f32 %v687, %v758
      %v781 = vadd.f32 %v688, %v761
      %v782 = vadd.f32 %v689, %v764
      %v783 = vadd.f32 %v690, %v767
      %s784 = scalar_lea.vmem [#allocation2], 16
      %v785 = vld [vmem:[%s784] sm:$0xf]
      %v786 = vld [vmem:[%s784 + $0x8] sm:$0xf]
      %v787 = vld [vmem:[%s784 + $0x10] sm:$0xf]
      %v788 = vld [vmem:[%s784 + $0x18] sm:$0xf]
      %v789 = vld [vmem:[%s784 + $0x20] sm:$0xf]
      %v790 = vld [vmem:[%s784 + $0x28] sm:$0xf]
      %v791 = vld [vmem:[%s784 + $0x30] sm:$0xf]
      %v792 = vld [vmem:[%s784 + $0x38] sm:$0xf]
      %v793 = vunpack.c.l.bf16 %v785
      %v794 = vunpack.c.l.bf16 %v786
      %v795 = vunpack.c.l.bf16 %v787
      %v796 = vunpack.c.l.bf16 %v788
      %v797 = vunpack.c.l.bf16 %v789
      %v798 = vunpack.c.l.bf16 %v790
      %v799 = vunpack.c.l.bf16 %v791
      %v800 = vunpack.c.l.bf16 %v792
      %s801 = scalar_lea.vmem %s1, 8
      %v802 = vld [vmem:[%s801] sm:$0x1]
      %v803 = vlaneseq
      %v804 = vshrl.u32 %v803, 7
      %v805 = vsub.s32 0, %v804
      %v806 = vrot.slane %v802, %v805
      %v807 = vmul.f32 %v793, %v806
      %v808 = vmul.f32 %v794, %v806
      %v809 = vmul.f32 %v795, %v806
      %v810 = vmul.f32 %v796, %v806
      %v811 = vmul.f32 %v797, %v806
      %v812 = vmul.f32 %v798, %v806
      %v813 = vmul.f32 %v799, %v806
      %v814 = vmul.f32 %v800, %v806
      %v815 = vadd.f32 %v776, %v807
      %v816 = vadd.f32 %v777, %v808
      %v817 = vadd.f32 %v778, %v809
      %v818 = vadd.f32 %v779, %v810
      %v819 = vadd.f32 %v780, %v811
      %v820 = vadd.f32 %v781, %v812
      %v821 = vadd.f32 %v782, %v813
      %v822 = vadd.f32 %v783, %v814
      %v823 = vld [vmem:[%s784 + $0x4] sm:$0x1]
      %v824 = vld [vmem:[%s784 + $0xc] sm:$0x1]
      %v825 = vld [vmem:[%s784 + $0x14] sm:$0x1]
      %v826 = vld [vmem:[%s784 + $0x1c] sm:$0x1]
      %v827 = vld [vmem:[%s784 + $0x24] sm:$0x1]
      %v828 = vld [vmem:[%s784 + $0x2c] sm:$0x1]
      %v829 = vld [vmem:[%s784 + $0x34] sm:$0x1]
      %v830 = vld [vmem:[%s784 + $0x3c] sm:$0x1]
      %v831 = vunpack.c.l.bf16 %v823
      %v832 = vunpack.c.l.bf16 %v824
      %v833 = vunpack.c.l.bf16 %v825
      %v834 = vunpack.c.l.bf16 %v826
      %v835 = vunpack.c.l.bf16 %v827
      %v836 = vunpack.c.l.bf16 %v828
      %v837 = vunpack.c.l.bf16 %v829
      %v838 = vunpack.c.l.bf16 %v830
      %v839 = vld [vmem:[%s801 + $0x1] sm:$0x1]
      %v840 = vlaneseq
      %v841 = vshrl.u32 %v840, 7
      %v842 = vsub.s32 0, %v841
      %v843 = vrot.slane %v839, %v842
      %v844 = vmul.f32 %v793, %v843
      %v845 = vmul.f32 %v831, %v843
      %v846 = vmul.f32 %v794, %v843
      %v847 = vmul.f32 %v832, %v843
      %v848 = vmul.f32 %v795, %v843
      %v849 = vmul.f32 %v833, %v843
      %v850 = vmul.f32 %v796, %v843
      %v851 = vmul.f32 %v834, %v843
      %v852 = vmul.f32 %v797, %v843
      %v853 = vmul.f32 %v835, %v843
      %v854 = vmul.f32 %v798, %v843
      %v855 = vmul.f32 %v836, %v843
      %v856 = vmul.f32 %v799, %v843
      %v857 = vmul.f32 %v837, %v843
      %v858 = vmul.f32 %v800, %v843
      %v859 = vmul.f32 %v838, %v843
      %v876 = vrot.slane %v844, 1
      %v877 = vrot.slane %v845, 1
      %v878 = vsel %vm425, %v876, %v877
      %v879 = vrot.slane %v846, 1
      %v880 = vrot.slane %v847, 1
      %v881 = vsel %vm425, %v879, %v880
      %v882 = vrot.slane %v848, 1
      %v883 = vrot.slane %v849, 1
      %v884 = vsel %vm425, %v882, %v883
      %v885 = vrot.slane %v850, 1
      %v886 = vrot.slane %v851, 1
      %v887 = vsel %vm425, %v885, %v886
      %v888 = vrot.slane %v852, 1
      %v889 = vrot.slane %v853, 1
      %v890 = vsel %vm425, %v888, %v889
      %v891 = vrot.slane %v854, 1
      %v892 = vrot.slane %v855, 1
      %v893 = vsel %vm425, %v891, %v892
      %v894 = vrot.slane %v856, 1
      %v895 = vrot.slane %v857, 1
      %v896 = vsel %vm425, %v894, %v895
      %v897 = vrot.slane %v858, 1
      %v898 = vrot.slane %v859, 1
      %v899 = vsel %vm425, %v897, %v898
      %v908 = vadd.f32 %v815, %v878
      %v909 = vadd.f32 %v816, %v881
      %v910 = vadd.f32 %v817, %v884
      %v911 = vadd.f32 %v818, %v887
      %v912 = vadd.f32 %v819, %v890
      %v913 = vadd.f32 %v820, %v893
      %v914 = vadd.f32 %v821, %v896
      %v915 = vadd.f32 %v822, %v899
      %v916 = vld [vmem:[%s784] sm:$0xe]
      %v917 = vld [vmem:[%s784 + $0x8] sm:$0xe]
      %v918 = vld [vmem:[%s784 + $0x10] sm:$0xe]
      %v919 = vld [vmem:[%s784 + $0x18] sm:$0xe]
      %v920 = vld [vmem:[%s784 + $0x20] sm:$0xe]
      %v921 = vld [vmem:[%s784 + $0x28] sm:$0xe]
      %v922 = vld [vmem:[%s784 + $0x30] sm:$0xe]
      %v923 = vld [vmem:[%s784 + $0x38] sm:$0xe]
      %v924 = vunpack.c.l.bf16 %v916
      %v925 = vunpack.c.l.bf16 %v917
      %v926 = vunpack.c.l.bf16 %v918
      %v927 = vunpack.c.l.bf16 %v919
      %v928 = vunpack.c.l.bf16 %v920
      %v929 = vunpack.c.l.bf16 %v921
      %v930 = vunpack.c.l.bf16 %v922
      %v931 = vunpack.c.l.bf16 %v923
      %v932 = vld [vmem:[%s801 + $0x2] sm:$0x1]
      %v933 = vlaneseq
      %v934 = vshrl.u32 %v933, 7
      %v935 = vsub.s32 0, %v934
      %v936 = vrot.slane %v932, %v935
      %v937 = vmul.f32 %v924, %v936
      %v938 = vmul.f32 %v831, %v936
      %v939 = vmul.f32 %v925, %v936
      %v940 = vmul.f32 %v832, %v936
      %v941 = vmul.f32 %v926, %v936
      %v942 = vmul.f32 %v833, %v936
      %v943 = vmul.f32 %v927, %v936
      %v944 = vmul.f32 %v834, %v936
      %v945 = vmul.f32 %v928, %v936
      %v946 = vmul.f32 %v835, %v936
      %v947 = vmul.f32 %v929, %v936
      %v948 = vmul.f32 %v836, %v936
      %v949 = vmul.f32 %v930, %v936
      %v950 = vmul.f32 %v837, %v936
      %v951 = vmul.f32 %v931, %v936
      %v952 = vmul.f32 %v838, %v936
      %v969 = vrot.slane %v937, 2
      %v970 = vrot.slane %v938, 2
      %v971 = vsel %vm519, %v969, %v970
      %v972 = vrot.slane %v939, 2
      %v973 = vrot.slane %v940, 2
      %v974 = vsel %vm519, %v972, %v973
      %v975 = vrot.slane %v941, 2
      %v976 = vrot.slane %v942, 2
      %v977 = vsel %vm519, %v975, %v976
      %v978 = vrot.slane %v943, 2
      %v979 = vrot.slane %v944, 2
      %v980 = vsel %vm519, %v978, %v979
      %v981 = vrot.slane %v945, 2
      %v982 = vrot.slane %v946, 2
      %v983 = vsel %vm519, %v981, %v982
      %v984 = vrot.slane %v947, 2
      %v985 = vrot.slane %v948, 2
      %v986 = vsel %vm519, %v984, %v985
      %v987 = vrot.slane %v949, 2
      %v988 = vrot.slane %v950, 2
      %v989 = vsel %vm519, %v987, %v988
      %v990 = vrot.slane %v951, 2
      %v991 = vrot.slane %v952, 2
      %v992 = vsel %vm519, %v990, %v991
      %v1001 = vadd.f32 %v908, %v971
      %v1002 = vadd.f32 %v909, %v974
      %v1003 = vadd.f32 %v910, %v977
      %v1004 = vadd.f32 %v911, %v980
      %v1005 = vadd.f32 %v912, %v983
      %v1006 = vadd.f32 %v913, %v986
      %v1007 = vadd.f32 %v914, %v989
      %v1008 = vadd.f32 %v915, %v992
      %v1009 = vld [vmem:[%s2] sm:$0x1]
      %v1011 = vlaneseq
      %v1012 = vshrl.u32 %v1011, 7
      %v1013 = vsub.s32 0, %v1012
      %v1014 = vrot.slane %v1009, %v1013
      %v1016 = vadd.f32 %v1001, %v1014
      %v1017 = vadd.f32 %v1002, %v1014
      %v1018 = vadd.f32 %v1003, %v1014
      %v1019 = vadd.f32 %v1004, %v1014
      %v1020 = vadd.f32 %v1005, %v1014
      %v1021 = vadd.f32 %v1006, %v1014
      %v1022 = vadd.f32 %v1007, %v1014
      %v1023 = vadd.f32 %v1008, %v1014
      %v1024 = vmul.f32 %v1016, 0.5
      %v1025 = vmul.f32 %v1017, 0.5
      %v1026 = vmul.f32 %v1018, 0.5
      %v1027 = vmul.f32 %v1019, 0.5
      %v1028 = vmul.f32 %v1020, 0.5
      %v1029 = vmul.f32 %v1021, 0.5
      %v1030 = vmul.f32 %v1022, 0.5
      %v1031 = vmul.f32 %v1023, 0.5
      %v1032 = vmul.f32 %v1016, 0.044715
      %v1033 = vmul.f32 %v1017, 0.044715
      %v1034 = vmul.f32 %v1018, 0.044715
      %v1035 = vmul.f32 %v1019, 0.044715
      %v1036 = vmul.f32 %v1020, 0.044715
      %v1037 = vmul.f32 %v1021, 0.044715
      %v1038 = vmul.f32 %v1022, 0.044715
      %v1039 = vmul.f32 %v1023, 0.044715
      %v1040 = vmul.f32 %v1032, %v1016
      %v1041 = vmul.f32 %v1033, %v1017
      %v1042 = vmul.f32 %v1034, %v1018
      %v1043 = vmul.f32 %v1035, %v1019
      %v1044 = vmul.f32 %v1036, %v1020
      %v1045 = vmul.f32 %v1037, %v1021
      %v1046 = vmul.f32 %v1038, %v1022
      %v1047 = vmul.f32 %v1039, %v1023
      %v1048 = vmul.f32 %v1040, %v1016
      %v1049 = vmul.f32 %v1041, %v1017
      %v1050 = vmul.f32 %v1042, %v1018
      %v1051 = vmul.f32 %v1043, %v1019
      %v1052 = vmul.f32 %v1044, %v1020
      %v1053 = vmul.f32 %v1045, %v1021
      %v1054 = vmul.f32 %v1046, %v1022
      %v1055 = vmul.f32 %v1047, %v1023
      %v1056 = vadd.f32 %v1016, %v1048
      %v1057 = vadd.f32 %v1017, %v1049
      %v1058 = vadd.f32 %v1018, %v1050
      %v1059 = vadd.f32 %v1019, %v1051
      %v1060 = vadd.f32 %v1020, %v1052
      %v1061 = vadd.f32 %v1021, %v1053
      %v1062 = vadd.f32 %v1022, %v1054
      %v1063 = vadd.f32 %v1023, %v1055
      %v1064 = vmul.f32 %v1056, 0.7978846
      %v1065 = vmul.f32 %v1057, 0.7978846
      %v1066 = vmul.f32 %v1058, 0.7978846
      %v1067 = vmul.f32 %v1059, 0.7978846
      %v1068 = vmul.f32 %v1060, 0.7978846
      %v1069 = vmul.f32 %v1061, 0.7978846
      %v1070 = vmul.f32 %v1062, 0.7978846
      %v1071 = vmul.f32 %v1063, 0.7978846
      %v1072 = vtanh.pop %v1064
      %v1073 = vtanh.pop %v1065
      %v1074 = vtanh.pop %v1066
      %v1075 = vtanh.pop %v1067
      %v1076 = vtanh.pop %v1068
      %v1077 = vtanh.pop %v1069
      %v1078 = vtanh.pop %v1070
      %v1079 = vtanh.pop %v1071
      %v1080 = vadd.f32 %v1072, 1.0
      %v1081 = vadd.f32 %v1073, 1.0
      %v1082 = vadd.f32 %v1074, 1.0
      %v1083 = vadd.f32 %v1075, 1.0
      %v1084 = vadd.f32 %v1076, 1.0
      %v1085 = vadd.f32 %v1077, 1.0
      %v1086 = vadd.f32 %v1078, 1.0
      %v1087 = vadd.f32 %v1079, 1.0
      %v1088 = vmul.f32 %v1024, %v1080
      %v1089 = vmul.f32 %v1025, %v1081
      %v1090 = vmul.f32 %v1026, %v1082
      %v1091 = vmul.f32 %v1027, %v1083
      %v1092 = vmul.f32 %v1028, %v1084
      %v1093 = vmul.f32 %v1029, %v1085
      %v1094 = vmul.f32 %v1030, %v1086
      %v1095 = vmul.f32 %v1031, %v1087
      %v1096 = vpack.c.bf16 %v1088, %v1088
      %v1097 = vpack.c.bf16 %v1089, %v1089
      %v1098 = vpack.c.bf16 %v1090, %v1090
      %v1099 = vpack.c.bf16 %v1091, %v1091
      %v1100 = vpack.c.bf16 %v1092, %v1092
      %v1101 = vpack.c.bf16 %v1093, %v1093
      %v1102 = vpack.c.bf16 %v1094, %v1094
      %v1103 = vpack.c.bf16 %v1095, %v1095
      %1104 = vst [vmem:[%s170] sm:$0xf] %v1096
      %1105 = vst [vmem:[%s170 + $0x4] sm:$0xf] %v1097
      %1106 = vst [vmem:[%s170 + $0x8] sm:$0xf] %v1098
      %1107 = vst [vmem:[%s170 + $0xc] sm:$0xf] %v1099
      %1108 = vst [vmem:[%s170 + $0x10] sm:$0xf] %v1100
      %1109 = vst [vmem:[%s170 + $0x14] sm:$0xf] %v1101
      %1110 = vst [vmem:[%s170 + $0x18] sm:$0xf] %v1102
      %1111 = vst [vmem:[%s170 + $0x1c] sm:$0xf] %v1103
      %p1112 = scmp.lt.s32.totalorder %s14, 1
      %s1113 = scalar_select %p1112, %s14, 1
      %s1114 = smul.addr %s1113, 8
      %s1115 = smul.addr %s1114, 4
      %s1116 = scalar_lea.vmem %s3, %s1115
      // Predicated region
      $region33: #{pvt_v2_block.12} parent=31 // pred_check
        %p1117 = pneg %p100
      $region34: #{pvt_v2_block.12} parent=31 // pred_check_branch
        %1119 = sbr.rel (%p1117) target = $region36
      $region35: #{pvt_v2_block.12} parent=31 // pred_region
        _
      $region36: #{pvt_v2_block.12} parent=31 // pred_fallthru
        _
    $region32: #{pvt_v2_block.12} parent=5 // pred_fallthru
      _
    %p1120 = scmp.le.s32.totalorder 2, %s9
    // Predicated region
    $region37: #{pvt_v2_block.12} parent=5 // pred_check
      %p1121 = pneg %p1120
    $region38: #{pvt_v2_block.12} parent=5 // pred_check_branch
      %1123 = sbr.rel (%p1121) target = $region40
    $region39: #{pvt_v2_block.12} parent=5 // pred_region
      %s1124 = ssub.s32 %s9, 2
      // Predicated region
      $region41: #{pvt_v2_block.12} parent=39 // pred_check
        %p1125 = pneg %p106
      $region42: #{pvt_v2_block.12} parent=39 // pred_check_branch
        %1127 = sbr.rel (%p1125) target = $region44
      $region43: #{pvt_v2_block.12} parent=39 // pred_region
        %p1128 = scmp.lt.s32.totalorder %s15, 1
        %s1129 = scalar_select %p1128, %s15, 1
        %s1130 = smul.addr %s1129, 8
        %s1131 = smul.addr %s1130, 4
        %s1132 = scalar_lea.vmem %s3, %s1131
      $region44: #{pvt_v2_block.12} parent=39 // pred_fallthru
        _
    $region40: #{pvt_v2_block.12} parent=5 // pred_fallthru
      _
  $region6: #{pvt_v2_block.12} parent=0 // loop_footer
    %s13 = sadd.s32 1, %s9
  $region7: #{pvt_v2_block.12} parent=0 // loop_footer_branch
    %8 = sbr.rel target = $region3
  $region8: #{pvt_v2_block.12} parent=0 // loop_exit
    _

</llo_original>
